<compile_context>
chip_gen: v7x
topology: tpu7x:2x2x1
jax: 0.10.0
libtpu: 0.0.40
codegen_flags: <defaults>
</compile_context>

<pallas_src>
import functools

import jax
import jax.numpy as jnp
from jax.experimental import pallas as pl
from jax.experimental.pallas import tpu as pltpu


# ----------------------------- helpers ------------------------------------- #

def _round_up(x, m):
    return ((x + m - 1) // m) * m


def _largest_tile(dim, prefs):
    """Largest preferred tile that divides `dim` (dim is a multiple of 128)."""
    for p in prefs:
        if dim % p == 0:
            return p
    return dim


def im2col(x_nhwc, k, stride, pad):
    """Extract conv patches. Returns (M, k*k*Cin) with patch order (kh, kw, cin)."""
    n, h, w, c = x_nhwc.shape
    xp = jnp.pad(x_nhwc, ((0, 0), (pad, pad), (pad, pad), (0, 0)))
    ho = (h + 2 * pad - k) // stride + 1
    wo = (w + 2 * pad - k) // stride + 1
    cols = []
    for dy in range(k):
        for dx in range(k):
            cols.append(xp[:, dy:dy + stride * ho:stride, dx:dx + stride * wo:stride, :])
    p = jnp.stack(cols, axis=3)                      # (N, Ho, Wo, k*k, C)
    return p.reshape(n * ho * wo, k * k * c), (n, ho, wo)


# --------------------------- Pallas kernels --------------------------------- #

def _conv_mm_kernel(a_ref, b_ref, bias_ref, o_ref, stats_ref, acc_ref,
                    *, apply_leaky, slope):
    """Tiled matmul with fused bias (+ optional LeakyReLU) and fused per-channel
    sum / sum-of-squares accumulation for BatchNorm.

    Grid is (j, i, k): j = output-channel tile (outermost, parallel),
    i = row tile, k = reduction tile (innermost)."""
    i = pl.program_id(1)
    k = pl.program_id(2)
    nk = pl.num_programs(2)

    @pl.when(k == 0)
    def _():
        acc_ref[...] = jnp.zeros_like(acc_ref)

    @pl.when((i == 0) & (k == 0))
    def _():
        stats_ref[...] = jnp.zeros_like(stats_ref)

    acc_ref[...] += jnp.dot(a_ref[...], b_ref[...],
                            preferred_element_type=jnp.float32)

    @pl.when(k == nk - 1)
    def _():
        out = acc_ref[...] + bias_ref[...]
        if apply_leaky:
            out = jnp.where(out >= 0, out, slope * out)
        o_ref[...] = out.astype(o_ref.dtype)
        # Fused BN statistics (row 0: sum, row 1: sum of squares) — one combined
        # read-modify-write on the VMEM-resident stats block.
        s1 = jnp.sum(out, axis=0, keepdims=True)
        s2 = jnp.sum(out * out, axis=0, keepdims=True)
        stats_ref[0:2, :] += jnp.concatenate([s1, s2], axis=0)


def conv_matmul(patches, w_pad, bias_pad, *, apply_leaky, slope=0.2):
    """patches(M,K) bf16 @ w_pad(Kpad,Npad) bf16 + bias, fused LeakyReLU optional.

    Returns (y_pad bf16 (Mpad, Npad), stats f32 (8, Npad))."""
    m, k = patches.shape
    kpad, npad = w_pad.shape

    mpad = _round_up(m, 16) if m <= 512 else _round_up(m, 512)
    tm = mpad if mpad <= 512 else 512
    tk = _largest_tile(kpad, (512, 256, 128))
    tn = _largest_tile(npad, (256, 128))

    a = jnp.pad(patches, ((0, mpad - m), (0, kpad - k)))   # bf16, zero pad

    kernel = functools.partial(_conv_mm_kernel, apply_leaky=apply_leaky, slope=slope)
    y_pad, stats = pl.pallas_call(
        kernel,
        out_shape=(
            jax.ShapeDtypeStruct((mpad, npad), jnp.bfloat16),
            jax.ShapeDtypeStruct((8, npad), jnp.float32),
        ),
        grid_spec=pltpu.PrefetchScalarGridSpec(
            num_scalar_prefetch=0,
            grid=(npad // tn, mpad // tm, kpad // tk),          # (j, i, k)
            in_specs=[
                pl.BlockSpec((tm, tk), lambda j, i, kk: (i, kk)),   # A
                pl.BlockSpec((tk, tn), lambda j, i, kk: (kk, j)),   # B
                pl.BlockSpec((1, tn), lambda j, i, kk: (0, j)),     # bias (resident per j)
            ],
            out_specs=[
                pl.BlockSpec((tm, tn), lambda j, i, kk: (i, j)),    # conv output
                pl.BlockSpec((8, tn), lambda j, i, kk: (0, j)),     # BN stats (resident per j)
            ],
            scratch_shapes=[pltpu.VMEM((tm, tn), jnp.float32)],
        ),
        compiler_params=pltpu.CompilerParams(
            dimension_semantics=("parallel", "arbitrary", "arbitrary")),
    )(a, w_pad, bias_pad)
    return y_pad, stats


def _bn_leaky_kernel(y_ref, scale_ref, shift_ref, o_ref, *, slope):
    y = y_ref[...].astype(jnp.float32)
    out = y * scale_ref[...] + shift_ref[...]
    o_ref[...] = jnp.where(out >= 0, out, slope * out).astype(o_ref.dtype)


def bn_leaky(y_pad, scale, shift, slope=0.2):
    """Elementwise y*scale + shift followed by LeakyReLU; bf16 in / bf16 out."""
    mpad, npad = y_pad.shape
    tm = mpad if mpad <= 2048 else _largest_tile(mpad, (2048, 1024, 512))
    kernel = functools.partial(_bn_leaky_kernel, slope=slope)
    return pl.pallas_call(
        kernel,
        out_shape=jax.ShapeDtypeStruct((mpad, npad), jnp.bfloat16),
        grid_spec=pltpu.PrefetchScalarGridSpec(
            num_scalar_prefetch=0,
            grid=(mpad // tm,),
            in_specs=[
                pl.BlockSpec((tm, npad), lambda i: (i, 0)),
                pl.BlockSpec((1, npad), lambda i: (0, 0)),
                pl.BlockSpec((1, npad), lambda i: (0, 0)),
            ],
            out_specs=pl.BlockSpec((tm, npad), lambda i: (i, 0)),
        ),
        compiler_params=pltpu.CompilerParams(dimension_semantics=("parallel",)),
    )(y_pad, scale, shift)


# ------------------------ Discriminator forward ----------------------------- #

def discriminator_forward(x_nchw, params):
    """Exact forward of the PyTorch PatchGAN Discriminator (training-mode BN)."""
    slope = 0.2
    eps = 1e-5
    x = jnp.transpose(x_nchw, (0, 2, 3, 1)).astype(jnp.bfloat16)   # NCHW -> NHWC

    for layer in params["layers"]:
        stride = layer["stride"]
        patches, (n, ho, wo) = im2col(x, 4, stride, 1)
        m = patches.shape[0]
        cout = layer["cout"]
        kind = layer["kind"]

        y_pad, stats = conv_matmul(patches, layer["w"], layer["b"],
                                   apply_leaky=(kind == "conv_leaky"), slope=slope)

        if kind == "conv_bn_leaky":          # conv (no bias) + BatchNorm + LeakyReLU
            mean = stats[0] / m
            var = jnp.maximum(stats[1] / m - mean * mean, 0.0)   # biased var, clamped
            scale = layer["gamma"] * jax.lax.rsqrt(var + eps)
            shift = layer["beta"] - mean * scale
            y_pad = bn_leaky(y_pad, scale.reshape(1, -1), shift.reshape(1, -1), slope)

        x = y_pad[:m, :cout].reshape(n, ho, wo, cout)

    return jnp.transpose(x, (0, 3, 1, 2)).astype(jnp.float32)   # NHWC -> NCHW


# --------------------------- parameter init --------------------------------- #

def _prep_conv(w_4x4, bias, cout):
    """Pad/cast a (4,4,Cin,Cout) weight and (Cout,) bias to TPU-friendly shapes."""
    cin = w_4x4.shape[2]
    kdim = 16 * cin
    kpad = _round_up(kdim, 128)
    npad = _round_up(cout, 128)
    w2 = w_4x4.reshape(kdim, cout)
    w_pad = jnp.pad(w2, ((0, kpad - kdim), (0, npad - cout))).astype(jnp.bfloat16)
    b_pad = jnp.pad(bias, (0, npad - cout)).reshape(1, npad).astype(jnp.float32)
    return w_pad, b_pad, npad


def init_params(key, image_channels=3, num_filters_last=64, n_layers=3):
    layers = []
    keys = jax.random.split(key, 2 * (n_layers + 2))
    ki = 0

    # Conv2d(image_channels, nf, 4, 2, 1) + LeakyReLU(0.2)
    cin, cout = image_channels, num_filters_last
    w = 0.05 * jax.random.normal(keys[ki], (4, 4, cin, cout), jnp.float32); ki += 1
    b = 0.05 * jax.random.normal(keys[ki], (cout,), jnp.float32); ki += 1
    w_pad, b_pad, _ = _prep_conv(w, b, cout)
    layers.append(dict(kind="conv_leaky", stride=2, w=w_pad, b=b_pad, cout=cout))

    mult = 1
    for i in range(1, n_layers + 1):
        mult_last, mult = mult, min(2 ** i, 8)
        cin = num_filters_last * mult_last
        cout = num_filters_last * mult
        stride = 2 if i < n_layers else 1
        w = 0.05 * jax.random.normal(keys[ki], (4, 4, cin, cout), jnp.float32); ki += 1
        gamma = 1.0 + 0.1 * jax.random.normal(keys[ki], (cout,), jnp.float32)
        beta = 0.1 * jax.random.normal(jax.random.fold_in(keys[ki], 1), (cout,),
                                       jnp.float32); ki += 1
        w_pad, zero_b, npad = _prep_conv(w, jnp.zeros((cout,), jnp.float32), cout)
        gamma_pad = jnp.pad(gamma, (0, npad - cout)).astype(jnp.float32)
        beta_pad = jnp.pad(beta, (0, npad - cout)).astype(jnp.float32)
        layers.append(dict(kind="conv_bn_leaky", stride=stride, w=w_pad, b=zero_b,
                           gamma=gamma_pad, beta=beta_pad, cout=cout))

    # Conv2d(nf*mult, 1, 4, 1, 1)
    cin = num_filters_last * mult
    w = 0.05 * jax.random.normal(keys[ki], (4, 4, cin, 1), jnp.float32); ki += 1
    b = 0.05 * jax.random.normal(keys[ki], (1,), jnp.float32); ki += 1
    w_pad, b_pad, _ = _prep_conv(w, b, 1)
    # TODO(synk): final Cout=1 conv still runs through the padded matmul (N 1->128);
    #             a dedicated VPU reduction would avoid the dead MXU lanes.
    layers.append(dict(kind="conv", stride=1, w=w_pad, b=b_pad, cout=1))

    return {"layers": layers}


# --------------------------------- main -------------------------------------- #

if __name__ == "__main__":
    key = jax.random.PRNGKey(0)
    pkey, xkey = jax.random.split(key)

    # Small config: image_channels=3, num_filters_last=8, n_layers=3, input 2x3x32x32.
    params = init_params(pkey, image_channels=3, num_filters_last=8, n_layers=3)
    x = jax.random.normal(xkey, (2, 3, 32, 32), jnp.float32)

    fwd = jax.jit(lambda inp: discriminator_forward(inp, params))
    out = jax.block_until_ready(fwd(x))

    # 32 -> 16 -> 8 -> 4 -> 3 -> 2  : PatchGAN logits map, 1 channel.
    assert out.shape == (2, 1, 2, 2), out.shape
    assert bool(jnp.all(jnp.isfinite(out)))
    print("KERNEL_OK")
</pallas_src>

<mosaic_0001>
module attributes {stable_mosaic.version = 11 : i64} {
  func.func @_conv_mm_kernel(%arg0: i32, %arg1: i32, %arg2: i32, %arg3: memref<512x128xbf16, #tpu.memory_space<vmem>>, %arg4: memref<128x128xbf16, #tpu.memory_space<vmem>>, %arg5: memref<1x128xf32, #tpu.memory_space<vmem>>, %arg6: memref<512x128xbf16, #tpu.memory_space<vmem>>, %arg7: memref<8x128xf32, #tpu.memory_space<vmem>>, %arg8: memref<512x128xf32, #tpu.memory_space<vmem>>) attributes {dimension_semantics = [#tpu.dimension_semantics<parallel>, #tpu.dimension_semantics<arbitrary>, #tpu.dimension_semantics<arbitrary>], iteration_bounds = array<i64: 1, 1, 1>, scalar_prefetch = 0 : i64, scratch_operands = 1 : i64, tpu.core_type = #tpu.core_type<tc>, window_params = [{transform_indices = @transform_0, window_bounds = array<i64: 512, 128>}, {transform_indices = @transform_1, window_bounds = array<i64: 128, 128>}, {transform_indices = @transform_2, window_bounds = array<i64: 1, 128>}, {transform_indices = @transform_3, window_bounds = array<i64: 512, 128>}, {transform_indices = @transform_4, window_bounds = array<i64: 8, 128>}]} {
    %c0_i32 = arith.constant 0 : i32
    %0 = arith.cmpi eq, %arg2, %c0_i32 : i32
    %1 = arith.extui %0 : i1 to i32
    %c0_i32_0 = arith.constant 0 : i32
    %2 = arith.cmpi ne, %1, %c0_i32_0 : i32
    scf.if %2 {
      %cst_13 = arith.constant 0.000000e+00 : f32
      %17 = vector.broadcast %cst_13 : f32 to vector<512x128xf32>
      %c0_14 = arith.constant 0 : index
      %c0_15 = arith.constant 0 : index
      %18 = vector.load %arg8[%c0_14, %c0_15] : memref<512x128xf32, #tpu.memory_space<vmem>>, vector<512x128xf32>
      tpu.vector_store %arg8[%c0_14, %c0_15], %17 {strides = array<i32>} : memref<512x128xf32, #tpu.memory_space<vmem>>, vector<512x128xf32>,
    } else {
    }
    %c0_i32_1 = arith.constant 0 : i32
    %3 = arith.cmpi eq, %arg1, %c0_i32_1 : i32
    %c0_i32_2 = arith.constant 0 : i32
    %4 = arith.cmpi eq, %arg2, %c0_i32_2 : i32
    %5 = arith.andi %3, %4 : i1
    %6 = arith.extui %5 : i1 to i32
    %c0_i32_3 = arith.constant 0 : i32
    %7 = arith.cmpi ne, %6, %c0_i32_3 : i32
    scf.if %7 {
      %cst_13 = arith.constant 0.000000e+00 : f32
      %17 = vector.broadcast %cst_13 : f32 to vector<8x128xf32>
      %c0_14 = arith.constant 0 : index
      %c0_15 = arith.constant 0 : index
      %18 = vector.load %arg7[%c0_14, %c0_15] : memref<8x128xf32, #tpu.memory_space<vmem>>, vector<8x128xf32>
      tpu.vector_store %arg7[%c0_14, %c0_15], %17 {strides = array<i32>} : memref<8x128xf32, #tpu.memory_space<vmem>>, vector<8x128xf32>,
    } else {
    }
    %c0 = arith.constant 0 : index
    %c0_4 = arith.constant 0 : index
    %8 = vector.load %arg8[%c0, %c0_4] : memref<512x128xf32, #tpu.memory_space<vmem>>, vector<512x128xf32>
    %c0_5 = arith.constant 0 : index
    %c0_6 = arith.constant 0 : index
    %9 = vector.load %arg3[%c0_5, %c0_6] : memref<512x128xbf16, #tpu.memory_space<vmem>>, vector<512x128xbf16>
    %c0_7 = arith.constant 0 : index
    %c0_8 = arith.constant 0 : index
    %10 = vector.load %arg4[%c0_7, %c0_8] : memref<128x128xbf16, #tpu.memory_space<vmem>>, vector<128x128xbf16>
    %cst = arith.constant dense<0.000000e+00> : vector<512x128xf32>
    %11 = tpu.matmul %9, %10, %cst {dimension_numbers = #tpu.dot_dimension_numbers<[1], [0], [0], [1], [0, 0, 1, 1], [], []>} : vector<512x128xbf16>, vector<128x128xbf16>, vector<512x128xf32> -> vector<512x128xf32>
    %12 = arith.addf %8, %11 : vector<512x128xf32>
    %c0_9 = arith.constant 0 : index
    %c0_10 = arith.constant 0 : index
    %13 = vector.load %arg8[%c0_9, %c0_10] : memref<512x128xf32, #tpu.memory_space<vmem>>, vector<512x128xf32>
    tpu.vector_store %arg8[%c0_9, %c0_10], %12 {strides = array<i32>} : memref<512x128xf32, #tpu.memory_space<vmem>>, vector<512x128xf32>,
    %c0_i32_11 = arith.constant 0 : i32
    %14 = arith.cmpi eq, %arg2, %c0_i32_11 : i32
    %15 = arith.extui %14 : i1 to i32
    %c0_i32_12 = arith.constant 0 : i32
    %16 = arith.cmpi ne, %15, %c0_i32_12 : i32
    scf.if %16 {
      %c0_13 = arith.constant 0 : index
      %c0_14 = arith.constant 0 : index
      %17 = vector.load %arg8[%c0_13, %c0_14] : memref<512x128xf32, #tpu.memory_space<vmem>>, vector<512x128xf32>
      %c0_15 = arith.constant 0 : index
      %c0_16 = arith.constant 0 : index
      %18 = vector.load %arg5[%c0_15, %c0_16] : memref<1x128xf32, #tpu.memory_space<vmem>>, vector<1x128xf32>
      %19 = vector.broadcast %18 : vector<1x128xf32> to vector<512x128xf32>
      %20 = arith.addf %17, %19 : vector<512x128xf32>
      %cst_17 = arith.constant 0.000000e+00 : f32
      %21 = vector.broadcast %cst_17 : f32 to vector<512x128xf32>
      %22 = arith.cmpf oge, %20, %21 : vector<512x128xf32>
      %cst_18 = arith.constant 2.000000e-01 : f32
      %23 = vector.broadcast %cst_18 : f32 to vector<512x128xf32>
      %24 = arith.mulf %23, %20 : vector<512x128xf32>
      %25 = arith.select %22, %20, %24 : vector<512x128xi1>, vector<512x128xf32>
      %26 = arith.truncf %25 : vector<512x128xf32> to vector<512x128xbf16>
      %c0_19 = arith.constant 0 : index
      %c0_20 = arith.constant 0 : index
      %27 = vector.load %arg6[%c0_19, %c0_20] : memref<512x128xbf16, #tpu.memory_space<vmem>>, vector<512x128xbf16>
      tpu.vector_store %arg6[%c0_19, %c0_20], %26 {strides = array<i32>} : memref<512x128xbf16, #tpu.memory_space<vmem>>, vector<512x128xbf16>,
      %cst_21 = arith.constant dense<0.000000e+00> : vector<128xf32>
      %28 = vector.multi_reduction <add>, %25, %cst_21 [0] : vector<512x128xf32> to vector<128xf32>
      %29 = vector.shape_cast %28 : vector<128xf32> to vector<1x128xf32>
      %30 = arith.mulf %25, %25 : vector<512x128xf32>
      %cst_22 = arith.constant dense<0.000000e+00> : vector<128xf32>
      %31 = vector.multi_reduction <add>, %30, %cst_22 [0] : vector<512x128xf32> to vector<128xf32>
      %32 = vector.shape_cast %31 : vector<128xf32> to vector<1x128xf32>
      %c0_23 = arith.constant 0 : index
      %c0_24 = arith.constant 0 : index
      %33 = vector.load %arg7[%c0_23, %c0_24] : memref<8x128xf32, #tpu.memory_space<vmem>>, vector<2x128xf32>
      %34 = tpu.concatenate %29, %32 in 0 : vector<1x128xf32>, vector<1x128xf32> -> vector<2x128xf32>
      %35 = arith.addf %33, %34 : vector<2x128xf32>
      %c0_25 = arith.constant 0 : index
      %c0_26 = arith.constant 0 : index
      %36 = vector.load %arg7[%c0_25, %c0_26] : memref<8x128xf32, #tpu.memory_space<vmem>>, vector<2x128xf32>
      tpu.vector_store %arg7[%c0_25, %c0_26], %35 {strides = array<i32>} : memref<8x128xf32, #tpu.memory_space<vmem>>, vector<2x128xf32>,
    } else {
    }
    return
  }
  func.func @transform_0(%arg0: i32, %arg1: i32, %arg2: i32) -> (i32, i32) {
    %c0_i32 = arith.constant 0 : i32
    return %arg1, %arg2 : i32, i32
  }
  func.func @transform_1(%arg0: i32, %arg1: i32, %arg2: i32) -> (i32, i32) {
    %c0_i32 = arith.constant 0 : i32
    return %arg2, %arg0 : i32, i32
  }
  func.func @transform_2(%arg0: i32, %arg1: i32, %arg2: i32) -> (i32, i32) {
    %c0_i32 = arith.constant 0 : i32
    %c0_i32_0 = arith.constant 0 : i32
    return %c0_i32, %arg0 : i32, i32
  }
  func.func @transform_3(%arg0: i32, %arg1: i32, %arg2: i32) -> (i32, i32) {
    %c0_i32 = arith.constant 0 : i32
    return %arg1, %arg0 : i32, i32
  }
  func.func @transform_4(%arg0: i32, %arg1: i32, %arg2: i32) -> (i32, i32) {
    %c0_i32 = arith.constant 0 : i32
    %c0_i32_0 = arith.constant 0 : i32
    return %c0_i32, %arg0 : i32, i32
  }
}

module attributes {stable_mosaic.version = 11 : i64} {
  func.func @_conv_mm_kernel(%arg0: i32, %arg1: i32, %arg2: i32, %arg3: memref<128x128xbf16, #tpu.memory_space<vmem>>, %arg4: memref<128x128xbf16, #tpu.memory_space<vmem>>, %arg5: memref<1x128xf32, #tpu.memory_space<vmem>>, %arg6: memref<128x128xbf16, #tpu.memory_space<vmem>>, %arg7: memref<8x128xf32, #tpu.memory_space<vmem>>, %arg8: memref<128x128xf32, #tpu.memory_space<vmem>>) attributes {dimension_semantics = [#tpu.dimension_semantics<parallel>, #tpu.dimension_semantics<arbitrary>, #tpu.dimension_semantics<arbitrary>], iteration_bounds = array<i64: 1, 1, 1>, scalar_prefetch = 0 : i64, scratch_operands = 1 : i64, tpu.core_type = #tpu.core_type<tc>, window_params = [{transform_indices = @transform_0, window_bounds = array<i64: 128, 128>}, {transform_indices = @transform_1, window_bounds = array<i64: 128, 128>}, {transform_indices = @transform_2, window_bounds = array<i64: 1, 128>}, {transform_indices = @transform_3, window_bounds = array<i64: 128, 128>}, {transform_indices = @transform_4, window_bounds = array<i64: 8, 128>}]} {
    %c0_i32 = arith.constant 0 : i32
    %0 = arith.cmpi eq, %arg2, %c0_i32 : i32
    %1 = arith.extui %0 : i1 to i32
    %c0_i32_0 = arith.constant 0 : i32
    %2 = arith.cmpi ne, %1, %c0_i32_0 : i32
    scf.if %2 {
      %cst_13 = arith.constant 0.000000e+00 : f32
      %17 = vector.broadcast %cst_13 : f32 to vector<128x128xf32>
      %c0_14 = arith.constant 0 : index
      %c0_15 = arith.constant 0 : index
      %18 = vector.load %arg8[%c0_14, %c0_15] : memref<128x128xf32, #tpu.memory_space<vmem>>, vector<128x128xf32>
      tpu.vector_store %arg8[%c0_14, %c0_15], %17 {strides = array<i32>} : memref<128x128xf32, #tpu.memory_space<vmem>>, vector<128x128xf32>,
    } else {
    }
    %c0_i32_1 = arith.constant 0 : i32
    %3 = arith.cmpi eq, %arg1, %c0_i32_1 : i32
    %c0_i32_2 = arith.constant 0 : i32
    %4 = arith.cmpi eq, %arg2, %c0_i32_2 : i32
    %5 = arith.andi %3, %4 : i1
    %6 = arith.extui %5 : i1 to i32
    %c0_i32_3 = arith.constant 0 : i32
    %7 = arith.cmpi ne, %6, %c0_i32_3 : i32
    scf.if %7 {
      %cst_13 = arith.constant 0.000000e+00 : f32
      %17 = vector.broadcast %cst_13 : f32 to vector<8x128xf32>
      %c0_14 = arith.constant 0 : index
      %c0_15 = arith.constant 0 : index
      %18 = vector.load %arg7[%c0_14, %c0_15] : memref<8x128xf32, #tpu.memory_space<vmem>>, vector<8x128xf32>
      tpu.vector_store %arg7[%c0_14, %c0_15], %17 {strides = array<i32>} : memref<8x128xf32, #tpu.memory_space<vmem>>, vector<8x128xf32>,
    } else {
    }
    %c0 = arith.constant 0 : index
    %c0_4 = arith.constant 0 : index
    %8 = vector.load %arg8[%c0, %c0_4] : memref<128x128xf32, #tpu.memory_space<vmem>>, vector<128x128xf32>
    %c0_5 = arith.constant 0 : index
    %c0_6 = arith.constant 0 : index
    %9 = vector.load %arg3[%c0_5, %c0_6] : memref<128x128xbf16, #tpu.memory_space<vmem>>, vector<128x128xbf16>
    %c0_7 = arith.constant 0 : index
    %c0_8 = arith.constant 0 : index
    %10 = vector.load %arg4[%c0_7, %c0_8] : memref<128x128xbf16, #tpu.memory_space<vmem>>, vector<128x128xbf16>
    %cst = arith.constant dense<0.000000e+00> : vector<128x128xf32>
    %11 = tpu.matmul %9, %10, %cst {dimension_numbers = #tpu.dot_dimension_numbers<[1], [0], [0], [1], [0, 0, 1, 1], [], []>} : vector<128x128xbf16>, vector<128x128xbf16>, vector<128x128xf32> -> vector<128x128xf32>
    %12 = arith.addf %8, %11 : vector<128x128xf32>
    %c0_9 = arith.constant 0 : index
    %c0_10 = arith.constant 0 : index
    %13 = vector.load %arg8[%c0_9, %c0_10] : memref<128x128xf32, #tpu.memory_space<vmem>>, vector<128x128xf32>
    tpu.vector_store %arg8[%c0_9, %c0_10], %12 {strides = array<i32>} : memref<128x128xf32, #tpu.memory_space<vmem>>, vector<128x128xf32>,
    %c0_i32_11 = arith.constant 0 : i32
    %14 = arith.cmpi eq, %arg2, %c0_i32_11 : i32
    %15 = arith.extui %14 : i1 to i32
    %c0_i32_12 = arith.constant 0 : i32
    %16 = arith.cmpi ne, %15, %c0_i32_12 : i32
    scf.if %16 {
      %c0_13 = arith.constant 0 : index
      %c0_14 = arith.constant 0 : index
      %17 = vector.load %arg8[%c0_13, %c0_14] : memref<128x128xf32, #tpu.memory_space<vmem>>, vector<128x128xf32>
      %c0_15 = arith.constant 0 : index
      %c0_16 = arith.constant 0 : index
      %18 = vector.load %arg5[%c0_15, %c0_16] : memref<1x128xf32, #tpu.memory_space<vmem>>, vector<1x128xf32>
      %19 = vector.broadcast %18 : vector<1x128xf32> to vector<128x128xf32>
      %20 = arith.addf %17, %19 : vector<128x128xf32>
      %21 = arith.truncf %20 : vector<128x128xf32> to vector<128x128xbf16>
      %c0_17 = arith.constant 0 : index
      %c0_18 = arith.constant 0 : index
      %22 = vector.load %arg6[%c0_17, %c0_18] : memref<128x128xbf16, #tpu.memory_space<vmem>>, vector<128x128xbf16>
      tpu.vector_store %arg6[%c0_17, %c0_18], %21 {strides = array<i32>} : memref<128x128xbf16, #tpu.memory_space<vmem>>, vector<128x128xbf16>,
      %cst_19 = arith.constant dense<0.000000e+00> : vector<128xf32>
      %23 = vector.multi_reduction <add>, %20, %cst_19 [0] : vector<128x128xf32> to vector<128xf32>
      %24 = vector.shape_cast %23 : vector<128xf32> to vector<1x128xf32>
      %25 = arith.mulf %20, %20 : vector<128x128xf32>
      %cst_20 = arith.constant dense<0.000000e+00> : vector<128xf32>
      %26 = vector.multi_reduction <add>, %25, %cst_20 [0] : vector<128x128xf32> to vector<128xf32>
      %27 = vector.shape_cast %26 : vector<128xf32> to vector<1x128xf32>
      %c0_21 = arith.constant 0 : index
      %c0_22 = arith.constant 0 : index
      %28 = vector.load %arg7[%c0_21, %c0_22] : memref<8x128xf32, #tpu.memory_space<vmem>>, vector<2x128xf32>
      %29 = tpu.concatenate %24, %27 in 0 : vector<1x128xf32>, vector<1x128xf32> -> vector<2x128xf32>
      %30 = arith.addf %28, %29 : vector<2x128xf32>
      %c0_23 = arith.constant 0 : index
      %c0_24 = arith.constant 0 : index
      %31 = vector.load %arg7[%c0_23, %c0_24] : memref<8x128xf32, #tpu.memory_space<vmem>>, vector<2x128xf32>
      tpu.vector_store %arg7[%c0_23, %c0_24], %30 {strides = array<i32>} : memref<8x128xf32, #tpu.memory_space<vmem>>, vector<2x128xf32>,
    } else {
    }
    return
  }
  func.func @transform_0(%arg0: i32, %arg1: i32, %arg2: i32) -> (i32, i32) {
    %c0_i32 = arith.constant 0 : i32
    return %arg1, %arg2 : i32, i32
  }
  func.func @transform_1(%arg0: i32, %arg1: i32, %arg2: i32) -> (i32, i32) {
    %c0_i32 = arith.constant 0 : i32
    return %arg2, %arg0 : i32, i32
  }
  func.func @transform_2(%arg0: i32, %arg1: i32, %arg2: i32) -> (i32, i32) {
    %c0_i32 = arith.constant 0 : i32
    %c0_i32_0 = arith.constant 0 : i32
    return %c0_i32, %arg0 : i32, i32
  }
  func.func @transform_3(%arg0: i32, %arg1: i32, %arg2: i32) -> (i32, i32) {
    %c0_i32 = arith.constant 0 : i32
    return %arg1, %arg0 : i32, i32
  }
  func.func @transform_4(%arg0: i32, %arg1: i32, %arg2: i32) -> (i32, i32) {
    %c0_i32 = arith.constant 0 : i32
    %c0_i32_0 = arith.constant 0 : i32
    return %c0_i32, %arg0 : i32, i32
  }
}

module attributes {stable_mosaic.version = 11 : i64} {
  func.func @_bn_leaky_kernel(%arg0: i32, %arg1: memref<128x128xbf16, #tpu.memory_space<vmem>>, %arg2: memref<1x128xf32, #tpu.memory_space<vmem>>, %arg3: memref<1x128xf32, #tpu.memory_space<vmem>>, %arg4: memref<128x128xbf16, #tpu.memory_space<vmem>>) attributes {dimension_semantics = [#tpu.dimension_semantics<parallel>], iteration_bounds = array<i64: 1>, scalar_prefetch = 0 : i64, scratch_operands = 0 : i64, tpu.core_type = #tpu.core_type<tc>, window_params = [{transform_indices = @transform_0, window_bounds = array<i64: 128, 128>}, {pipeline_mode = #tpu.pipeline_mode<synchronous>, transform_indices = @transform_1, window_bounds = array<i64: 1, 128>}, {pipeline_mode = #tpu.pipeline_mode<synchronous>, transform_indices = @transform_2, window_bounds = array<i64: 1, 128>}, {transform_indices = @transform_3, window_bounds = array<i64: 128, 128>}]} {
    %c0 = arith.constant 0 : index
    %c0_0 = arith.constant 0 : index
    %0 = vector.load %arg1[%c0, %c0_0] : memref<128x128xbf16, #tpu.memory_space<vmem>>, vector<128x128xbf16>
    %1 = arith.extf %0 : vector<128x128xbf16> to vector<128x128xf32>
    %c0_1 = arith.constant 0 : index
    %c0_2 = arith.constant 0 : index
    %2 = vector.load %arg2[%c0_1, %c0_2] : memref<1x128xf32, #tpu.memory_space<vmem>>, vector<1x128xf32>
    %3 = vector.broadcast %2 : vector<1x128xf32> to vector<128x128xf32>
    %4 = arith.mulf %1, %3 : vector<128x128xf32>
    %c0_3 = arith.constant 0 : index
    %c0_4 = arith.constant 0 : index
    %5 = vector.load %arg3[%c0_3, %c0_4] : memref<1x128xf32, #tpu.memory_space<vmem>>, vector<1x128xf32>
    %6 = vector.broadcast %5 : vector<1x128xf32> to vector<128x128xf32>
    %7 = arith.addf %4, %6 : vector<128x128xf32>
    %cst = arith.constant 0.000000e+00 : f32
    %8 = vector.broadcast %cst : f32 to vector<128x128xf32>
    %9 = arith.cmpf oge, %7, %8 : vector<128x128xf32>
    %cst_5 = arith.constant 2.000000e-01 : f32
    %10 = vector.broadcast %cst_5 : f32 to vector<128x128xf32>
    %11 = arith.mulf %10, %7 : vector<128x128xf32>
    %12 = arith.select %9, %7, %11 : vector<128x128xi1>, vector<128x128xf32>
    %13 = arith.truncf %12 : vector<128x128xf32> to vector<128x128xbf16>
    %c0_6 = arith.constant 0 : index
    %c0_7 = arith.constant 0 : index
    %14 = vector.load %arg4[%c0_6, %c0_7] : memref<128x128xbf16, #tpu.memory_space<vmem>>, vector<128x128xbf16>
    tpu.vector_store %arg4[%c0_6, %c0_7], %13 {strides = array<i32>} : memref<128x128xbf16, #tpu.memory_space<vmem>>, vector<128x128xbf16>,
    return
  }
  func.func @transform_0(%arg0: i32) -> (i32, i32) {
    %c0_i32 = arith.constant 0 : i32
    %c0_i32_0 = arith.constant 0 : i32
    return %arg0, %c0_i32 : i32, i32
  }
  func.func @transform_1(%arg0: i32) -> (i32, i32) {
    %c0_i32 = arith.constant 0 : i32
    %c0_i32_0 = arith.constant 0 : i32
    %c0_i32_1 = arith.constant 0 : i32
    return %c0_i32, %c0_i32_0 : i32, i32
  }
  func.func @transform_2(%arg0: i32) -> (i32, i32) {
    %c0_i32 = arith.constant 0 : i32
    %c0_i32_0 = arith.constant 0 : i32
    %c0_i32_1 = arith.constant 0 : i32
    return %c0_i32, %c0_i32_0 : i32, i32
  }
  func.func @transform_3(%arg0: i32) -> (i32, i32) {
    %c0_i32 = arith.constant 0 : i32
    %c0_i32_0 = arith.constant 0 : i32
    return %arg0, %c0_i32 : i32, i32
  }
}

module attributes {stable_mosaic.version = 11 : i64} {
  func.func @_conv_mm_kernel(%arg0: i32, %arg1: i32, %arg2: i32, %arg3: memref<32x256xbf16, #tpu.memory_space<vmem>>, %arg4: memref<256x128xbf16, #tpu.memory_space<vmem>>, %arg5: memref<1x128xf32, #tpu.memory_space<vmem>>, %arg6: memref<32x128xbf16, #tpu.memory_space<vmem>>, %arg7: memref<8x128xf32, #tpu.memory_space<vmem>>, %arg8: memref<32x128xf32, #tpu.memory_space<vmem>>) attributes {dimension_semantics = [#tpu.dimension_semantics<parallel>, #tpu.dimension_semantics<arbitrary>, #tpu.dimension_semantics<arbitrary>], iteration_bounds = array<i64: 1, 1, 1>, scalar_prefetch = 0 : i64, scratch_operands = 1 : i64, tpu.core_type = #tpu.core_type<tc>, window_params = [{transform_indices = @transform_0, window_bounds = array<i64: 32, 256>}, {transform_indices = @transform_1, window_bounds = array<i64: 256, 128>}, {transform_indices = @transform_2, window_bounds = array<i64: 1, 128>}, {transform_indices = @transform_3, window_bounds = array<i64: 32, 128>}, {transform_indices = @transform_4, window_bounds = array<i64: 8, 128>}]} {
    %c0_i32 = arith.constant 0 : i32
    %0 = arith.cmpi eq, %arg2, %c0_i32 : i32
    %1 = arith.extui %0 : i1 to i32
    %c0_i32_0 = arith.constant 0 : i32
    %2 = arith.cmpi ne, %1, %c0_i32_0 : i32
    scf.if %2 {
      %cst_13 = arith.constant 0.000000e+00 : f32
      %17 = vector.broadcast %cst_13 : f32 to vector<32x128xf32>
      %c0_14 = arith.constant 0 : index
      %c0_15 = arith.constant 0 : index
      %18 = vector.load %arg8[%c0_14, %c0_15] : memref<32x128xf32, #tpu.memory_space<vmem>>, vector<32x128xf32>
      tpu.vector_store %arg8[%c0_14, %c0_15], %17 {strides = array<i32>} : memref<32x128xf32, #tpu.memory_space<vmem>>, vector<32x128xf32>,
    } else {
    }
    %c0_i32_1 = arith.constant 0 : i32
    %3 = arith.cmpi eq, %arg1, %c0_i32_1 : i32
    %c0_i32_2 = arith.constant 0 : i32
    %4 = arith.cmpi eq, %arg2, %c0_i32_2 : i32
    %5 = arith.andi %3, %4 : i1
    %6 = arith.extui %5 : i1 to i32
    %c0_i32_3 = arith.constant 0 : i32
    %7 = arith.cmpi ne, %6, %c0_i32_3 : i32
    scf.if %7 {
      %cst_13 = arith.constant 0.000000e+00 : f32
      %17 = vector.broadcast %cst_13 : f32 to vector<8x128xf32>
      %c0_14 = arith.constant 0 : index
      %c0_15 = arith.constant 0 : index
      %18 = vector.load %arg7[%c0_14, %c0_15] : memref<8x128xf32, #tpu.memory_space<vmem>>, vector<8x128xf32>
      tpu.vector_store %arg7[%c0_14, %c0_15], %17 {strides = array<i32>} : memref<8x128xf32, #tpu.memory_space<vmem>>, vector<8x128xf32>,
    } else {
    }
    %c0 = arith.constant 0 : index
    %c0_4 = arith.constant 0 : index
    %8 = vector.load %arg8[%c0, %c0_4] : memref<32x128xf32, #tpu.memory_space<vmem>>, vector<32x128xf32>
    %c0_5 = arith.constant 0 : index
    %c0_6 = arith.constant 0 : index
    %9 = vector.load %arg3[%c0_5, %c0_6] : memref<32x256xbf16, #tpu.memory_space<vmem>>, vector<32x256xbf16>
    %c0_7 = arith.constant 0 : index
    %c0_8 = arith.constant 0 : index
    %10 = vector.load %arg4[%c0_7, %c0_8] : memref<256x128xbf16, #tpu.memory_space<vmem>>, vector<256x128xbf16>
    %cst = arith.constant dense<0.000000e+00> : vector<32x128xf32>
    %11 = tpu.matmul %9, %10, %cst {dimension_numbers = #tpu.dot_dimension_numbers<[1], [0], [0], [1], [0, 0, 1, 1], [], []>} : vector<32x256xbf16>, vector<256x128xbf16>, vector<32x128xf32> -> vector<32x128xf32>
    %12 = arith.addf %8, %11 : vector<32x128xf32>
    %c0_9 = arith.constant 0 : index
    %c0_10 = arith.constant 0 : index
    %13 = vector.load %arg8[%c0_9, %c0_10] : memref<32x128xf32, #tpu.memory_space<vmem>>, vector<32x128xf32>
    tpu.vector_store %arg8[%c0_9, %c0_10], %12 {strides = array<i32>} : memref<32x128xf32, #tpu.memory_space<vmem>>, vector<32x128xf32>,
    %c0_i32_11 = arith.constant 0 : i32
    %14 = arith.cmpi eq, %arg2, %c0_i32_11 : i32
    %15 = arith.extui %14 : i1 to i32
    %c0_i32_12 = arith.constant 0 : i32
    %16 = arith.cmpi ne, %15, %c0_i32_12 : i32
    scf.if %16 {
      %c0_13 = arith.constant 0 : index
      %c0_14 = arith.constant 0 : index
      %17 = vector.load %arg8[%c0_13, %c0_14] : memref<32x128xf32, #tpu.memory_space<vmem>>, vector<32x128xf32>
      %c0_15 = arith.constant 0 : index
      %c0_16 = arith.constant 0 : index
      %18 = vector.load %arg5[%c0_15, %c0_16] : memref<1x128xf32, #tpu.memory_space<vmem>>, vector<1x128xf32>
      %19 = vector.broadcast %18 : vector<1x128xf32> to vector<32x128xf32>
      %20 = arith.addf %17, %19 : vector<32x128xf32>
      %21 = arith.truncf %20 : vector<32x128xf32> to vector<32x128xbf16>
      %c0_17 = arith.constant 0 : index
      %c0_18 = arith.constant 0 : index
      %22 = vector.load %arg6[%c0_17, %c0_18] : memref<32x128xbf16, #tpu.memory_space<vmem>>, vector<32x128xbf16>
      tpu.vector_store %arg6[%c0_17, %c0_18], %21 {strides = array<i32>} : memref<32x128xbf16, #tpu.memory_space<vmem>>, vector<32x128xbf16>,
      %cst_19 = arith.constant dense<0.000000e+00> : vector<128xf32>
      %23 = vector.multi_reduction <add>, %20, %cst_19 [0] : vector<32x128xf32> to vector<128xf32>
      %24 = vector.shape_cast %23 : vector<128xf32> to vector<1x128xf32>
      %25 = arith.mulf %20, %20 : vector<32x128xf32>
      %cst_20 = arith.constant dense<0.000000e+00> : vector<128xf32>
      %26 = vector.multi_reduction <add>, %25, %cst_20 [0] : vector<32x128xf32> to vector<128xf32>
      %27 = vector.shape_cast %26 : vector<128xf32> to vector<1x128xf32>
      %c0_21 = arith.constant 0 : index
      %c0_22 = arith.constant 0 : index
      %28 = vector.load %arg7[%c0_21, %c0_22] : memref<8x128xf32, #tpu.memory_space<vmem>>, vector<2x128xf32>
      %29 = tpu.concatenate %24, %27 in 0 : vector<1x128xf32>, vector<1x128xf32> -> vector<2x128xf32>
      %30 = arith.addf %28, %29 : vector<2x128xf32>
      %c0_23 = arith.constant 0 : index
      %c0_24 = arith.constant 0 : index
      %31 = vector.load %arg7[%c0_23, %c0_24] : memref<8x128xf32, #tpu.memory_space<vmem>>, vector<2x128xf32>
      tpu.vector_store %arg7[%c0_23, %c0_24], %30 {strides = array<i32>} : memref<8x128xf32, #tpu.memory_space<vmem>>, vector<2x128xf32>,
    } else {
    }
    return
  }
  func.func @transform_0(%arg0: i32, %arg1: i32, %arg2: i32) -> (i32, i32) {
    %c0_i32 = arith.constant 0 : i32
    return %arg1, %arg2 : i32, i32
  }
  func.func @transform_1(%arg0: i32, %arg1: i32, %arg2: i32) -> (i32, i32) {
    %c0_i32 = arith.constant 0 : i32
    return %arg2, %arg0 : i32, i32
  }
  func.func @transform_2(%arg0: i32, %arg1: i32, %arg2: i32) -> (i32, i32) {
    %c0_i32 = arith.constant 0 : i32
    %c0_i32_0 = arith.constant 0 : i32
    return %c0_i32, %arg0 : i32, i32
  }
  func.func @transform_3(%arg0: i32, %arg1: i32, %arg2: i32) -> (i32, i32) {
    %c0_i32 = arith.constant 0 : i32
    return %arg1, %arg0 : i32, i32
  }
  func.func @transform_4(%arg0: i32, %arg1: i32, %arg2: i32) -> (i32, i32) {
    %c0_i32 = arith.constant 0 : i32
    %c0_i32_0 = arith.constant 0 : i32
    return %c0_i32, %arg0 : i32, i32
  }
}

module attributes {stable_mosaic.version = 11 : i64} {
  func.func @_bn_leaky_kernel(%arg0: i32, %arg1: memref<32x128xbf16, #tpu.memory_space<vmem>>, %arg2: memref<1x128xf32, #tpu.memory_space<vmem>>, %arg3: memref<1x128xf32, #tpu.memory_space<vmem>>, %arg4: memref<32x128xbf16, #tpu.memory_space<vmem>>) attributes {dimension_semantics = [#tpu.dimension_semantics<parallel>], iteration_bounds = array<i64: 1>, scalar_prefetch = 0 : i64, scratch_operands = 0 : i64, tpu.core_type = #tpu.core_type<tc>, window_params = [{transform_indices = @transform_0, window_bounds = array<i64: 32, 128>}, {pipeline_mode = #tpu.pipeline_mode<synchronous>, transform_indices = @transform_1, window_bounds = array<i64: 1, 128>}, {pipeline_mode = #tpu.pipeline_mode<synchronous>, transform_indices = @transform_2, window_bounds = array<i64: 1, 128>}, {transform_indices = @transform_3, window_bounds = array<i64: 32, 128>}]} {
    %c0 = arith.constant 0 : index
    %c0_0 = arith.constant 0 : index
    %0 = vector.load %arg1[%c0, %c0_0] : memref<32x128xbf16, #tpu.memory_space<vmem>>, vector<32x128xbf16>
    %1 = arith.extf %0 : vector<32x128xbf16> to vector<32x128xf32>
    %c0_1 = arith.constant 0 : index
    %c0_2 = arith.constant 0 : index
    %2 = vector.load %arg2[%c0_1, %c0_2] : memref<1x128xf32, #tpu.memory_space<vmem>>, vector<1x128xf32>
    %3 = vector.broadcast %2 : vector<1x128xf32> to vector<32x128xf32>
    %4 = arith.mulf %1, %3 : vector<32x128xf32>
    %c0_3 = arith.constant 0 : index
    %c0_4 = arith.constant 0 : index
    %5 = vector.load %arg3[%c0_3, %c0_4] : memref<1x128xf32, #tpu.memory_space<vmem>>, vector<1x128xf32>
    %6 = vector.broadcast %5 : vector<1x128xf32> to vector<32x128xf32>
    %7 = arith.addf %4, %6 : vector<32x128xf32>
    %cst = arith.constant 0.000000e+00 : f32
    %8 = vector.broadcast %cst : f32 to vector<32x128xf32>
    %9 = arith.cmpf oge, %7, %8 : vector<32x128xf32>
    %cst_5 = arith.constant 2.000000e-01 : f32
    %10 = vector.broadcast %cst_5 : f32 to vector<32x128xf32>
    %11 = arith.mulf %10, %7 : vector<32x128xf32>
    %12 = arith.select %9, %7, %11 : vector<32x128xi1>, vector<32x128xf32>
    %13 = arith.truncf %12 : vector<32x128xf32> to vector<32x128xbf16>
    %c0_6 = arith.constant 0 : index
    %c0_7 = arith.constant 0 : index
    %14 = vector.load %arg4[%c0_6, %c0_7] : memref<32x128xbf16, #tpu.memory_space<vmem>>, vector<32x128xbf16>
    tpu.vector_store %arg4[%c0_6, %c0_7], %13 {strides = array<i32>} : memref<32x128xbf16, #tpu.memory_space<vmem>>, vector<32x128xbf16>,
    return
  }
  func.func @transform_0(%arg0: i32) -> (i32, i32) {
    %c0_i32 = arith.constant 0 : i32
    %c0_i32_0 = arith.constant 0 : i32
    return %arg0, %c0_i32 : i32, i32
  }
  func.func @transform_1(%arg0: i32) -> (i32, i32) {
    %c0_i32 = arith.constant 0 : i32
    %c0_i32_0 = arith.constant 0 : i32
    %c0_i32_1 = arith.constant 0 : i32
    return %c0_i32, %c0_i32_0 : i32, i32
  }
  func.func @transform_2(%arg0: i32) -> (i32, i32) {
    %c0_i32 = arith.constant 0 : i32
    %c0_i32_0 = arith.constant 0 : i32
    %c0_i32_1 = arith.constant 0 : i32
    return %c0_i32, %c0_i32_0 : i32, i32
  }
  func.func @transform_3(%arg0: i32) -> (i32, i32) {
    %c0_i32 = arith.constant 0 : i32
    %c0_i32_0 = arith.constant 0 : i32
    return %arg0, %c0_i32 : i32, i32
  }
}

module attributes {stable_mosaic.version = 11 : i64} {
  func.func @_conv_mm_kernel(%arg0: i32, %arg1: i32, %arg2: i32, %arg3: memref<32x512xbf16, #tpu.memory_space<vmem>>, %arg4: memref<512x128xbf16, #tpu.memory_space<vmem>>, %arg5: memref<1x128xf32, #tpu.memory_space<vmem>>, %arg6: memref<32x128xbf16, #tpu.memory_space<vmem>>, %arg7: memref<8x128xf32, #tpu.memory_space<vmem>>, %arg8: memref<32x128xf32, #tpu.memory_space<vmem>>) attributes {dimension_semantics = [#tpu.dimension_semantics<parallel>, #tpu.dimension_semantics<arbitrary>, #tpu.dimension_semantics<arbitrary>], iteration_bounds = array<i64: 1, 1, 1>, scalar_prefetch = 0 : i64, scratch_operands = 1 : i64, tpu.core_type = #tpu.core_type<tc>, window_params = [{transform_indices = @transform_0, window_bounds = array<i64: 32, 512>}, {transform_indices = @transform_1, window_bounds = array<i64: 512, 128>}, {transform_indices = @transform_2, window_bounds = array<i64: 1, 128>}, {transform_indices = @transform_3, window_bounds = array<i64: 32, 128>}, {transform_indices = @transform_4, window_bounds = array<i64: 8, 128>}]} {
    %c0_i32 = arith.constant 0 : i32
    %0 = arith.cmpi eq, %arg2, %c0_i32 : i32
    %1 = arith.extui %0 : i1 to i32
    %c0_i32_0 = arith.constant 0 : i32
    %2 = arith.cmpi ne, %1, %c0_i32_0 : i32
    scf.if %2 {
      %cst_13 = arith.constant 0.000000e+00 : f32
      %17 = vector.broadcast %cst_13 : f32 to vector<32x128xf32>
      %c0_14 = arith.constant 0 : index
      %c0_15 = arith.constant 0 : index
      %18 = vector.load %arg8[%c0_14, %c0_15] : memref<32x128xf32, #tpu.memory_space<vmem>>, vector<32x128xf32>
      tpu.vector_store %arg8[%c0_14, %c0_15], %17 {strides = array<i32>} : memref<32x128xf32, #tpu.memory_space<vmem>>, vector<32x128xf32>,
    } else {
    }
    %c0_i32_1 = arith.constant 0 : i32
    %3 = arith.cmpi eq, %arg1, %c0_i32_1 : i32
    %c0_i32_2 = arith.constant 0 : i32
    %4 = arith.cmpi eq, %arg2, %c0_i32_2 : i32
    %5 = arith.andi %3, %4 : i1
    %6 = arith.extui %5 : i1 to i32
    %c0_i32_3 = arith.constant 0 : i32
    %7 = arith.cmpi ne, %6, %c0_i32_3 : i32
    scf.if %7 {
      %cst_13 = arith.constant 0.000000e+00 : f32
      %17 = vector.broadcast %cst_13 : f32 to vector<8x128xf32>
      %c0_14 = arith.constant 0 : index
      %c0_15 = arith.constant 0 : index
      %18 = vector.load %arg7[%c0_14, %c0_15] : memref<8x128xf32, #tpu.memory_space<vmem>>, vector<8x128xf32>
      tpu.vector_store %arg7[%c0_14, %c0_15], %17 {strides = array<i32>} : memref<8x128xf32, #tpu.memory_space<vmem>>, vector<8x128xf32>,
    } else {
    }
    %c0 = arith.constant 0 : index
    %c0_4 = arith.constant 0 : index
    %8 = vector.load %arg8[%c0, %c0_4] : memref<32x128xf32, #tpu.memory_space<vmem>>, vector<32x128xf32>
    %c0_5 = arith.constant 0 : index
    %c0_6 = arith.constant 0 : index
    %9 = vector.load %arg3[%c0_5, %c0_6] : memref<32x512xbf16, #tpu.memory_space<vmem>>, vector<32x512xbf16>
    %c0_7 = arith.constant 0 : index
    %c0_8 = arith.constant 0 : index
    %10 = vector.load %arg4[%c0_7, %c0_8] : memref<512x128xbf16, #tpu.memory_space<vmem>>, vector<512x128xbf16>
    %cst = arith.constant dense<0.000000e+00> : vector<32x128xf32>
    %11 = tpu.matmul %9, %10, %cst {dimension_numbers = #tpu.dot_dimension_numbers<[1], [0], [0], [1], [0, 0, 1, 1], [], []>} : vector<32x512xbf16>, vector<512x128xbf16>, vector<32x128xf32> -> vector<32x128xf32>
    %12 = arith.addf %8, %11 : vector<32x128xf32>
    %c0_9 = arith.constant 0 : index
    %c0_10 = arith.constant 0 : index
    %13 = vector.load %arg8[%c0_9, %c0_10] : memref<32x128xf32, #tpu.memory_space<vmem>>, vector<32x128xf32>
    tpu.vector_store %arg8[%c0_9, %c0_10], %12 {strides = array<i32>} : memref<32x128xf32, #tpu.memory_space<vmem>>, vector<32x128xf32>,
    %c0_i32_11 = arith.constant 0 : i32
    %14 = arith.cmpi eq, %arg2, %c0_i32_11 : i32
    %15 = arith.extui %14 : i1 to i32
    %c0_i32_12 = arith.constant 0 : i32
    %16 = arith.cmpi ne, %15, %c0_i32_12 : i32
    scf.if %16 {
      %c0_13 = arith.constant 0 : index
      %c0_14 = arith.constant 0 : index
      %17 = vector.load %arg8[%c0_13, %c0_14] : memref<32x128xf32, #tpu.memory_space<vmem>>, vector<32x128xf32>
      %c0_15 = arith.constant 0 : index
      %c0_16 = arith.constant 0 : index
      %18 = vector.load %arg5[%c0_15, %c0_16] : memref<1x128xf32, #tpu.memory_space<vmem>>, vector<1x128xf32>
      %19 = vector.broadcast %18 : vector<1x128xf32> to vector<32x128xf32>
      %20 = arith.addf %17, %19 : vector<32x128xf32>
      %21 = arith.truncf %20 : vector<32x128xf32> to vector<32x128xbf16>
      %c0_17 = arith.constant 0 : index
      %c0_18 = arith.constant 0 : index
      %22 = vector.load %arg6[%c0_17, %c0_18] : memref<32x128xbf16, #tpu.memory_space<vmem>>, vector<32x128xbf16>
      tpu.vector_store %arg6[%c0_17, %c0_18], %21 {strides = array<i32>} : memref<32x128xbf16, #tpu.memory_space<vmem>>, vector<32x128xbf16>,
      %cst_19 = arith.constant dense<0.000000e+00> : vector<128xf32>
      %23 = vector.multi_reduction <add>, %20, %cst_19 [0] : vector<32x128xf32> to vector<128xf32>
      %24 = vector.shape_cast %23 : vector<128xf32> to vector<1x128xf32>
      %25 = arith.mulf %20, %20 : vector<32x128xf32>
      %cst_20 = arith.constant dense<0.000000e+00> : vector<128xf32>
      %26 = vector.multi_reduction <add>, %25, %cst_20 [0] : vector<32x128xf32> to vector<128xf32>
      %27 = vector.shape_cast %26 : vector<128xf32> to vector<1x128xf32>
      %c0_21 = arith.constant 0 : index
      %c0_22 = arith.constant 0 : index
      %28 = vector.load %arg7[%c0_21, %c0_22] : memref<8x128xf32, #tpu.memory_space<vmem>>, vector<2x128xf32>
      %29 = tpu.concatenate %24, %27 in 0 : vector<1x128xf32>, vector<1x128xf32> -> vector<2x128xf32>
      %30 = arith.addf %28, %29 : vector<2x128xf32>
      %c0_23 = arith.constant 0 : index
      %c0_24 = arith.constant 0 : index
      %31 = vector.load %arg7[%c0_23, %c0_24] : memref<8x128xf32, #tpu.memory_space<vmem>>, vector<2x128xf32>
      tpu.vector_store %arg7[%c0_23, %c0_24], %30 {strides = array<i32>} : memref<8x128xf32, #tpu.memory_space<vmem>>, vector<2x128xf32>,
    } else {
    }
    return
  }
  func.func @transform_0(%arg0: i32, %arg1: i32, %arg2: i32) -> (i32, i32) {
    %c0_i32 = arith.constant 0 : i32
    return %arg1, %arg2 : i32, i32
  }
  func.func @transform_1(%arg0: i32, %arg1: i32, %arg2: i32) -> (i32, i32) {
    %c0_i32 = arith.constant 0 : i32
    return %arg2, %arg0 : i32, i32
  }
  func.func @transform_2(%arg0: i32, %arg1: i32, %arg2: i32) -> (i32, i32) {
    %c0_i32 = arith.constant 0 : i32
    %c0_i32_0 = arith.constant 0 : i32
    return %c0_i32, %arg0 : i32, i32
  }
  func.func @transform_3(%arg0: i32, %arg1: i32, %arg2: i32) -> (i32, i32) {
    %c0_i32 = arith.constant 0 : i32
    return %arg1, %arg0 : i32, i32
  }
  func.func @transform_4(%arg0: i32, %arg1: i32, %arg2: i32) -> (i32, i32) {
    %c0_i32 = arith.constant 0 : i32
    %c0_i32_0 = arith.constant 0 : i32
    return %c0_i32, %arg0 : i32, i32
  }
}

module attributes {stable_mosaic.version = 11 : i64} {
  func.func @_conv_mm_kernel(%arg0: i32, %arg1: i32, %arg2: i32, %arg3: memref<16x512xbf16, #tpu.memory_space<vmem>>, %arg4: memref<512x128xbf16, #tpu.memory_space<vmem>>, %arg5: memref<1x128xf32, #tpu.memory_space<vmem>>, %arg6: memref<16x128xbf16, #tpu.memory_space<vmem>>, %arg7: memref<8x128xf32, #tpu.memory_space<vmem>>, %arg8: memref<16x128xf32, #tpu.memory_space<vmem>>) attributes {dimension_semantics = [#tpu.dimension_semantics<parallel>, #tpu.dimension_semantics<arbitrary>, #tpu.dimension_semantics<arbitrary>], iteration_bounds = array<i64: 1, 1, 2>, scalar_prefetch = 0 : i64, scratch_operands = 1 : i64, tpu.core_type = #tpu.core_type<tc>, window_params = [{transform_indices = @transform_0, window_bounds = array<i64: 16, 512>}, {transform_indices = @transform_1, window_bounds = array<i64: 512, 128>}, {transform_indices = @transform_2, window_bounds = array<i64: 1, 128>}, {transform_indices = @transform_3, window_bounds = array<i64: 16, 128>}, {transform_indices = @transform_4, window_bounds = array<i64: 8, 128>}]} {
    %c0_i32 = arith.constant 0 : i32
    %0 = arith.cmpi eq, %arg2, %c0_i32 : i32
    %1 = arith.extui %0 : i1 to i32
    %c0_i32_0 = arith.constant 0 : i32
    %2 = arith.cmpi ne, %1, %c0_i32_0 : i32
    scf.if %2 {
      %cst_12 = arith.constant 0.000000e+00 : f32
      %17 = vector.broadcast %cst_12 : f32 to vector<16x128xf32>
      %c0_13 = arith.constant 0 : index
      %c0_14 = arith.constant 0 : index
      %18 = vector.load %arg8[%c0_13, %c0_14] : memref<16x128xf32, #tpu.memory_space<vmem>>, vector<16x128xf32>
      tpu.vector_store %arg8[%c0_13, %c0_14], %17 {strides = array<i32>} : memref<16x128xf32, #tpu.memory_space<vmem>>, vector<16x128xf32>,
    } else {
    }
    %c0_i32_1 = arith.constant 0 : i32
    %3 = arith.cmpi eq, %arg1, %c0_i32_1 : i32
    %c0_i32_2 = arith.constant 0 : i32
    %4 = arith.cmpi eq, %arg2, %c0_i32_2 : i32
    %5 = arith.andi %3, %4 : i1
    %6 = arith.extui %5 : i1 to i32
    %c0_i32_3 = arith.constant 0 : i32
    %7 = arith.cmpi ne, %6, %c0_i32_3 : i32
    scf.if %7 {
      %cst_12 = arith.constant 0.000000e+00 : f32
      %17 = vector.broadcast %cst_12 : f32 to vector<8x128xf32>
      %c0_13 = arith.constant 0 : index
      %c0_14 = arith.constant 0 : index
      %18 = vector.load %arg7[%c0_13, %c0_14] : memref<8x128xf32, #tpu.memory_space<vmem>>, vector<8x128xf32>
      tpu.vector_store %arg7[%c0_13, %c0_14], %17 {strides = array<i32>} : memref<8x128xf32, #tpu.memory_space<vmem>>, vector<8x128xf32>,
    } else {
    }
    %c0 = arith.constant 0 : index
    %c0_4 = arith.constant 0 : index
    %8 = vector.load %arg8[%c0, %c0_4] : memref<16x128xf32, #tpu.memory_space<vmem>>, vector<16x128xf32>
    %c0_5 = arith.constant 0 : index
    %c0_6 = arith.constant 0 : index
    %9 = vector.load %arg3[%c0_5, %c0_6] : memref<16x512xbf16, #tpu.memory_space<vmem>>, vector<16x512xbf16>
    %c0_7 = arith.constant 0 : index
    %c0_8 = arith.constant 0 : index
    %10 = vector.load %arg4[%c0_7, %c0_8] : memref<512x128xbf16, #tpu.memory_space<vmem>>, vector<512x128xbf16>
    %cst = arith.constant dense<0.000000e+00> : vector<16x128xf32>
    %11 = tpu.matmul %9, %10, %cst {dimension_numbers = #tpu.dot_dimension_numbers<[1], [0], [0], [1], [0, 0, 1, 1], [], []>} : vector<16x512xbf16>, vector<512x128xbf16>, vector<16x128xf32> -> vector<16x128xf32>
    %12 = arith.addf %8, %11 : vector<16x128xf32>
    %c0_9 = arith.constant 0 : index
    %c0_10 = arith.constant 0 : index
    %13 = vector.load %arg8[%c0_9, %c0_10] : memref<16x128xf32, #tpu.memory_space<vmem>>, vector<16x128xf32>
    tpu.vector_store %arg8[%c0_9, %c0_10], %12 {strides = array<i32>} : memref<16x128xf32, #tpu.memory_space<vmem>>, vector<16x128xf32>,
    %c1_i32 = arith.constant 1 : i32
    %14 = arith.cmpi eq, %arg2, %c1_i32 : i32
    %15 = arith.extui %14 : i1 to i32
    %c0_i32_11 = arith.constant 0 : i32
    %16 = arith.cmpi ne, %15, %c0_i32_11 : i32
    scf.if %16 {
      %c0_12 = arith.constant 0 : index
      %c0_13 = arith.constant 0 : index
      %17 = vector.load %arg8[%c0_12, %c0_13] : memref<16x128xf32, #tpu.memory_space<vmem>>, vector<16x128xf32>
      %c0_14 = arith.constant 0 : index
      %c0_15 = arith.constant 0 : index
      %18 = vector.load %arg5[%c0_14, %c0_15] : memref<1x128xf32, #tpu.memory_space<vmem>>, vector<1x128xf32>
      %19 = vector.broadcast %18 : vector<1x128xf32> to vector<16x128xf32>
      %20 = arith.addf %17, %19 : vector<16x128xf32>
      %21 = arith.truncf %20 : vector<16x128xf32> to vector<16x128xbf16>
      %c0_16 = arith.constant 0 : index
      %c0_17 = arith.constant 0 : index
      %22 = vector.load %arg6[%c0_16, %c0_17] : memref<16x128xbf16, #tpu.memory_space<vmem>>, vector<16x128xbf16>
      tpu.vector_store %arg6[%c0_16, %c0_17], %21 {strides = array<i32>} : memref<16x128xbf16, #tpu.memory_space<vmem>>, vector<16x128xbf16>,
      %cst_18 = arith.constant dense<0.000000e+00> : vector<128xf32>
      %23 = vector.multi_reduction <add>, %20, %cst_18 [0] : vector<16x128xf32> to vector<128xf32>
      %24 = vector.shape_cast %23 : vector<128xf32> to vector<1x128xf32>
      %25 = arith.mulf %20, %20 : vector<16x128xf32>
      %cst_19 = arith.constant dense<0.000000e+00> : vector<128xf32>
      %26 = vector.multi_reduction <add>, %25, %cst_19 [0] : vector<16x128xf32> to vector<128xf32>
      %27 = vector.shape_cast %26 : vector<128xf32> to vector<1x128xf32>
      %c0_20 = arith.constant 0 : index
      %c0_21 = arith.constant 0 : index
      %28 = vector.load %arg7[%c0_20, %c0_21] : memref<8x128xf32, #tpu.memory_space<vmem>>, vector<2x128xf32>
      %29 = tpu.concatenate %24, %27 in 0 : vector<1x128xf32>, vector<1x128xf32> -> vector<2x128xf32>
      %30 = arith.addf %28, %29 : vector<2x128xf32>
      %c0_22 = arith.constant 0 : index
      %c0_23 = arith.constant 0 : index
      %31 = vector.load %arg7[%c0_22, %c0_23] : memref<8x128xf32, #tpu.memory_space<vmem>>, vector<2x128xf32>
      tpu.vector_store %arg7[%c0_22, %c0_23], %30 {strides = array<i32>} : memref<8x128xf32, #tpu.memory_space<vmem>>, vector<2x128xf32>,
    } else {
    }
    return
  }
  func.func @transform_0(%arg0: i32, %arg1: i32, %arg2: i32) -> (i32, i32) {
    %c0_i32 = arith.constant 0 : i32
    return %arg1, %arg2 : i32, i32
  }
  func.func @transform_1(%arg0: i32, %arg1: i32, %arg2: i32) -> (i32, i32) {
    %c0_i32 = arith.constant 0 : i32
    return %arg2, %arg0 : i32, i32
  }
  func.func @transform_2(%arg0: i32, %arg1: i32, %arg2: i32) -> (i32, i32) {
    %c0_i32 = arith.constant 0 : i32
    %c0_i32_0 = arith.constant 0 : i32
    return %c0_i32, %arg0 : i32, i32
  }
  func.func @transform_3(%arg0: i32, %arg1: i32, %arg2: i32) -> (i32, i32) {
    %c0_i32 = arith.constant 0 : i32
    return %arg1, %arg0 : i32, i32
  }
  func.func @transform_4(%arg0: i32, %arg1: i32, %arg2: i32) -> (i32, i32) {
    %c0_i32 = arith.constant 0 : i32
    %c0_i32_0 = arith.constant 0 : i32
    return %c0_i32, %arg0 : i32, i32
  }
}

</mosaic_0001>

<llo_original>
// kernel: _lambda_.8
$region0: #{_lambda_.8}
  #allocation0 [shape = 'u32[]', space=smem, size = 0x4, offset = 0x4, fixed_abs, tag = 'smem constant byte address 0x4 - core index']
  #allocation1 [shape = 'u32[144,128]{1,0:T(1,128)}', space=vmem, size = 0x12000, scoped, tag = 'internal scratch']
  #allocation2 [shape = 'f32[512,128]{1,0:T(8,128)}', space=vmem, size = 0x40000, scoped, tag = 'scratch operand']
  %s0 = inlined_call_operand.vmem [shape: bf16[512,128], index: 0, kind: input, shape index: {}]
  %s1 = inlined_call_operand.vmem [shape: bf16[128,128], index: 1, kind: input, shape index: {}]
  %s2 = inlined_call_operand.vmem [shape: f32[1,128], index: 2, kind: input, shape index: {}]
  %s3 = inlined_call_operand.vmem [shape: bf16[512,128], index: 3, kind: output, shape index: {0}]
  %s4 = inlined_call_operand.hbm [shape: f32[8,128], index: 4, kind: output, shape index: {1}]
  %5 = xla_tuple %s3, %s4
  %s6 = sld [smem:[#allocation0]]
  $region42: #{_lambda_.8} parent=0
    _
  %s8 = ssub.s32 1, %s6
  %s9 = scalar_select 0, %s8, %s6
  $region1: #{_lambda_.8} parent=0
    #allocation3 [shape = 'u8[4096]{0}', space=vmem, size = 0x1000, scoped, tag = 'output window, operand 1, single buffered']
    #allocation4 [shape = 's32[1]{0}', space=sflag, size = 0x4, scoped, tag = 'scoped memory for _lambda_.8']
    %10 = vsyncpa [#allocation4], 0
    // Predicated region
    $region2: #{_lambda_.8} parent=1 // pred_check
      _
    $region3: #{_lambda_.8} parent=1 // pred_check_branch
      %12 = sbr.rel (0) target = $region5
    $region4: #{_lambda_.8} parent=1 // pred_region
      _
    $region5: #{_lambda_.8} parent=1 // pred_fallthru
      _
    // Predicated region
    $region6: #{_lambda_.8} parent=1 // pred_check
      _
    $region7: #{_lambda_.8} parent=1 // pred_check_branch
      %14 = sbr.rel (0) target = $region9
    $region8: #{_lambda_.8} parent=1 // pred_region
      _
    $region9: #{_lambda_.8} parent=1 // pred_fallthru
      _
    // Predicated region
    $region10: #{_lambda_.8} parent=1 // pred_check
      _
    $region11: #{_lambda_.8} parent=1 // pred_check_branch
      %16 = sbr.rel (0) target = $region13
    $region12: #{_lambda_.8} parent=1 // pred_region
      _
    $region13: #{_lambda_.8} parent=1 // pred_fallthru
      _
    %p18 = scmp.eq.s32.totalorder 0, 0
    // Predicated region
    $region14: #{_lambda_.8} parent=1 // pred_check
      %p19 = pneg %p18
    $region15: #{_lambda_.8} parent=1 // pred_check_branch
      %21 = sbr.rel (%p19) target = $region17
    $region16: #{_lambda_.8} parent=1 // pred_region
      %22 = vst [vmem:[#allocation2] sm:$0xff] 0.0
      %23 = vst [vmem:[#allocation2 + $0x8] sm:$0xff] 0.0
      %24 = vst [vmem:[#allocation2 + $0x10] sm:$0xff] 0.0
      %25 = vst [vmem:[#allocation2 + $0x18] sm:$0xff] 0.0
      %26 = vst [vmem:[#allocation2 + $0x20] sm:$0xff] 0.0
      %27 = vst [vmem:[#allocation2 + $0x28] sm:$0xff] 0.0
      %28 = vst [vmem:[#allocation2 + $0x30] sm:$0xff] 0.0
      %29 = vst [vmem:[#allocation2 + $0x38] sm:$0xff] 0.0
      %30 = vst [vmem:[#allocation2 + $0x40] sm:$0xff] 0.0
      %31 = vst [vmem:[#allocation2 + $0x48] sm:$0xff] 0.0
      %32 = vst [vmem:[#allocation2 + $0x50] sm:$0xff] 0.0
      %33 = vst [vmem:[#allocation2 + $0x58] sm:$0xff] 0.0
      %34 = vst [vmem:[#allocation2 + $0x60] sm:$0xff] 0.0
      %35 = vst [vmem:[#allocation2 + $0x68] sm:$0xff] 0.0
      %36 = vst [vmem:[#allocation2 + $0x70] sm:$0xff] 0.0
      %37 = vst [vmem:[#allocation2 + $0x78] sm:$0xff] 0.0
      %38 = vst [vmem:[#allocation2 + $0x80] sm:$0xff] 0.0
      %39 = vst [vmem:[#allocation2 + $0x88] sm:$0xff] 0.0
      %40 = vst [vmem:[#allocation2 + $0x90] sm:$0xff] 0.0
      %41 = vst [vmem:[#allocation2 + $0x98] sm:$0xff] 0.0
      %42 = vst [vmem:[#allocation2 + $0xa0] sm:$0xff] 0.0
      %43 = vst [vmem:[#allocation2 + $0xa8] sm:$0xff] 0.0
      %44 = vst [vmem:[#allocation2 + $0xb0] sm:$0xff] 0.0
      %45 = vst [vmem:[#allocation2 + $0xb8] sm:$0xff] 0.0
      %46 = vst [vmem:[#allocation2 + $0xc0] sm:$0xff] 0.0
      %47 = vst [vmem:[#allocation2 + $0xc8] sm:$0xff] 0.0
      %48 = vst [vmem:[#allocation2 + $0xd0] sm:$0xff] 0.0
      %49 = vst [vmem:[#allocation2 + $0xd8] sm:$0xff] 0.0
      %50 = vst [vmem:[#allocation2 + $0xe0] sm:$0xff] 0.0
      %51 = vst [vmem:[#allocation2 + $0xe8] sm:$0xff] 0.0
      %52 = vst [vmem:[#allocation2 + $0xf0] sm:$0xff] 0.0
      %53 = vst [vmem:[#allocation2 + $0xf8] sm:$0xff] 0.0
      %54 = vst [vmem:[#allocation2 + $0x100] sm:$0xff] 0.0
      %55 = vst [vmem:[#allocation2 + $0x108] sm:$0xff] 0.0
      %56 = vst [vmem:[#allocation2 + $0x110] sm:$0xff] 0.0
      %57 = vst [vmem:[#allocation2 + $0x118] sm:$0xff] 0.0
      %58 = vst [vmem:[#allocation2 + $0x120] sm:$0xff] 0.0
      %59 = vst [vmem:[#allocation2 + $0x128] sm:$0xff] 0.0
      %60 = vst [vmem:[#allocation2 + $0x130] sm:$0xff] 0.0
      %61 = vst [vmem:[#allocation2 + $0x138] sm:$0xff] 0.0
      %62 = vst [vmem:[#allocation2 + $0x140] sm:$0xff] 0.0
      %63 = vst [vmem:[#allocation2 + $0x148] sm:$0xff] 0.0
      %64 = vst [vmem:[#allocation2 + $0x150] sm:$0xff] 0.0
      %65 = vst [vmem:[#allocation2 + $0x158] sm:$0xff] 0.0
      %66 = vst [vmem:[#allocation2 + $0x160] sm:$0xff] 0.0
      %67 = vst [vmem:[#allocation2 + $0x168] sm:$0xff] 0.0
      %68 = vst [vmem:[#allocation2 + $0x170] sm:$0xff] 0.0
      %69 = vst [vmem:[#allocation2 + $0x178] sm:$0xff] 0.0
      %70 = vst [vmem:[#allocation2 + $0x180] sm:$0xff] 0.0
      %71 = vst [vmem:[#allocation2 + $0x188] sm:$0xff] 0.0
      %72 = vst [vmem:[#allocation2 + $0x190] sm:$0xff] 0.0
      %73 = vst [vmem:[#allocation2 + $0x198] sm:$0xff] 0.0
      %74 = vst [vmem:[#allocation2 + $0x1a0] sm:$0xff] 0.0
      %75 = vst [vmem:[#allocation2 + $0x1a8] sm:$0xff] 0.0
      %76 = vst [vmem:[#allocation2 + $0x1b0] sm:$0xff] 0.0
      %77 = vst [vmem:[#allocation2 + $0x1b8] sm:$0xff] 0.0
      %78 = vst [vmem:[#allocation2 + $0x1c0] sm:$0xff] 0.0
      %79 = vst [vmem:[#allocation2 + $0x1c8] sm:$0xff] 0.0
      %80 = vst [vmem:[#allocation2 + $0x1d0] sm:$0xff] 0.0
      %81 = vst [vmem:[#allocation2 + $0x1d8] sm:$0xff] 0.0
      %82 = vst [vmem:[#allocation2 + $0x1e0] sm:$0xff] 0.0
      %83 = vst [vmem:[#allocation2 + $0x1e8] sm:$0xff] 0.0
      %84 = vst [vmem:[#allocation2 + $0x1f0] sm:$0xff] 0.0
      %85 = vst [vmem:[#allocation2 + $0x1f8] sm:$0xff] 0.0
    $region17: #{_lambda_.8} parent=1 // pred_fallthru
      _
    %p86 = scmp.eq.s32.totalorder 0, 0
    %p87 = pnand %p86, %p18
    %p88 = pneg %p87
    // Predicated region
    $region18: #{_lambda_.8} parent=1 // pred_check
      _
    $region19: #{_lambda_.8} parent=1 // pred_check_branch
      %90 = sbr.rel (%p87) target = $region21
    $region20: #{_lambda_.8} parent=1 // pred_region
      %91 = vst [vmem:[#allocation3] sm:$0xff] 0.0
    $region21: #{_lambda_.8} parent=1 // pred_fallthru
      _
    %v92 = vld [vmem:[#allocation2] sm:$0xff]
    %v93 = vld [vmem:[#allocation2 + $0x8] sm:$0xff]
    %v94 = vld [vmem:[#allocation2 + $0x10] sm:$0xff]
    %v95 = vld [vmem:[#allocation2 + $0x18] sm:$0xff]
    %v96 = vld [vmem:[#allocation2 + $0x20] sm:$0xff]
    %v97 = vld [vmem:[#allocation2 + $0x28] sm:$0xff]
    %v98 = vld [vmem:[#allocation2 + $0x30] sm:$0xff]
    %v99 = vld [vmem:[#allocation2 + $0x38] sm:$0xff]
    %v100 = vld [vmem:[#allocation2 + $0x40] sm:$0xff]
    %v101 = vld [vmem:[#allocation2 + $0x48] sm:$0xff]
    %v102 = vld [vmem:[#allocation2 + $0x50] sm:$0xff]
    %v103 = vld [vmem:[#allocation2 + $0x58] sm:$0xff]
    %v104 = vld [vmem:[#allocation2 + $0x60] sm:$0xff]
    %v105 = vld [vmem:[#allocation2 + $0x68] sm:$0xff]
    %v106 = vld [vmem:[#allocation2 + $0x70] sm:$0xff]
    %v107 = vld [vmem:[#allocation2 + $0x78] sm:$0xff]
    %v108 = vld [vmem:[#allocation2 + $0x80] sm:$0xff]
    %v109 = vld [vmem:[#allocation2 + $0x88] sm:$0xff]
    %v110 = vld [vmem:[#allocation2 + $0x90] sm:$0xff]
    %v111 = vld [vmem:[#allocation2 + $0x98] sm:$0xff]
    %v112 = vld [vmem:[#allocation2 + $0xa0] sm:$0xff]
    %v113 = vld [vmem:[#allocation2 + $0xa8] sm:$0xff]
    %v114 = vld [vmem:[#allocation2 + $0xb0] sm:$0xff]
    %v115 = vld [vmem:[#allocation2 + $0xb8] sm:$0xff]
    %v116 = vld [vmem:[#allocation2 + $0xc0] sm:$0xff]
    %v117 = vld [vmem:[#allocation2 + $0xc8] sm:$0xff]
    %v118 = vld [vmem:[#allocation2 + $0xd0] sm:$0xff]
    %v119 = vld [vmem:[#allocation2 + $0xd8] sm:$0xff]
    %v120 = vld [vmem:[#allocation2 + $0xe0] sm:$0xff]
    %v121 = vld [vmem:[#allocation2 + $0xe8] sm:$0xff]
    %v122 = vld [vmem:[#allocation2 + $0xf0] sm:$0xff]
    %v123 = vld [vmem:[#allocation2 + $0xf8] sm:$0xff]
    %v124 = vld [vmem:[#allocation2 + $0x100] sm:$0xff]
    %v125 = vld [vmem:[#allocation2 + $0x108] sm:$0xff]
    %v126 = vld [vmem:[#allocation2 + $0x110] sm:$0xff]
    %v127 = vld [vmem:[#allocation2 + $0x118] sm:$0xff]
    %v128 = vld [vmem:[#allocation2 + $0x120] sm:$0xff]
    %v129 = vld [vmem:[#allocation2 + $0x128] sm:$0xff]
    %v130 = vld [vmem:[#allocation2 + $0x130] sm:$0xff]
    %v131 = vld [vmem:[#allocation2 + $0x138] sm:$0xff]
    %v132 = vld [vmem:[#allocation2 + $0x140] sm:$0xff]
    %v133 = vld [vmem:[#allocation2 + $0x148] sm:$0xff]
    %v134 = vld [vmem:[#allocation2 + $0x150] sm:$0xff]
    %v135 = vld [vmem:[#allocation2 + $0x158] sm:$0xff]
    %v136 = vld [vmem:[#allocation2 + $0x160] sm:$0xff]
    %v137 = vld [vmem:[#allocation2 + $0x168] sm:$0xff]
    %v138 = vld [vmem:[#allocation2 + $0x170] sm:$0xff]
    %v139 = vld [vmem:[#allocation2 + $0x178] sm:$0xff]
    %v140 = vld [vmem:[#allocation2 + $0x180] sm:$0xff]
    %v141 = vld [vmem:[#allocation2 + $0x188] sm:$0xff]
    %v142 = vld [vmem:[#allocation2 + $0x190] sm:$0xff]
    %v143 = vld [vmem:[#allocation2 + $0x198] sm:$0xff]
    %v144 = vld [vmem:[#allocation2 + $0x1a0] sm:$0xff]
    %v145 = vld [vmem:[#allocation2 + $0x1a8] sm:$0xff]
    %v146 = vld [vmem:[#allocation2 + $0x1b0] sm:$0xff]
    %v147 = vld [vmem:[#allocation2 + $0x1b8] sm:$0xff]
    %v148 = vld [vmem:[#allocation2 + $0x1c0] sm:$0xff]
    %v149 = vld [vmem:[#allocation2 + $0x1c8] sm:$0xff]
    %v150 = vld [vmem:[#allocation2 + $0x1d0] sm:$0xff]
    %v151 = vld [vmem:[#allocation2 + $0x1d8] sm:$0xff]
    %v152 = vld [vmem:[#allocation2 + $0x1e0] sm:$0xff]
    %v153 = vld [vmem:[#allocation2 + $0x1e8] sm:$0xff]
    %v154 = vld [vmem:[#allocation2 + $0x1f0] sm:$0xff]
    %v155 = vld [vmem:[#allocation2 + $0x1f8] sm:$0xff]
    %v156 = vld [vmem:[%s0] sm:$0xf]
    %v157 = vld [vmem:[%s0 + $0x4] sm:$0xf]
    %v158 = vld [vmem:[%s0 + $0x8] sm:$0xf]
    %v159 = vld [vmem:[%s0 + $0xc] sm:$0xf]
    %v160 = vld [vmem:[%s0 + $0x10] sm:$0xf]
    %v161 = vld [vmem:[%s0 + $0x14] sm:$0xf]
    %v162 = vld [vmem:[%s0 + $0x18] sm:$0xf]
    %v163 = vld [vmem:[%s0 + $0x1c] sm:$0xf]
    %v164 = vld [vmem:[%s0 + $0x20] sm:$0xf]
    %v165 = vld [vmem:[%s0 + $0x24] sm:$0xf]
    %v166 = vld [vmem:[%s0 + $0x28] sm:$0xf]
    %v167 = vld [vmem:[%s0 + $0x2c] sm:$0xf]
    %v168 = vld [vmem:[%s0 + $0x30] sm:$0xf]
    %v169 = vld [vmem:[%s0 + $0x34] sm:$0xf]
    %v170 = vld [vmem:[%s0 + $0x38] sm:$0xf]
    %v171 = vld [vmem:[%s0 + $0x3c] sm:$0xf]
    %v172 = vld [vmem:[%s0 + $0x40] sm:$0xf]
    %v173 = vld [vmem:[%s0 + $0x44] sm:$0xf]
    %v174 = vld [vmem:[%s0 + $0x48] sm:$0xf]
    %v175 = vld [vmem:[%s0 + $0x4c] sm:$0xf]
    %v176 = vld [vmem:[%s0 + $0x50] sm:$0xf]
    %v177 = vld [vmem:[%s0 + $0x54] sm:$0xf]
    %v178 = vld [vmem:[%s0 + $0x58] sm:$0xf]
    %v179 = vld [vmem:[%s0 + $0x5c] sm:$0xf]
    %v180 = vld [vmem:[%s0 + $0x60] sm:$0xf]
    %v181 = vld [vmem:[%s0 + $0x64] sm:$0xf]
    %v182 = vld [vmem:[%s0 + $0x68] sm:$0xf]
    %v183 = vld [vmem:[%s0 + $0x6c] sm:$0xf]
    %v184 = vld [vmem:[%s0 + $0x70] sm:$0xf]
    %v185 = vld [vmem:[%s0 + $0x74] sm:$0xf]
    %v186 = vld [vmem:[%s0 + $0x78] sm:$0xf]
    %v187 = vld [vmem:[%s0 + $0x7c] sm:$0xf]
    %v188 = vld [vmem:[%s0 + $0x80] sm:$0xf]
    %v189 = vld [vmem:[%s0 + $0x84] sm:$0xf]
    %v190 = vld [vmem:[%s0 + $0x88] sm:$0xf]
    %v191 = vld [vmem:[%s0 + $0x8c] sm:$0xf]
    %v192 = vld [vmem:[%s0 + $0x90] sm:$0xf]
    %v193 = vld [vmem:[%s0 + $0x94] sm:$0xf]
    %v194 = vld [vmem:[%s0 + $0x98] sm:$0xf]
    %v195 = vld [vmem:[%s0 + $0x9c] sm:$0xf]
    %v196 = vld [vmem:[%s0 + $0xa0] sm:$0xf]
    %v197 = vld [vmem:[%s0 + $0xa4] sm:$0xf]
    %v198 = vld [vmem:[%s0 + $0xa8] sm:$0xf]
    %v199 = vld [vmem:[%s0 + $0xac] sm:$0xf]
    %v200 = vld [vmem:[%s0 + $0xb0] sm:$0xf]
    %v201 = vld [vmem:[%s0 + $0xb4] sm:$0xf]
    %v202 = vld [vmem:[%s0 + $0xb8] sm:$0xf]
    %v203 = vld [vmem:[%s0 + $0xbc] sm:$0xf]
    %v204 = vld [vmem:[%s0 + $0xc0] sm:$0xf]
    %v205 = vld [vmem:[%s0 + $0xc4] sm:$0xf]
    %v206 = vld [vmem:[%s0 + $0xc8] sm:$0xf]
    %v207 = vld [vmem:[%s0 + $0xcc] sm:$0xf]
    %v208 = vld [vmem:[%s0 + $0xd0] sm:$0xf]
    %v209 = vld [vmem:[%s0 + $0xd4] sm:$0xf]
    %v210 = vld [vmem:[%s0 + $0xd8] sm:$0xf]
    %v211 = vld [vmem:[%s0 + $0xdc] sm:$0xf]
    %v212 = vld [vmem:[%s0 + $0xe0] sm:$0xf]
    %v213 = vld [vmem:[%s0 + $0xe4] sm:$0xf]
    %v214 = vld [vmem:[%s0 + $0xe8] sm:$0xf]
    %v215 = vld [vmem:[%s0 + $0xec] sm:$0xf]
    %v216 = vld [vmem:[%s0 + $0xf0] sm:$0xf]
    %v217 = vld [vmem:[%s0 + $0xf4] sm:$0xf]
    %v218 = vld [vmem:[%s0 + $0xf8] sm:$0xf]
    %v219 = vld [vmem:[%s0 + $0xfc] sm:$0xf]
    %v220 = vld [vmem:[%s1] sm:$0xf]
    %v221 = vld [vmem:[%s1 + $0x4] sm:$0xf]
    %v222 = vld [vmem:[%s1 + $0x8] sm:$0xf]
    %v223 = vld [vmem:[%s1 + $0xc] sm:$0xf]
    %v224 = vld [vmem:[%s1 + $0x10] sm:$0xf]
    %v225 = vld [vmem:[%s1 + $0x14] sm:$0xf]
    %v226 = vld [vmem:[%s1 + $0x18] sm:$0xf]
    %v227 = vld [vmem:[%s1 + $0x1c] sm:$0xf]
    %v228 = vld [vmem:[%s1 + $0x20] sm:$0xf]
    %v229 = vld [vmem:[%s1 + $0x24] sm:$0xf]
    %v230 = vld [vmem:[%s1 + $0x28] sm:$0xf]
    %v231 = vld [vmem:[%s1 + $0x2c] sm:$0xf]
    %v232 = vld [vmem:[%s1 + $0x30] sm:$0xf]
    %v233 = vld [vmem:[%s1 + $0x34] sm:$0xf]
    %v234 = vld [vmem:[%s1 + $0x38] sm:$0xf]
    %v235 = vld [vmem:[%s1 + $0x3c] sm:$0xf]
    %v300 = vunpack.c.l.b16 %v156
    %v301 = vunpack.c.l.b16 %v157
    %v302 = vunpack.c.l.b16 %v158
    %v303 = vunpack.c.l.b16 %v159
    %v304 = vunpack.c.l.b16 %v160
    %v305 = vunpack.c.l.b16 %v161
    %v306 = vunpack.c.l.b16 %v162
    %v307 = vunpack.c.l.b16 %v163
    %v308 = vunpack.c.l.b16 %v164
    %v309 = vunpack.c.l.b16 %v165
    %v310 = vunpack.c.l.b16 %v166
    %v311 = vunpack.c.l.b16 %v167
    %v312 = vunpack.c.l.b16 %v168
    %v313 = vunpack.c.l.b16 %v169
    %v314 = vunpack.c.l.b16 %v170
    %v315 = vunpack.c.l.b16 %v171
    %v316 = vunpack.c.l.b16 %v172
    %v317 = vunpack.c.l.b16 %v173
    %v318 = vunpack.c.l.b16 %v174
    %v319 = vunpack.c.l.b16 %v175
    %v320 = vunpack.c.l.b16 %v176
    %v321 = vunpack.c.l.b16 %v177
    %v322 = vunpack.c.l.b16 %v178
    %v323 = vunpack.c.l.b16 %v179
    %v324 = vunpack.c.l.b16 %v180
    %v325 = vunpack.c.l.b16 %v181
    %v326 = vunpack.c.l.b16 %v182
    %v327 = vunpack.c.l.b16 %v183
    %v328 = vunpack.c.l.b16 %v184
    %v329 = vunpack.c.l.b16 %v185
    %v330 = vunpack.c.l.b16 %v186
    %v331 = vunpack.c.l.b16 %v187
    %v332 = vunpack.c.l.b16 %v188
    %v333 = vunpack.c.l.b16 %v189
    %v334 = vunpack.c.l.b16 %v190
    %v335 = vunpack.c.l.b16 %v191
    %v336 = vunpack.c.l.b16 %v192
    %v337 = vunpack.c.l.b16 %v193
    %v338 = vunpack.c.l.b16 %v194
    %v339 = vunpack.c.l.b16 %v195
    %v340 = vunpack.c.l.b16 %v196
    %v341 = vunpack.c.l.b16 %v197
    %v342 = vunpack.c.l.b16 %v198
    %v343 = vunpack.c.l.b16 %v199
    %v344 = vunpack.c.l.b16 %v200
    %v345 = vunpack.c.l.b16 %v201
    %v346 = vunpack.c.l.b16 %v202
    %v347 = vunpack.c.l.b16 %v203
    %v348 = vunpack.c.l.b16 %v204
    %v349 = vunpack.c.l.b16 %v205
    %v350 = vunpack.c.l.b16 %v206
    %v351 = vunpack.c.l.b16 %v207
    %v352 = vunpack.c.l.b16 %v208
    %v353 = vunpack.c.l.b16 %v209
    %v354 = vunpack.c.l.b16 %v210
    %v355 = vunpack.c.l.b16 %v211
    %v356 = vunpack.c.l.b16 %v212
    %v357 = vunpack.c.l.b16 %v213
    %v358 = vunpack.c.l.b16 %v214
    %v359 = vunpack.c.l.b16 %v215
    %v360 = vunpack.c.l.b16 %v216
    %v361 = vunpack.c.l.b16 %v217
    %v362 = vunpack.c.l.b16 %v218
    %v363 = vunpack.c.l.b16 %v219
    %v364 = vpack.c.b16 %v301, %v300
    %v365 = vpack.c.b16 %v303, %v302
    %v366 = vpack.c.b16 %v305, %v304
    %v367 = vpack.c.b16 %v307, %v306
    %v368 = vpack.c.b16 %v309, %v308
    %v369 = vpack.c.b16 %v311, %v310
    %v370 = vpack.c.b16 %v313, %v312
    %v371 = vpack.c.b16 %v315, %v314
    %v372 = vpack.c.b16 %v317, %v316
    %v373 = vpack.c.b16 %v319, %v318
    %v374 = vpack.c.b16 %v321, %v320
    %v375 = vpack.c.b16 %v323, %v322
    %v376 = vpack.c.b16 %v325, %v324
    %v377 = vpack.c.b16 %v327, %v326
    %v378 = vpack.c.b16 %v329, %v328
    %v379 = vpack.c.b16 %v331, %v330
    %v380 = vpack.c.b16 %v333, %v332
    %v381 = vpack.c.b16 %v335, %v334
    %v382 = vpack.c.b16 %v337, %v336
    %v383 = vpack.c.b16 %v339, %v338
    %v384 = vpack.c.b16 %v341, %v340
    %v385 = vpack.c.b16 %v343, %v342
    %v386 = vpack.c.b16 %v345, %v344
    %v387 = vpack.c.b16 %v347, %v346
    %v388 = vpack.c.b16 %v349, %v348
    %v389 = vpack.c.b16 %v351, %v350
    %v390 = vpack.c.b16 %v353, %v352
    %v391 = vpack.c.b16 %v355, %v354
    %v392 = vpack.c.b16 %v357, %v356
    %v393 = vpack.c.b16 %v359, %v358
    %v394 = vpack.c.b16 %v361, %v360
    %v395 = vpack.c.b16 %v363, %v362
    %v444 = vunpack.c.l.b16 %v220
    %v445 = vunpack.c.l.b16 %v221
    %v446 = vunpack.c.l.b16 %v222
    %v447 = vunpack.c.l.b16 %v223
    %v448 = vunpack.c.l.b16 %v224
    %v449 = vunpack.c.l.b16 %v225
    %v450 = vunpack.c.l.b16 %v226
    %v451 = vunpack.c.l.b16 %v227
    %v452 = vunpack.c.l.b16 %v228
    %v453 = vunpack.c.l.b16 %v229
    %v454 = vunpack.c.l.b16 %v230
    %v455 = vunpack.c.l.b16 %v231
    %v456 = vunpack.c.l.b16 %v232
    %v457 = vunpack.c.l.b16 %v233
    %v458 = vunpack.c.l.b16 %v234
    %v459 = vunpack.c.l.b16 %v235
    %v460 = vpack.c.b16 %v445, %v444
    %v461 = vpack.c.b16 %v447, %v446
    %v462 = vpack.c.b16 %v449, %v448
    %v463 = vpack.c.b16 %v451, %v450
    %v464 = vpack.c.b16 %v453, %v452
    %v465 = vpack.c.b16 %v455, %v454
    %v466 = vpack.c.b16 %v457, %v456
    %v467 = vpack.c.b16 %v459, %v458
    %476 = vmatprep.subr.bf16.mxu0 0
    %477 = vmatpush1.bf16.msra.mxu0 %v460
    %478 = vmatprep.subr.bf16.mxu0 0
    %479 = vmatpush1.bf16.msra.mxu0 %v461
    %480 = vmatprep.subr.bf16.mxu0 0
    %481 = vmatpush1.bf16.msra.mxu0 %v462
    %482 = vmatprep.subr.bf16.mxu0 0
    %483 = vmatpush1.bf16.msra.mxu0 %v463
    %484 = vmatprep.subr.bf16.mxu0 0
    %485 = vmatpush1.bf16.msra.mxu0 %v464
    %486 = vmatprep.subr.bf16.mxu0 0
    %487 = vmatpush1.bf16.msra.mxu0 %v465
    %488 = vmatprep.subr.bf16.mxu0 0
    %489 = vmatpush1.bf16.msra.mxu0 %v466
    %490 = vmatprep.subr.bf16.mxu0 0
    %491 = vmatpush1.bf16.msra.mxu0 %v467
    %492 = vmatprep.subr.bf16.mxu0 0
    %493 = vmatpush1.bf16.msra.mxu0 0
    %494 = vmatprep.subr.bf16.mxu0 0
    %495 = vmatpush1.bf16.msra.mxu0 0
    %496 = vmatprep.subr.bf16.mxu0 0
    %497 = vmatpush1.bf16.msra.mxu0 0
    %498 = vmatprep.subr.bf16.mxu0 0
    %499 = vmatpush1.bf16.msra.mxu0 0
    %500 = vmatprep.subr.bf16.mxu0 0
    %501 = vmatpush1.bf16.msra.mxu0 0
    %502 = vmatprep.subr.bf16.mxu0 0
    %503 = vmatpush1.bf16.msra.mxu0 0
    %504 = vmatprep.subr.bf16.mxu0 0
    %505 = vmatpush1.bf16.msra.mxu0 0
    %506 = vmatprep.subr.bf16.mxu0 0
    %507 = vmatpush1.bf16.msra.mxu0 0
    %508 = vmatprep.mubr.bf16.mxu0 0
    %509 = vmatmul.mubr.bf16.gmra.mrb[0].mxu0 %v364
    %v510 = vpop.f32.mrb[0].mxu0
    %v511 = vadd.f32 0.0, %v510
    %v512 = vpop.f32.mrb[0].mxu0
    %v513 = vpop.f32.mrb[0].mxu0
    %v514 = vadd.f32 0.0, %v513
    %v515 = vpop.f32.mrb[0].mxu0
    %516 = vmatprep.mubr.bf16.mxu0 0
    %517 = vmatmul.mubr.bf16.gmra.mrb[0].mxu0 %v365
    %v518 = vpop.f32.mrb[0].mxu0
    %v519 = vadd.f32 0.0, %v518
    %v520 = vpop.f32.mrb[0].mxu0
    %v521 = vpop.f32.mrb[0].mxu0
    %v522 = vadd.f32 0.0, %v521
    %v523 = vpop.f32.mrb[0].mxu0
    %524 = vmatprep.mubr.bf16.mxu0 0
    %525 = vmatmul.mubr.bf16.gmra.mrb[0].mxu0 %v366
    %v526 = vpop.f32.mrb[0].mxu0
    %v527 = vadd.f32 0.0, %v526
    %v528 = vpop.f32.mrb[0].mxu0
    %v529 = vpop.f32.mrb[0].mxu0
    %v530 = vadd.f32 0.0, %v529
    %v531 = vpop.f32.mrb[0].mxu0
    %532 = vmatprep.mubr.bf16.mxu0 0
    %533 = vmatmul.mubr.bf16.gmra.mrb[0].mxu0 %v367
    %v534 = vpop.f32.mrb[0].mxu0
    %v535 = vadd.f32 0.0, %v534
    %v536 = vpop.f32.mrb[0].mxu0
    %v537 = vpop.f32.mrb[0].mxu0
    %v538 = vadd.f32 0.0, %v537
    %v539 = vpop.f32.mrb[0].mxu0
    %540 = vmatprep.mubr.bf16.mxu0 0
    %541 = vmatmul.mubr.bf16.gmra.mrb[0].mxu0 %v368
    %v542 = vpop.f32.mrb[0].mxu0
    %v543 = vadd.f32 0.0, %v542
    %v544 = vpop.f32.mrb[0].mxu0
    %v545 = vpop.f32.mrb[0].mxu0
    %v546 = vadd.f32 0.0, %v545
    %v547 = vpop.f32.mrb[0].mxu0
    %548 = vmatprep.mubr.bf16.mxu0 0
    %549 = vmatmul.mubr.bf16.gmra.mrb[0].mxu0 %v369
    %v550 = vpop.f32.mrb[0].mxu0
    %v551 = vadd.f32 0.0, %v550
    %v552 = vpop.f32.mrb[0].mxu0
    %v553 = vpop.f32.mrb[0].mxu0
    %v554 = vadd.f32 0.0, %v553
    %v555 = vpop.f32.mrb[0].mxu0
    %556 = vmatprep.mubr.bf16.mxu0 0
    %557 = vmatmul.mubr.bf16.gmra.mrb[0].mxu0 %v370
    %v558 = vpop.f32.mrb[0].mxu0
    %v559 = vadd.f32 0.0, %v558
    %v560 = vpop.f32.mrb[0].mxu0
    %v561 = vpop.f32.mrb[0].mxu0
    %v562 = vadd.f32 0.0, %v561
    %v563 = vpop.f32.mrb[0].mxu0
    %564 = vmatprep.mubr.bf16.mxu0 0
    %565 = vmatmul.mubr.bf16.gmra.mrb[0].mxu0 %v371
    %v566 = vpop.f32.mrb[0].mxu0
    %v567 = vadd.f32 0.0, %v566
    %v568 = vpop.f32.mrb[0].mxu0
    %v569 = vpop.f32.mrb[0].mxu0
    %v570 = vadd.f32 0.0, %v569
    %v571 = vpop.f32.mrb[0].mxu0
    %572 = vmatprep.mubr.bf16.mxu0 0
    %573 = vmatmul.mubr.bf16.gmra.mrb[0].mxu0 %v372
    %v574 = vpop.f32.mrb[0].mxu0
    %v575 = vadd.f32 0.0, %v574
    %v576 = vpop.f32.mrb[0].mxu0
    %v577 = vpop.f32.mrb[0].mxu0
    %v578 = vadd.f32 0.0, %v577
    %v579 = vpop.f32.mrb[0].mxu0
    %580 = vmatprep.mubr.bf16.mxu0 0
    %581 = vmatmul.mubr.bf16.gmra.mrb[0].mxu0 %v373
    %v582 = vpop.f32.mrb[0].mxu0
    %v583 = vadd.f32 0.0, %v582
    %v584 = vpop.f32.mrb[0].mxu0
    %v585 = vpop.f32.mrb[0].mxu0
    %v586 = vadd.f32 0.0, %v585
    %v587 = vpop.f32.mrb[0].mxu0
    %588 = vmatprep.mubr.bf16.mxu0 0
    %589 = vmatmul.mubr.bf16.gmra.mrb[0].mxu0 %v374
    %v590 = vpop.f32.mrb[0].mxu0
    %v591 = vadd.f32 0.0, %v590
    %v592 = vpop.f32.mrb[0].mxu0
    %v593 = vpop.f32.mrb[0].mxu0
    %v594 = vadd.f32 0.0, %v593
    %v595 = vpop.f32.mrb[0].mxu0
    %596 = vmatprep.mubr.bf16.mxu0 0
    %597 = vmatmul.mubr.bf16.gmra.mrb[0].mxu0 %v375
    %v598 = vpop.f32.mrb[0].mxu0
    %v599 = vadd.f32 0.0, %v598
    %v600 = vpop.f32.mrb[0].mxu0
    %v601 = vpop.f32.mrb[0].mxu0
    %v602 = vadd.f32 0.0, %v601
    %v603 = vpop.f32.mrb[0].mxu0
    %604 = vmatprep.mubr.bf16.mxu0 0
    %605 = vmatmul.mubr.bf16.gmra.mrb[0].mxu0 %v376
    %v606 = vpop.f32.mrb[0].mxu0
    %v607 = vadd.f32 0.0, %v606
    %v608 = vpop.f32.mrb[0].mxu0
    %v609 = vpop.f32.mrb[0].mxu0
    %v610 = vadd.f32 0.0, %v609
    %v611 = vpop.f32.mrb[0].mxu0
    %612 = vmatprep.mubr.bf16.mxu0 0
    %613 = vmatmul.mubr.bf16.gmra.mrb[0].mxu0 %v377
    %v614 = vpop.f32.mrb[0].mxu0
    %v615 = vadd.f32 0.0, %v614
    %v616 = vpop.f32.mrb[0].mxu0
    %v617 = vpop.f32.mrb[0].mxu0
    %v618 = vadd.f32 0.0, %v617
    %v619 = vpop.f32.mrb[0].mxu0
    %620 = vmatprep.mubr.bf16.mxu0 0
    %621 = vmatmul.mubr.bf16.gmra.mrb[0].mxu0 %v378
    %v622 = vpop.f32.mrb[0].mxu0
    %v623 = vadd.f32 0.0, %v622
    %v624 = vpop.f32.mrb[0].mxu0
    %v625 = vpop.f32.mrb[0].mxu0
    %v626 = vadd.f32 0.0, %v625
    %v627 = vpop.f32.mrb[0].mxu0
    %628 = vmatprep.mubr.bf16.mxu0 0
    %629 = vmatmul.mubr.bf16.gmra.mrb[0].mxu0 %v379
    %v630 = vpop.f32.mrb[0].mxu0
    %v631 = vadd.f32 0.0, %v630
    %v632 = vpop.f32.mrb[0].mxu0
    %v633 = vpop.f32.mrb[0].mxu0
    %v634 = vadd.f32 0.0, %v633
    %v635 = vpop.f32.mrb[0].mxu0
    %636 = vmatprep.mubr.bf16.mxu0 0
    %637 = vmatmul.mubr.bf16.gmra.mrb[0].mxu0 %v380
    %v638 = vpop.f32.mrb[0].mxu0
    %v639 = vadd.f32 0.0, %v638
    %v640 = vpop.f32.mrb[0].mxu0
    %v641 = vpop.f32.mrb[0].mxu0
    %v642 = vadd.f32 0.0, %v641
    %v643 = vpop.f32.mrb[0].mxu0
    %644 = vmatprep.mubr.bf16.mxu0 0
    %645 = vmatmul.mubr.bf16.gmra.mrb[0].mxu0 %v381
    %v646 = vpop.f32.mrb[0].mxu0
    %v647 = vadd.f32 0.0, %v646
    %v648 = vpop.f32.mrb[0].mxu0
    %v649 = vpop.f32.mrb[0].mxu0
    %v650 = vadd.f32 0.0, %v649
    %v651 = vpop.f32.mrb[0].mxu0
    %652 = vmatprep.mubr.bf16.mxu0 0
    %653 = vmatmul.mubr.bf16.gmra.mrb[0].mxu0 %v382
    %v654 = vpop.f32.mrb[0].mxu0
    %v655 = vadd.f32 0.0, %v654
    %v656 = vpop.f32.mrb[0].mxu0
    %v657 = vpop.f32.mrb[0].mxu0
    %v658 = vadd.f32 0.0, %v657
    %v659 = vpop.f32.mrb[0].mxu0
    %660 = vmatprep.mubr.bf16.mxu0 0
    %661 = vmatmul.mubr.bf16.gmra.mrb[0].mxu0 %v383
    %v662 = vpop.f32.mrb[0].mxu0
    %v663 = vadd.f32 0.0, %v662
    %v664 = vpop.f32.mrb[0].mxu0
    %v665 = vpop.f32.mrb[0].mxu0
    %v666 = vadd.f32 0.0, %v665
    %v667 = vpop.f32.mrb[0].mxu0
    %668 = vmatprep.mubr.bf16.mxu0 0
    %669 = vmatmul.mubr.bf16.gmra.mrb[0].mxu0 %v384
    %v670 = vpop.f32.mrb[0].mxu0
    %v671 = vadd.f32 0.0, %v670
    %v672 = vpop.f32.mrb[0].mxu0
    %v673 = vpop.f32.mrb[0].mxu0
    %v674 = vadd.f32 0.0, %v673
    %v675 = vpop.f32.mrb[0].mxu0
    %676 = vmatprep.mubr.bf16.mxu0 0
    %677 = vmatmul.mubr.bf16.gmra.mrb[0].mxu0 %v385
    %v678 = vpop.f32.mrb[0].mxu0
    %v679 = vadd.f32 0.0, %v678
    %v680 = vpop.f32.mrb[0].mxu0
    %v681 = vpop.f32.mrb[0].mxu0
    %v682 = vadd.f32 0.0, %v681
    %v683 = vpop.f32.mrb[0].mxu0
    %684 = vmatprep.mubr.bf16.mxu0 0
    %685 = vmatmul.mubr.bf16.gmra.mrb[0].mxu0 %v386
    %v686 = vpop.f32.mrb[0].mxu0
    %v687 = vadd.f32 0.0, %v686
    %v688 = vpop.f32.mrb[0].mxu0
    %v689 = vpop.f32.mrb[0].mxu0
    %v690 = vadd.f32 0.0, %v689
    %v691 = vpop.f32.mrb[0].mxu0
    %692 = vmatprep.mubr.bf16.mxu0 0
    %693 = vmatmul.mubr.bf16.gmra.mrb[0].mxu0 %v387
    %v694 = vpop.f32.mrb[0].mxu0
    %v695 = vadd.f32 0.0, %v694
    %v696 = vpop.f32.mrb[0].mxu0
    %v697 = vpop.f32.mrb[0].mxu0
    %v698 = vadd.f32 0.0, %v697
    %v699 = vpop.f32.mrb[0].mxu0
    %700 = vmatprep.mubr.bf16.mxu0 0
    %701 = vmatmul.mubr.bf16.gmra.mrb[0].mxu0 %v388
    %v702 = vpop.f32.mrb[0].mxu0
    %v703 = vadd.f32 0.0, %v702
    %v704 = vpop.f32.mrb[0].mxu0
    %v705 = vpop.f32.mrb[0].mxu0
    %v706 = vadd.f32 0.0, %v705
    %v707 = vpop.f32.mrb[0].mxu0
    %708 = vmatprep.mubr.bf16.mxu0 0
    %709 = vmatmul.mubr.bf16.gmra.mrb[0].mxu0 %v389
    %v710 = vpop.f32.mrb[0].mxu0
    %v711 = vadd.f32 0.0, %v710
    %v712 = vpop.f32.mrb[0].mxu0
    %v713 = vpop.f32.mrb[0].mxu0
    %v714 = vadd.f32 0.0, %v713
    %v715 = vpop.f32.mrb[0].mxu0
    %716 = vmatprep.mubr.bf16.mxu0 0
    %717 = vmatmul.mubr.bf16.gmra.mrb[0].mxu0 %v390
    %v718 = vpop.f32.mrb[0].mxu0
    %v719 = vadd.f32 0.0, %v718
    %v720 = vpop.f32.mrb[0].mxu0
    %v721 = vpop.f32.mrb[0].mxu0
    %v722 = vadd.f32 0.0, %v721
    %v723 = vpop.f32.mrb[0].mxu0
    %724 = vmatprep.mubr.bf16.mxu0 0
    %725 = vmatmul.mubr.bf16.gmra.mrb[0].mxu0 %v391
    %v726 = vpop.f32.mrb[0].mxu0
    %v727 = vadd.f32 0.0, %v726
    %v728 = vpop.f32.mrb[0].mxu0
    %v729 = vpop.f32.mrb[0].mxu0
    %v730 = vadd.f32 0.0, %v729
    %v731 = vpop.f32.mrb[0].mxu0
    %732 = vmatprep.mubr.bf16.mxu0 0
    %733 = vmatmul.mubr.bf16.gmra.mrb[0].mxu0 %v392
    %v734 = vpop.f32.mrb[0].mxu0
    %v735 = vadd.f32 0.0, %v734
    %v736 = vpop.f32.mrb[0].mxu0
    %v737 = vpop.f32.mrb[0].mxu0
    %v738 = vadd.f32 0.0, %v737
    %v739 = vpop.f32.mrb[0].mxu0
    %740 = vmatprep.mubr.bf16.mxu0 0
    %741 = vmatmul.mubr.bf16.gmra.mrb[0].mxu0 %v393
    %v742 = vpop.f32.mrb[0].mxu0
    %v743 = vadd.f32 0.0, %v742
    %v744 = vpop.f32.mrb[0].mxu0
    %v745 = vpop.f32.mrb[0].mxu0
    %v746 = vadd.f32 0.0, %v745
    %v747 = vpop.f32.mrb[0].mxu0
    %748 = vmatprep.mubr.bf16.mxu0 0
    %749 = vmatmul.mubr.bf16.gmra.mrb[0].mxu0 %v394
    %v750 = vpop.f32.mrb[0].mxu0
    %v751 = vadd.f32 0.0, %v750
    %v752 = vpop.f32.mrb[0].mxu0
    %v753 = vpop.f32.mrb[0].mxu0
    %v754 = vadd.f32 0.0, %v753
    %v755 = vpop.f32.mrb[0].mxu0
    %756 = vmatprep.mubr.bf16.mxu0 0
    %757 = vmatmul.mubr.bf16.gmra.mrb[0].mxu0 %v395
    %v758 = vpop.f32.mrb[0].mxu0
    %v759 = vadd.f32 0.0, %v758
    %v760 = vpop.f32.mrb[0].mxu0
    %v761 = vpop.f32.mrb[0].mxu0
    %v762 = vadd.f32 0.0, %v761
    %v763 = vpop.f32.mrb[0].mxu0
    %764 = vdwg.mxu0
    %v765 = vadd.f32 %v92, %v511
    %v766 = vadd.f32 %v93, %v514
    %v767 = vadd.f32 %v94, %v519
    %v768 = vadd.f32 %v95, %v522
    %v769 = vadd.f32 %v96, %v527
    %v770 = vadd.f32 %v97, %v530
    %v771 = vadd.f32 %v98, %v535
    %v772 = vadd.f32 %v99, %v538
    %v773 = vadd.f32 %v100, %v543
    %v774 = vadd.f32 %v101, %v546
    %v775 = vadd.f32 %v102, %v551
    %v776 = vadd.f32 %v103, %v554
    %v777 = vadd.f32 %v104, %v559
    %v778 = vadd.f32 %v105, %v562
    %v779 = vadd.f32 %v106, %v567
    %v780 = vadd.f32 %v107, %v570
    %v781 = vadd.f32 %v108, %v575
    %v782 = vadd.f32 %v109, %v578
    %v783 = vadd.f32 %v110, %v583
    %v784 = vadd.f32 %v111, %v586
    %v785 = vadd.f32 %v112, %v591
    %v786 = vadd.f32 %v113, %v594
    %v787 = vadd.f32 %v114, %v599
    %v788 = vadd.f32 %v115, %v602
    %v789 = vadd.f32 %v116, %v607
    %v790 = vadd.f32 %v117, %v610
    %v791 = vadd.f32 %v118, %v615
    %v792 = vadd.f32 %v119, %v618
    %v793 = vadd.f32 %v120, %v623
    %v794 = vadd.f32 %v121, %v626
    %v795 = vadd.f32 %v122, %v631
    %v796 = vadd.f32 %v123, %v634
    %v797 = vadd.f32 %v124, %v639
    %v798 = vadd.f32 %v125, %v642
    %v799 = vadd.f32 %v126, %v647
    %v800 = vadd.f32 %v127, %v650
    %v801 = vadd.f32 %v128, %v655
    %v802 = vadd.f32 %v129, %v658
    %v803 = vadd.f32 %v130, %v663
    %v804 = vadd.f32 %v131, %v666
    %v805 = vadd.f32 %v132, %v671
    %v806 = vadd.f32 %v133, %v674
    %v807 = vadd.f32 %v134, %v679
    %v808 = vadd.f32 %v135, %v682
    %v809 = vadd.f32 %v136, %v687
    %v810 = vadd.f32 %v137, %v690
    %v811 = vadd.f32 %v138, %v695
    %v812 = vadd.f32 %v139, %v698
    %v813 = vadd.f32 %v140, %v703
    %v814 = vadd.f32 %v141, %v706
    %v815 = vadd.f32 %v142, %v711
    %v816 = vadd.f32 %v143, %v714
    %v817 = vadd.f32 %v144, %v719
    %v818 = vadd.f32 %v145, %v722
    %v819 = vadd.f32 %v146, %v727
    %v820 = vadd.f32 %v147, %v730
    %v821 = vadd.f32 %v148, %v735
    %v822 = vadd.f32 %v149, %v738
    %v823 = vadd.f32 %v150, %v743
    %v824 = vadd.f32 %v151, %v746
    %v825 = vadd.f32 %v152, %v751
    %v826 = vadd.f32 %v153, %v754
    %v827 = vadd.f32 %v154, %v759
    %v828 = vadd.f32 %v155, %v762
    %829 = vst [vmem:[#allocation2] sm:$0xff] %v765
    %830 = vst [vmem:[#allocation2 + $0x8] sm:$0xff] %v766
    %831 = vst [vmem:[#allocation2 + $0x10] sm:$0xff] %v767
    %832 = vst [vmem:[#allocation2 + $0x18] sm:$0xff] %v768
    %833 = vst [vmem:[#allocation2 + $0x20] sm:$0xff] %v769
    %834 = vst [vmem:[#allocation2 + $0x28] sm:$0xff] %v770
    %835 = vst [vmem:[#allocation2 + $0x30] sm:$0xff] %v771
    %836 = vst [vmem:[#allocation2 + $0x38] sm:$0xff] %v772
    %837 = vst [vmem:[#allocation2 + $0x40] sm:$0xff] %v773
    %838 = vst [vmem:[#allocation2 + $0x48] sm:$0xff] %v774
    %839 = vst [vmem:[#allocation2 + $0x50] sm:$0xff] %v775
    %840 = vst [vmem:[#allocation2 + $0x58] sm:$0xff] %v776
    %841 = vst [vmem:[#allocation2 + $0x60] sm:$0xff] %v777
    %842 = vst [vmem:[#allocation2 + $0x68] sm:$0xff] %v778
    %843 = vst [vmem:[#allocation2 + $0x70] sm:$0xff] %v779
    %844 = vst [vmem:[#allocation2 + $0x78] sm:$0xff] %v780
    %845 = vst [vmem:[#allocation2 + $0x80] sm:$0xff] %v781
    %846 = vst [vmem:[#allocation2 + $0x88] sm:$0xff] %v782
    %847 = vst [vmem:[#allocation2 + $0x90] sm:$0xff] %v783
    %848 = vst [vmem:[#allocation2 + $0x98] sm:$0xff] %v784
    %849 = vst [vmem:[#allocation2 + $0xa0] sm:$0xff] %v785
    %850 = vst [vmem:[#allocation2 + $0xa8] sm:$0xff] %v786
    %851 = vst [vmem:[#allocation2 + $0xb0] sm:$0xff] %v787
    %852 = vst [vmem:[#allocation2 + $0xb8] sm:$0xff] %v788
    %853 = vst [vmem:[#allocation2 + $0xc0] sm:$0xff] %v789
    %854 = vst [vmem:[#allocation2 + $0xc8] sm:$0xff] %v790
    %855 = vst [vmem:[#allocation2 + $0xd0] sm:$0xff] %v791
    %856 = vst [vmem:[#allocation2 + $0xd8] sm:$0xff] %v792
    %857 = vst [vmem:[#allocation2 + $0xe0] sm:$0xff] %v793
    %858 = vst [vmem:[#allocation2 + $0xe8] sm:$0xff] %v794
    %859 = vst [vmem:[#allocation2 + $0xf0] sm:$0xff] %v795
    %860 = vst [vmem:[#allocation2 + $0xf8] sm:$0xff] %v796
    %861 = vst [vmem:[#allocation2 + $0x100] sm:$0xff] %v797
    %862 = vst [vmem:[#allocation2 + $0x108] sm:$0xff] %v798
    %863 = vst [vmem:[#allocation2 + $0x110] sm:$0xff] %v799
    %864 = vst [vmem:[#allocation2 + $0x118] sm:$0xff] %v800
    %865 = vst [vmem:[#allocation2 + $0x120] sm:$0xff] %v801
    %866 = vst [vmem:[#allocation2 + $0x128] sm:$0xff] %v802
    %867 = vst [vmem:[#allocation2 + $0x130] sm:$0xff] %v803
    %868 = vst [vmem:[#allocation2 + $0x138] sm:$0xff] %v804
    %869 = vst [vmem:[#allocation2 + $0x140] sm:$0xff] %v805
    %870 = vst [vmem:[#allocation2 + $0x148] sm:$0xff] %v806
    %871 = vst [vmem:[#allocation2 + $0x150] sm:$0xff] %v807
    %872 = vst [vmem:[#allocation2 + $0x158] sm:$0xff] %v808
    %873 = vst [vmem:[#allocation2 + $0x160] sm:$0xff] %v809
    %874 = vst [vmem:[#allocation2 + $0x168] sm:$0xff] %v810
    %875 = vst [vmem:[#allocation2 + $0x170] sm:$0xff] %v811
    %876 = vst [vmem:[#allocation2 + $0x178] sm:$0xff] %v812
    %877 = vst [vmem:[#allocation2 + $0x180] sm:$0xff] %v813
    %878 = vst [vmem:[#allocation2 + $0x188] sm:$0xff] %v814
    %879 = vst [vmem:[#allocation2 + $0x190] sm:$0xff] %v815
    %880 = vst [vmem:[#allocation2 + $0x198] sm:$0xff] %v816
    %881 = vst [vmem:[#allocation2 + $0x1a0] sm:$0xff] %v817
    %882 = vst [vmem:[#allocation2 + $0x1a8] sm:$0xff] %v818
    %883 = vst [vmem:[#allocation2 + $0x1b0] sm:$0xff] %v819
    %884 = vst [vmem:[#allocation2 + $0x1b8] sm:$0xff] %v820
    %885 = vst [vmem:[#allocation2 + $0x1c0] sm:$0xff] %v821
    %886 = vst [vmem:[#allocation2 + $0x1c8] sm:$0xff] %v822
    %887 = vst [vmem:[#allocation2 + $0x1d0] sm:$0xff] %v823
    %888 = vst [vmem:[#allocation2 + $0x1d8] sm:$0xff] %v824
    %889 = vst [vmem:[#allocation2 + $0x1e0] sm:$0xff] %v825
    %890 = vst [vmem:[#allocation2 + $0x1e8] sm:$0xff] %v826
    %891 = vst [vmem:[#allocation2 + $0x1f0] sm:$0xff] %v827
    %892 = vst [vmem:[#allocation2 + $0x1f8] sm:$0xff] %v828
    // Predicated region
    $region22: #{_lambda_.8} parent=1 // pred_check
      %p893 = pneg %p18
    $region23: #{_lambda_.8} parent=1 // pred_check_branch
      %895 = sbr.rel (%p893) target = $region25
    $region24: #{_lambda_.8} parent=1 // pred_region
      %v896 = vld [vmem:[#allocation2] sm:$0xff]
      %v897 = vld [vmem:[#allocation2 + $0x8] sm:$0xff]
      %v898 = vld [vmem:[#allocation2 + $0x10] sm:$0xff]
      %v899 = vld [vmem:[#allocation2 + $0x18] sm:$0xff]
      %v900 = vld [vmem:[#allocation2 + $0x20] sm:$0xff]
      %v901 = vld [vmem:[#allocation2 + $0x28] sm:$0xff]
      %v902 = vld [vmem:[#allocation2 + $0x30] sm:$0xff]
      %v903 = vld [vmem:[#allocation2 + $0x38] sm:$0xff]
      %v904 = vld [vmem:[#allocation2 + $0x40] sm:$0xff]
      %v905 = vld [vmem:[#allocation2 + $0x48] sm:$0xff]
      %v906 = vld [vmem:[#allocation2 + $0x50] sm:$0xff]
      %v907 = vld [vmem:[#allocation2 + $0x58] sm:$0xff]
      %v908 = vld [vmem:[#allocation2 + $0x60] sm:$0xff]
      %v909 = vld [vmem:[#allocation2 + $0x68] sm:$0xff]
      %v910 = vld [vmem:[#allocation2 + $0x70] sm:$0xff]
      %v911 = vld [vmem:[#allocation2 + $0x78] sm:$0xff]
      %v912 = vld [vmem:[#allocation2 + $0x80] sm:$0xff]
      %v913 = vld [vmem:[#allocation2 + $0x88] sm:$0xff]
      %v914 = vld [vmem:[#allocation2 + $0x90] sm:$0xff]
      %v915 = vld [vmem:[#allocation2 + $0x98] sm:$0xff]
      %v916 = vld [vmem:[#allocation2 + $0xa0] sm:$0xff]
      %v917 = vld [vmem:[#allocation2 + $0xa8] sm:$0xff]
      %v918 = vld [vmem:[#allocation2 + $0xb0] sm:$0xff]
      %v919 = vld [vmem:[#allocation2 + $0xb8] sm:$0xff]
      %v920 = vld [vmem:[#allocation2 + $0xc0] sm:$0xff]
      %v921 = vld [vmem:[#allocation2 + $0xc8] sm:$0xff]
      %v922 = vld [vmem:[#allocation2 + $0xd0] sm:$0xff]
      %v923 = vld [vmem:[#allocation2 + $0xd8] sm:$0xff]
      %v924 = vld [vmem:[#allocation2 + $0xe0] sm:$0xff]
      %v925 = vld [vmem:[#allocation2 + $0xe8] sm:$0xff]
      %v926 = vld [vmem:[#allocation2 + $0xf0] sm:$0xff]
      %v927 = vld [vmem:[#allocation2 + $0xf8] sm:$0xff]
      %v928 = vld [vmem:[#allocation2 + $0x100] sm:$0xff]
      %v929 = vld [vmem:[#allocation2 + $0x108] sm:$0xff]
      %v930 = vld [vmem:[#allocation2 + $0x110] sm:$0xff]
      %v931 = vld [vmem:[#allocation2 + $0x118] sm:$0xff]
      %v932 = vld [vmem:[#allocation2 + $0x120] sm:$0xff]
      %v933 = vld [vmem:[#allocation2 + $0x128] sm:$0xff]
      %v934 = vld [vmem:[#allocation2 + $0x130] sm:$0xff]
      %v935 = vld [vmem:[#allocation2 + $0x138] sm:$0xff]
      %v936 = vld [vmem:[#allocation2 + $0x140] sm:$0xff]
      %v937 = vld [vmem:[#allocation2 + $0x148] sm:$0xff]
      %v938 = vld [vmem:[#allocation2 + $0x150] sm:$0xff]
      %v939 = vld [vmem:[#allocation2 + $0x158] sm:$0xff]
      %v940 = vld [vmem:[#allocation2 + $0x160] sm:$0xff]
      %v941 = vld [vmem:[#allocation2 + $0x168] sm:$0xff]
      %v942 = vld [vmem:[#allocation2 + $0x170] sm:$0xff]
      %v943 = vld [vmem:[#allocation2 + $0x178] sm:$0xff]
      %v944 = vld [vmem:[#allocation2 + $0x180] sm:$0xff]
      %v945 = vld [vmem:[#allocation2 + $0x188] sm:$0xff]
      %v946 = vld [vmem:[#allocation2 + $0x190] sm:$0xff]
      %v947 = vld [vmem:[#allocation2 + $0x198] sm:$0xff]
      %v948 = vld [vmem:[#allocation2 + $0x1a0] sm:$0xff]
      %v949 = vld [vmem:[#allocation2 + $0x1a8] sm:$0xff]
      %v950 = vld [vmem:[#allocation2 + $0x1b0] sm:$0xff]
      %v951 = vld [vmem:[#allocation2 + $0x1b8] sm:$0xff]
      %v952 = vld [vmem:[#allocation2 + $0x1c0] sm:$0xff]
      %v953 = vld [vmem:[#allocation2 + $0x1c8] sm:$0xff]
      %v954 = vld [vmem:[#allocation2 + $0x1d0] sm:$0xff]
      %v955 = vld [vmem:[#allocation2 + $0x1d8] sm:$0xff]
      %v956 = vld [vmem:[#allocation2 + $0x1e0] sm:$0xff]
      %v957 = vld [vmem:[#allocation2 + $0x1e8] sm:$0xff]
      %v958 = vld [vmem:[#allocation2 + $0x1f0] sm:$0xff]
      %v959 = vld [vmem:[#allocation2 + $0x1f8] sm:$0xff]
      %v960 = vld [vmem:[%s2] sm:$0x1]
      %v962 = vlaneseq
      %v963 = vshrl.u32 %v962, 7
      %v964 = vsub.s32 0, %v963
      %v965 = vrot.slane %v960, %v964
      %v967 = vadd.f32 %v896, %v965
      %v968 = vadd.f32 %v897, %v965
      %v969 = vadd.f32 %v898, %v965
      %v970 = vadd.f32 %v899, %v965
      %v971 = vadd.f32 %v900, %v965
      %v972 = vadd.f32 %v901, %v965
      %v973 = vadd.f32 %v902, %v965
      %v974 = vadd.f32 %v903, %v965
      %v975 = vadd.f32 %v904, %v965
      %v976 = vadd.f32 %v905, %v965
      %v977 = vadd.f32 %v906, %v965
      %v978 = vadd.f32 %v907, %v965
      %v979 = vadd.f32 %v908, %v965
      %v980 = vadd.f32 %v909, %v965
      %v981 = vadd.f32 %v910, %v965
      %v982 = vadd.f32 %v911, %v965
      %v983 = vadd.f32 %v912, %v965
      %v984 = vadd.f32 %v913, %v965
      %v985 = vadd.f32 %v914, %v965
      %v986 = vadd.f32 %v915, %v965
      %v987 = vadd.f32 %v916, %v965
      %v988 = vadd.f32 %v917, %v965
      %v989 = vadd.f32 %v918, %v965
      %v990 = vadd.f32 %v919, %v965
      %v991 = vadd.f32 %v920, %v965
      %v992 = vadd.f32 %v921, %v965
      %v993 = vadd.f32 %v922, %v965
      %v994 = vadd.f32 %v923, %v965
      %v995 = vadd.f32 %v924, %v965
      %v996 = vadd.f32 %v925, %v965
      %v997 = vadd.f32 %v926, %v965
      %v998 = vadd.f32 %v927, %v965
      %v999 = vadd.f32 %v928, %v965
      %v1000 = vadd.f32 %v929, %v965
      %v1001 = vadd.f32 %v930, %v965
      %v1002 = vadd.f32 %v931, %v965
      %v1003 = vadd.f32 %v932, %v965
      %v1004 = vadd.f32 %v933, %v965
      %v1005 = vadd.f32 %v934, %v965
      %v1006 = vadd.f32 %v935, %v965
      %v1007 = vadd.f32 %v936, %v965
      %v1008 = vadd.f32 %v937, %v965
      %v1009 = vadd.f32 %v938, %v965
      %v1010 = vadd.f32 %v939, %v965
      %v1011 = vadd.f32 %v940, %v965
      %v1012 = vadd.f32 %v941, %v965
      %v1013 = vadd.f32 %v942, %v965
      %v1014 = vadd.f32 %v943, %v965
      %v1015 = vadd.f32 %v944, %v965
      %v1016 = vadd.f32 %v945, %v965
      %v1017 = vadd.f32 %v946, %v965
      %v1018 = vadd.f32 %v947, %v965
      %v1019 = vadd.f32 %v948, %v965
      %v1020 = vadd.f32 %v949, %v965
      %v1021 = vadd.f32 %v950, %v965
      %v1022 = vadd.f32 %v951, %v965
      %v1023 = vadd.f32 %v952, %v965
      %v1024 = vadd.f32 %v953, %v965
      %v1025 = vadd.f32 %v954, %v965
      %v1026 = vadd.f32 %v955, %v965
      %v1027 = vadd.f32 %v956, %v965
      %v1028 = vadd.f32 %v957, %v965
      %v1029 = vadd.f32 %v958, %v965
      %v1030 = vadd.f32 %v959, %v965
      %vm1031 = vcmp.ge.f32.partialorder %v967, 0.0
      %vm1032 = vcmp.ge.f32.partialorder %v968, 0.0
      %vm1033 = vcmp.ge.f32.partialorder %v969, 0.0
      %vm1034 = vcmp.ge.f32.partialorder %v970, 0.0
      %vm1035 = vcmp.ge.f32.partialorder %v971, 0.0
      %vm1036 = vcmp.ge.f32.partialorder %v972, 0.0
      %vm1037 = vcmp.ge.f32.partialorder %v973, 0.0
      %vm1038 = vcmp.ge.f32.partialorder %v974, 0.0
      %vm1039 = vcmp.ge.f32.partialorder %v975, 0.0
      %vm1040 = vcmp.ge.f32.partialorder %v976, 0.0
      %vm1041 = vcmp.ge.f32.partialorder %v977, 0.0
      %vm1042 = vcmp.ge.f32.partialorder %v978, 0.0
      %vm1043 = vcmp.ge.f32.partialorder %v979, 0.0
      %vm1044 = vcmp.ge.f32.partialorder %v980, 0.0
      %vm1045 = vcmp.ge.f32.partialorder %v981, 0.0
      %vm1046 = vcmp.ge.f32.partialorder %v982, 0.0
      %vm1047 = vcmp.ge.f32.partialorder %v983, 0.0
      %vm1048 = vcmp.ge.f32.partialorder %v984, 0.0
      %vm1049 = vcmp.ge.f32.partialorder %v985, 0.0
      %vm1050 = vcmp.ge.f32.partialorder %v986, 0.0
      %vm1051 = vcmp.ge.f32.partialorder %v987, 0.0
      %vm1052 = vcmp.ge.f32.partialorder %v988, 0.0
      %vm1053 = vcmp.ge.f32.partialorder %v989, 0.0
      %vm1054 = vcmp.ge.f32.partialorder %v990, 0.0
      %vm1055 = vcmp.ge.f32.partialorder %v991, 0.0
      %vm1056 = vcmp.ge.f32.partialorder %v992, 0.0
      %vm1057 = vcmp.ge.f32.partialorder %v993, 0.0
      %vm1058 = vcmp.ge.f32.partialorder %v994, 0.0
      %vm1059 = vcmp.ge.f32.partialorder %v995, 0.0
      %vm1060 = vcmp.ge.f32.partialorder %v996, 0.0
      %vm1061 = vcmp.ge.f32.partialorder %v997, 0.0
      %vm1062 = vcmp.ge.f32.partialorder %v998, 0.0
      %vm1063 = vcmp.ge.f32.partialorder %v999, 0.0
      %vm1064 = vcmp.ge.f32.partialorder %v1000, 0.0
      %vm1065 = vcmp.ge.f32.partialorder %v1001, 0.0
      %vm1066 = vcmp.ge.f32.partialorder %v1002, 0.0
      %vm1067 = vcmp.ge.f32.partialorder %v1003, 0.0
      %vm1068 = vcmp.ge.f32.partialorder %v1004, 0.0
      %vm1069 = vcmp.ge.f32.partialorder %v1005, 0.0
      %vm1070 = vcmp.ge.f32.partialorder %v1006, 0.0
      %vm1071 = vcmp.ge.f32.partialorder %v1007, 0.0
      %vm1072 = vcmp.ge.f32.partialorder %v1008, 0.0
      %vm1073 = vcmp.ge.f32.partialorder %v1009, 0.0
      %vm1074 = vcmp.ge.f32.partialorder %v1010, 0.0
      %vm1075 = vcmp.ge.f32.partialorder %v1011, 0.0
      %vm1076 = vcmp.ge.f32.partialorder %v1012, 0.0
      %vm1077 = vcmp.ge.f32.partialorder %v1013, 0.0
      %vm1078 = vcmp.ge.f32.partialorder %v1014, 0.0
      %vm1079 = vcmp.ge.f32.partialorder %v1015, 0.0
      %vm1080 = vcmp.ge.f32.partialorder %v1016, 0.0
      %vm1081 = vcmp.ge.f32.partialorder %v1017, 0.0
      %vm1082 = vcmp.ge.f32.partialorder %v1018, 0.0
      %vm1083 = vcmp.ge.f32.partialorder %v1019, 0.0
      %vm1084 = vcmp.ge.f32.partialorder %v1020, 0.0
      %vm1085 = vcmp.ge.f32.partialorder %v1021, 0.0
      %vm1086 = vcmp.ge.f32.partialorder %v1022, 0.0
      %vm1087 = vcmp.ge.f32.partialorder %v1023, 0.0
      %vm1088 = vcmp.ge.f32.partialorder %v1024, 0.0
      %vm1089 = vcmp.ge.f32.partialorder %v1025, 0.0
      %vm1090 = vcmp.ge.f32.partialorder %v1026, 0.0
      %vm1091 = vcmp.ge.f32.partialorder %v1027, 0.0
      %vm1092 = vcmp.ge.f32.partialorder %v1028, 0.0
      %vm1093 = vcmp.ge.f32.partialorder %v1029, 0.0
      %vm1094 = vcmp.ge.f32.partialorder %v1030, 0.0
      %v1095 = vmul.f32 %v967, 0.2
      %v1096 = vmul.f32 %v968, 0.2
      %v1097 = vmul.f32 %v969, 0.2
      %v1098 = vmul.f32 %v970, 0.2
      %v1099 = vmul.f32 %v971, 0.2
      %v1100 = vmul.f32 %v972, 0.2
      %v1101 = vmul.f32 %v973, 0.2
      %v1102 = vmul.f32 %v974, 0.2
      %v1103 = vmul.f32 %v975, 0.2
      %v1104 = vmul.f32 %v976, 0.2
      %v1105 = vmul.f32 %v977, 0.2
      %v1106 = vmul.f32 %v978, 0.2
      %v1107 = vmul.f32 %v979, 0.2
      %v1108 = vmul.f32 %v980, 0.2
      %v1109 = vmul.f32 %v981, 0.2
      %v1110 = vmul.f32 %v982, 0.2
      %v1111 = vmul.f32 %v983, 0.2
      %v1112 = vmul.f32 %v984, 0.2
      %v1113 = vmul.f32 %v985, 0.2
      %v1114 = vmul.f32 %v986, 0.2
      %v1115 = vmul.f32 %v987, 0.2
      %v1116 = vmul.f32 %v988, 0.2
      %v1117 = vmul.f32 %v989, 0.2
      %v1118 = vmul.f32 %v990, 0.2
      %v1119 = vmul.f32 %v991, 0.2
      %v1120 = vmul.f32 %v992, 0.2
      %v1121 = vmul.f32 %v993, 0.2
      %v1122 = vmul.f32 %v994, 0.2
      %v1123 = vmul.f32 %v995, 0.2
      %v1124 = vmul.f32 %v996, 0.2
      %v1125 = vmul.f32 %v997, 0.2
      %v1126 = vmul.f32 %v998, 0.2
      %v1127 = vmul.f32 %v999, 0.2
      %v1128 = vmul.f32 %v1000, 0.2
      %v1129 = vmul.f32 %v1001, 0.2
      %v1130 = vmul.f32 %v1002, 0.2
      %v1131 = vmul.f32 %v1003, 0.2
      %v1132 = vmul.f32 %v1004, 0.2
      %v1133 = vmul.f32 %v1005, 0.2
      %v1134 = vmul.f32 %v1006, 0.2
      %v1135 = vmul.f32 %v1007, 0.2
      %v1136 = vmul.f32 %v1008, 0.2
      %v1137 = vmul.f32 %v1009, 0.2
      %v1138 = vmul.f32 %v1010, 0.2
      %v1139 = vmul.f32 %v1011, 0.2
      %v1140 = vmul.f32 %v1012, 0.2
      %v1141 = vmul.f32 %v1013, 0.2
      %v1142 = vmul.f32 %v1014, 0.2
      %v1143 = vmul.f32 %v1015, 0.2
      %v1144 = vmul.f32 %v1016, 0.2
      %v1145 = vmul.f32 %v1017, 0.2
      %v1146 = vmul.f32 %v1018, 0.2
      %v1147 = vmul.f32 %v1019, 0.2
      %v1148 = vmul.f32 %v1020, 0.2
      %v1149 = vmul.f32 %v1021, 0.2
      %v1150 = vmul.f32 %v1022, 0.2
      %v1151 = vmul.f32 %v1023, 0.2
      %v1152 = vmul.f32 %v1024, 0.2
      %v1153 = vmul.f32 %v1025, 0.2
      %v1154 = vmul.f32 %v1026, 0.2
      %v1155 = vmul.f32 %v1027, 0.2
      %v1156 = vmul.f32 %v1028, 0.2
      %v1157 = vmul.f32 %v1029, 0.2
      %v1158 = vmul.f32 %v1030, 0.2
      %v1159 = vsel %vm1031, %v967, %v1095
      %v1160 = vsel %vm1032, %v968, %v1096
      %v1161 = vsel %vm1033, %v969, %v1097
      %v1162 = vsel %vm1034, %v970, %v1098
      %v1163 = vsel %vm1035, %v971, %v1099
      %v1164 = vsel %vm1036, %v972, %v1100
      %v1165 = vsel %vm1037, %v973, %v1101
      %v1166 = vsel %vm1038, %v974, %v1102
      %v1167 = vsel %vm1039, %v975, %v1103
      %v1168 = vsel %vm1040, %v976, %v1104
      %v1169 = vsel %vm1041, %v977, %v1105
      %v1170 = vsel %vm1042, %v978, %v1106
      %v1171 = vsel %vm1043, %v979, %v1107
      %v1172 = vsel %vm1044, %v980, %v1108
      %v1173 = vsel %vm1045, %v981, %v1109
      %v1174 = vsel %vm1046, %v982, %v1110
      %v1175 = vsel %vm1047, %v983, %v1111
      %v1176 = vsel %vm1048, %v984, %v1112
      %v1177 = vsel %vm1049, %v985, %v1113
      %v1178 = vsel %vm1050, %v986, %v1114
      %v1179 = vsel %vm1051, %v987, %v1115
      %v1180 = vsel %vm1052, %v988, %v1116
      %v1181 = vsel %vm1053, %v989, %v1117
      %v1182 = vsel %vm1054, %v990, %v1118
      %v1183 = vsel %vm1055, %v991, %v1119
      %v1184 = vsel %vm1056, %v992, %v1120
      %v1185 = vsel %vm1057, %v993, %v1121
      %v1186 = vsel %vm1058, %v994, %v1122
      %v1187 = vsel %vm1059, %v995, %v1123
      %v1188 = vsel %vm1060, %v996, %v1124
      %v1189 = vsel %vm1061, %v997, %v1125
      %v1190 = vsel %vm1062, %v998, %v1126
      %v1191 = vsel %vm1063, %v999, %v1127
      %v1192 = vsel %vm1064, %v1000, %v1128
      %v1193 = vsel %vm1065, %v1001, %v1129
      %v1194 = vsel %vm1066, %v1002, %v1130
      %v1195 = vsel %vm1067, %v1003, %v1131
      %v1196 = vsel %vm1068, %v1004, %v1132
      %v1197 = vsel %vm1069, %v1005, %v1133
      %v1198 = vsel %vm1070, %v1006, %v1134
      %v1199 = vsel %vm1071, %v1007, %v1135
      %v1200 = vsel %vm1072, %v1008, %v1136
      %v1201 = vsel %vm1073, %v1009, %v1137
      %v1202 = vsel %vm1074, %v1010, %v1138
      %v1203 = vsel %vm1075, %v1011, %v1139
      %v1204 = vsel %vm1076, %v1012, %v1140
      %v1205 = vsel %vm1077, %v1013, %v1141
      %v1206 = vsel %vm1078, %v1014, %v1142
      %v1207 = vsel %vm1079, %v1015, %v1143
      %v1208 = vsel %vm1080, %v1016, %v1144
      %v1209 = vsel %vm1081, %v1017, %v1145
      %v1210 = vsel %vm1082, %v1018, %v1146
      %v1211 = vsel %vm1083, %v1019, %v1147
      %v1212 = vsel %vm1084, %v1020, %v1148
      %v1213 = vsel %vm1085, %v1021, %v1149
      %v1214 = vsel %vm1086, %v1022, %v1150
      %v1215 = vsel %vm1087, %v1023, %v1151
      %v1216 = vsel %vm1088, %v1024, %v1152
      %v1217 = vsel %vm1089, %v1025, %v1153
      %v1218 = vsel %vm1090, %v1026, %v1154
      %v1219 = vsel %vm1091, %v1027, %v1155
      %v1220 = vsel %vm1092, %v1028, %v1156
      %v1221 = vsel %vm1093, %v1029, %v1157
      %v1222 = vsel %vm1094, %v1030, %v1158
      %v1223 = vpack.c.bf16 %v1160, %v1159
      %v1224 = vpack.c.bf16 %v1162, %v1161
      %v1225 = vpack.c.bf16 %v1164, %v1163
      %v1226 = vpack.c.bf16 %v1166, %v1165
      %v1227 = vpack.c.bf16 %v1168, %v1167
      %v1228 = vpack.c.bf16 %v1170, %v1169
      %v1229 = vpack.c.bf16 %v1172, %v1171
      %v1230 = vpack.c.bf16 %v1174, %v1173
      %v1231 = vpack.c.bf16 %v1176, %v1175
      %v1232 = vpack.c.bf16 %v1178, %v1177
      %v1233 = vpack.c.bf16 %v1180, %v1179
      %v1234 = vpack.c.bf16 %v1182, %v1181
      %v1235 = vpack.c.bf16 %v1184, %v1183
      %v1236 = vpack.c.bf16 %v1186, %v1185
      %v1237 = vpack.c.bf16 %v1188, %v1187
      %v1238 = vpack.c.bf16 %v1190, %v1189
      %v1239 = vpack.c.bf16 %v1192, %v1191
      %v1240 = vpack.c.bf16 %v1194, %v1193
      %v1241 = vpack.c.bf16 %v1196, %v1195
      %v1242 = vpack.c.bf16 %v1198, %v1197
      %v1243 = vpack.c.bf16 %v1200, %v1199
      %v1244 = vpack.c.bf16 %v1202, %v1201
      %v1245 = vpack.c.bf16 %v1204, %v1203
      %v1246 = vpack.c.bf16 %v1206, %v1205
      %v1247 = vpack.c.bf16 %v1208, %v1207
      %v1248 = vpack.c.bf16 %v1210, %v1209
      %v1249 = vpack.c.bf16 %v1212, %v1211
      %v1250 = vpack.c.bf16 %v1214, %v1213
      %v1251 = vpack.c.bf16 %v1216, %v1215
      %v1252 = vpack.c.bf16 %v1218, %v1217
      %v1253 = vpack.c.bf16 %v1220, %v1219
      %v1254 = vpack.c.bf16 %v1222, %v1221
      %v1287 = vunpack.c.l.b16 %v1223
      %v1288 = vunpack.c.h.b16 %v1223
      %v1289 = vunpack.c.l.b16 %v1224
      %v1290 = vunpack.c.h.b16 %v1224
      %v1291 = vunpack.c.l.b16 %v1225
      %v1292 = vunpack.c.h.b16 %v1225
      %v1293 = vunpack.c.l.b16 %v1226
      %v1294 = vunpack.c.h.b16 %v1226
      %v1295 = vunpack.c.l.b16 %v1227
      %v1296 = vunpack.c.h.b16 %v1227
      %v1297 = vunpack.c.l.b16 %v1228
      %v1298 = vunpack.c.h.b16 %v1228
      %v1299 = vunpack.c.l.b16 %v1229
      %v1300 = vunpack.c.h.b16 %v1229
      %v1301 = vunpack.c.l.b16 %v1230
      %v1302 = vunpack.c.h.b16 %v1230
      %v1303 = vunpack.c.l.b16 %v1231
      %v1304 = vunpack.c.h.b16 %v1231
      %v1305 = vunpack.c.l.b16 %v1232
      %v1306 = vunpack.c.h.b16 %v1232
      %v1307 = vunpack.c.l.b16 %v1233
      %v1308 = vunpack.c.h.b16 %v1233
      %v1309 = vunpack.c.l.b16 %v1234
      %v1310 = vunpack.c.h.b16 %v1234
      %v1311 = vunpack.c.l.b16 %v1235
      %v1312 = vunpack.c.h.b16 %v1235
      %v1313 = vunpack.c.l.b16 %v1236
      %v1314 = vunpack.c.h.b16 %v1236
      %v1315 = vunpack.c.l.b16 %v1237
      %v1316 = vunpack.c.h.b16 %v1237
      %v1317 = vunpack.c.l.b16 %v1238
      %v1318 = vunpack.c.h.b16 %v1238
      %v1319 = vunpack.c.l.b16 %v1239
      %v1320 = vunpack.c.h.b16 %v1239
      %v1321 = vunpack.c.l.b16 %v1240
      %v1322 = vunpack.c.h.b16 %v1240
      %v1323 = vunpack.c.l.b16 %v1241
      %v1324 = vunpack.c.h.b16 %v1241
      %v1325 = vunpack.c.l.b16 %v1242
      %v1326 = vunpack.c.h.b16 %v1242
      %v1327 = vunpack.c.l.b16 %v1243
      %v1328 = vunpack.c.h.b16 %v1243
      %v1329 = vunpack.c.l.b16 %v1244
      %v1330 = vunpack.c.h.b16 %v1244
      %v1331 = vunpack.c.l.b16 %v1245
      %v1332 = vunpack.c.h.b16 %v1245
      %v1333 = vunpack.c.l.b16 %v1246
      %v1334 = vunpack.c.h.b16 %v1246
      %v1335 = vunpack.c.l.b16 %v1247
      %v1336 = vunpack.c.h.b16 %v1247
      %v1337 = vunpack.c.l.b16 %v1248
      %v1338 = vunpack.c.h.b16 %v1248
      %v1339 = vunpack.c.l.b16 %v1249
      %v1340 = vunpack.c.h.b16 %v1249
      %v1341 = vunpack.c.l.b16 %v1250
      %v1342 = vunpack.c.h.b16 %v1250
      %v1343 = vunpack.c.l.b16 %v1251
      %v1344 = vunpack.c.h.b16 %v1251
      %v1345 = vunpack.c.l.b16 %v1252
      %v1346 = vunpack.c.h.b16 %v1252
      %v1347 = vunpack.c.l.b16 %v1253
      %v1348 = vunpack.c.h.b16 %v1253
      %v1349 = vunpack.c.l.b16 %v1254
      %v1350 = vunpack.c.h.b16 %v1254
      %v1351 = vpack.c.b16 %v1287, %v1287
      %v1352 = vpack.c.b16 %v1288, %v1288
      %v1353 = vpack.c.b16 %v1289, %v1289
      %v1354 = vpack.c.b16 %v1290, %v1290
      %v1355 = vpack.c.b16 %v1291, %v1291
      %v1356 = vpack.c.b16 %v1292, %v1292
      %v1357 = vpack.c.b16 %v1293, %v1293
      %v1358 = vpack.c.b16 %v1294, %v1294
      %v1359 = vpack.c.b16 %v1295, %v1295
      %v1360 = vpack.c.b16 %v1296, %v1296
      %v1361 = vpack.c.b16 %v1297, %v1297
      %v1362 = vpack.c.b16 %v1298, %v1298
      %v1363 = vpack.c.b16 %v1299, %v1299
      %v1364 = vpack.c.b16 %v1300, %v1300
      %v1365 = vpack.c.b16 %v1301, %v1301
      %v1366 = vpack.c.b16 %v1302, %v1302
      %v1367 = vpack.c.b16 %v1303, %v1303
      %v1368 = vpack.c.b16 %v1304, %v1304
      %v1369 = vpack.c.b16 %v1305, %v1305
      %v1370 = vpack.c.b16 %v1306, %v1306
      %v1371 = vpack.c.b16 %v1307, %v1307
      %v1372 = vpack.c.b16 %v1308, %v1308
      %v1373 = vpack.c.b16 %v1309, %v1309
      %v1374 = vpack.c.b16 %v1310, %v1310
      %v1375 = vpack.c.b16 %v1311, %v1311
      %v1376 = vpack.c.b16 %v1312, %v1312
      %v1377 = vpack.c.b16 %v1313, %v1313
      %v1378 = vpack.c.b16 %v1314, %v1314
      %v1379 = vpack.c.b16 %v1315, %v1315
      %v1380 = vpack.c.b16 %v1316, %v1316
      %v1381 = vpack.c.b16 %v1317, %v1317
      %v1382 = vpack.c.b16 %v1318, %v1318
      %v1383 = vpack.c.b16 %v1319, %v1319
      %v1384 = vpack.c.b16 %v1320, %v1320
      %v1385 = vpack.c.b16 %v1321, %v1321
      %v1386 = vpack.c.b16 %v1322, %v1322
      %v1387 = vpack.c.b16 %v1323, %v1323
      %v1388 = vpack.c.b16 %v1324, %v1324
      %v1389 = vpack.c.b16 %v1325, %v1325
      %v1390 = vpack.c.b16 %v1326, %v1326
      %v1391 = vpack.c.b16 %v1327, %v1327
      %v1392 = vpack.c.b16 %v1328, %v1328
      %v1393 = vpack.c.b16 %v1329, %v1329
      %v1394 = vpack.c.b16 %v1330, %v1330
      %v1395 = vpack.c.b16 %v1331, %v1331
      %v1396 = vpack.c.b16 %v1332, %v1332
      %v1397 = vpack.c.b16 %v1333, %v1333
      %v1398 = vpack.c.b16 %v1334, %v1334
      %v1399 = vpack.c.b16 %v1335, %v1335
      %v1400 = vpack.c.b16 %v1336, %v1336
      %v1401 = vpack.c.b16 %v1337, %v1337
      %v1402 = vpack.c.b16 %v1338, %v1338
      %v1403 = vpack.c.b16 %v1339, %v1339
      %v1404 = vpack.c.b16 %v1340, %v1340
      %v1405 = vpack.c.b16 %v1341, %v1341
      %v1406 = vpack.c.b16 %v1342, %v1342
      %v1407 = vpack.c.b16 %v1343, %v1343
      %v1408 = vpack.c.b16 %v1344, %v1344
      %v1409 = vpack.c.b16 %v1345, %v1345
      %v1410 = vpack.c.b16 %v1346, %v1346
      %v1411 = vpack.c.b16 %v1347, %v1347
      %v1412 = vpack.c.b16 %v1348, %v1348
      %v1413 = vpack.c.b16 %v1349, %v1349
      %v1414 = vpack.c.b16 %v1350, %v1350
      %1479 = vst [vmem:[%s3] sm:$0xf] %v1351
      %1480 = vst [vmem:[%s3 + $0x4] sm:$0xf] %v1352
      %1481 = vst [vmem:[%s3 + $0x8] sm:$0xf] %v1353
      %1482 = vst [vmem:[%s3 + $0xc] sm:$0xf] %v1354
      %1483 = vst [vmem:[%s3 + $0x10] sm:$0xf] %v1355
      %1484 = vst [vmem:[%s3 + $0x14] sm:$0xf] %v1356
      %1485 = vst [vmem:[%s3 + $0x18] sm:$0xf] %v1357
      %1486 = vst [vmem:[%s3 + $0x1c] sm:$0xf] %v1358
      %1487 = vst [vmem:[%s3 + $0x20] sm:$0xf] %v1359
      %1488 = vst [vmem:[%s3 + $0x24] sm:$0xf] %v1360
      %1489 = vst [vmem:[%s3 + $0x28] sm:$0xf] %v1361
      %1490 = vst [vmem:[%s3 + $0x2c] sm:$0xf] %v1362
      %1491 = vst [vmem:[%s3 + $0x30] sm:$0xf] %v1363
      %1492 = vst [vmem:[%s3 + $0x34] sm:$0xf] %v1364
      %1493 = vst [vmem:[%s3 + $0x38] sm:$0xf] %v1365
      %1494 = vst [vmem:[%s3 + $0x3c] sm:$0xf] %v1366
      %1495 = vst [vmem:[%s3 + $0x40] sm:$0xf] %v1367
      %1496 = vst [vmem:[%s3 + $0x44] sm:$0xf] %v1368
      %1497 = vst [vmem:[%s3 + $0x48] sm:$0xf] %v1369
      %1498 = vst [vmem:[%s3 + $0x4c] sm:$0xf] %v1370
      %1499 = vst [vmem:[%s3 + $0x50] sm:$0xf] %v1371
      %1500 = vst [vmem:[%s3 + $0x54] sm:$0xf] %v1372
      %1501 = vst [vmem:[%s3 + $0x58] sm:$0xf] %v1373
      %1502 = vst [vmem:[%s3 + $0x5c] sm:$0xf] %v1374
      %1503 = vst [vmem:[%s3 + $0x60] sm:$0xf] %v1375
      %1504 = vst [vmem:[%s3 + $0x64] sm:$0xf] %v1376
      %1505 = vst [vmem:[%s3 + $0x68] sm:$0xf] %v1377
      %1506 = vst [vmem:[%s3 + $0x6c] sm:$0xf] %v1378
      %1507 = vst [vmem:[%s3 + $0x70] sm:$0xf] %v1379
      %1508 = vst [vmem:[%s3 + $0x74] sm:$0xf] %v1380
      %1509 = vst [vmem:[%s3 + $0x78] sm:$0xf] %v1381
      %1510 = vst [vmem:[%s3 + $0x7c] sm:$0xf] %v1382
      %1511 = vst [vmem:[%s3 + $0x80] sm:$0xf] %v1383
      %1512 = vst [vmem:[%s3 + $0x84] sm:$0xf] %v1384
      %1513 = vst [vmem:[%s3 + $0x88] sm:$0xf] %v1385
      %1514 = vst [vmem:[%s3 + $0x8c] sm:$0xf] %v1386
      %1515 = vst [vmem:[%s3 + $0x90] sm:$0xf] %v1387
      %1516 = vst [vmem:[%s3 + $0x94] sm:$0xf] %v1388
      %1517 = vst [vmem:[%s3 + $0x98] sm:$0xf] %v1389
      %1518 = vst [vmem:[%s3 + $0x9c] sm:$0xf] %v1390
      %1519 = vst [vmem:[%s3 + $0xa0] sm:$0xf] %v1391
      %1520 = vst [vmem:[%s3 + $0xa4] sm:$0xf] %v1392
      %1521 = vst [vmem:[%s3 + $0xa8] sm:$0xf] %v1393
      %1522 = vst [vmem:[%s3 + $0xac] sm:$0xf] %v1394
      %1523 = vst [vmem:[%s3 + $0xb0] sm:$0xf] %v1395
      %1524 = vst [vmem:[%s3 + $0xb4] sm:$0xf] %v1396
      %1525 = vst [vmem:[%s3 + $0xb8] sm:$0xf] %v1397
      %1526 = vst [vmem:[%s3 + $0xbc] sm:$0xf] %v1398
      %1527 = vst [vmem:[%s3 + $0xc0] sm:$0xf] %v1399
      %1528 = vst [vmem:[%s3 + $0xc4] sm:$0xf] %v1400
      %1529 = vst [vmem:[%s3 + $0xc8] sm:$0xf] %v1401
      %1530 = vst [vmem:[%s3 + $0xcc] sm:$0xf] %v1402
      %1531 = vst [vmem:[%s3 + $0xd0] sm:$0xf] %v1403
      %1532 = vst [vmem:[%s3 + $0xd4] sm:$0xf] %v1404
      %1533 = vst [vmem:[%s3 + $0xd8] sm:$0xf] %v1405
      %1534 = vst [vmem:[%s3 + $0xdc] sm:$0xf] %v1406
      %1535 = vst [vmem:[%s3 + $0xe0] sm:$0xf] %v1407
      %1536 = vst [vmem:[%s3 + $0xe4] sm:$0xf] %v1408
      %1537 = vst [vmem:[%s3 + $0xe8] sm:$0xf] %v1409
      %1538 = vst [vmem:[%s3 + $0xec] sm:$0xf] %v1410
      %1539 = vst [vmem:[%s3 + $0xf0] sm:$0xf] %v1411
      %1540 = vst [vmem:[%s3 + $0xf4] sm:$0xf] %v1412
      %1541 = vst [vmem:[%s3 + $0xf8] sm:$0xf] %v1413
      %1542 = vst [vmem:[%s3 + $0xfc] sm:$0xf] %v1414
      %v1543 = vadd.f32 %v1159, %v1160
      %v1544 = vadd.f32 %v1543, %v1161
      %v1545 = vadd.f32 %v1544, %v1162
      %v1546 = vadd.f32 %v1545, %v1163
      %v1547 = vadd.f32 %v1546, %v1164
      %v1548 = vadd.f32 %v1547, %v1165
      %v1549 = vadd.f32 %v1548, %v1166
      %v1550 = vadd.f32 %v1549, %v1167
      %v1551 = vadd.f32 %v1550, %v1168
      %v1552 = vadd.f32 %v1551, %v1169
      %v1553 = vadd.f32 %v1552, %v1170
      %v1554 = vadd.f32 %v1553, %v1171
      %v1555 = vadd.f32 %v1554, %v1172
      %v1556 = vadd.f32 %v1555, %v1173
      %v1557 = vadd.f32 %v1556, %v1174
      %v1558 = vadd.f32 %v1557, %v1175
      %v1559 = vadd.f32 %v1558, %v1176
      %v1560 = vadd.f32 %v1559, %v1177
      %v1561 = vadd.f32 %v1560, %v1178
      %v1562 = vadd.f32 %v1561, %v1179
      %v1563 = vadd.f32 %v1562, %v1180
      %v1564 = vadd.f32 %v1563, %v1181
      %v1565 = vadd.f32 %v1564, %v1182
      %v1566 = vadd.f32 %v1565, %v1183
      %v1567 = vadd.f32 %v1566, %v1184
      %v1568 = vadd.f32 %v1567, %v1185
      %v1569 = vadd.f32 %v1568, %v1186
      %v1570 = vadd.f32 %v1569, %v1187
      %v1571 = vadd.f32 %v1570, %v1188
      %v1572 = vadd.f32 %v1571, %v1189
      %v1573 = vadd.f32 %v1572, %v1190
      %v1574 = vadd.f32 %v1573, %v1191
      %v1575 = vadd.f32 %v1574, %v1192
      %v1576 = vadd.f32 %v1575, %v1193
      %v1577 = vadd.f32 %v1576, %v1194
      %v1578 = vadd.f32 %v1577, %v1195
      %v1579 = vadd.f32 %v1578, %v1196
      %v1580 = vadd.f32 %v1579, %v1197
      %v1581 = vadd.f32 %v1580, %v1198
      %v1582 = vadd.f32 %v1581, %v1199
      %v1583 = vadd.f32 %v1582, %v1200
      %v1584 = vadd.f32 %v1583, %v1201
      %v1585 = vadd.f32 %v1584, %v1202
      %v1586 = vadd.f32 %v1585, %v1203
      %v1587 = vadd.f32 %v1586, %v1204
      %v1588 = vadd.f32 %v1587, %v1205
      %v1589 = vadd.f32 %v1588, %v1206
      %v1590 = vadd.f32 %v1589, %v1207
      %v1591 = vadd.f32 %v1590, %v1208
      %v1592 = vadd.f32 %v1591, %v1209
      %v1593 = vadd.f32 %v1592, %v1210
      %v1594 = vadd.f32 %v1593, %v1211
      %v1595 = vadd.f32 %v1594, %v1212
      %v1596 = vadd.f32 %v1595, %v1213
      %v1597 = vadd.f32 %v1596, %v1214
      %v1598 = vadd.f32 %v1597, %v1215
      %v1599 = vadd.f32 %v1598, %v1216
      %v1600 = vadd.f32 %v1599, %v1217
      %v1601 = vadd.f32 %v1600, %v1218
      %v1602 = vadd.f32 %v1601, %v1219
      %v1603 = vadd.f32 %v1602, %v1220
      %v1604 = vadd.f32 %v1603, %v1221
      %v1605 = vadd.f32 %v1604, %v1222
      %v1606 = vrot.slane %v1605, 4
      %v1607 = vadd.f32 %v1605, %v1606
      %v1608 = vrot.slane %v1607, 2
      %v1609 = vadd.f32 %v1607, %v1608
      %v1610 = vrot.slane %v1609, 1
      %v1611 = vadd.f32 %v1609, %v1610
      %v1612 = vmul.f32 %v1159, %v1159
      %v1613 = vmul.f32 %v1160, %v1160
      %v1614 = vmul.f32 %v1161, %v1161
      %v1615 = vmul.f32 %v1162, %v1162
      %v1616 = vmul.f32 %v1163, %v1163
      %v1617 = vmul.f32 %v1164, %v1164
      %v1618 = vmul.f32 %v1165, %v1165
      %v1619 = vmul.f32 %v1166, %v1166
      %v1620 = vmul.f32 %v1167, %v1167
      %v1621 = vmul.f32 %v1168, %v1168
      %v1622 = vmul.f32 %v1169, %v1169
      %v1623 = vmul.f32 %v1170, %v1170
      %v1624 = vmul.f32 %v1171, %v1171
      %v1625 = vmul.f32 %v1172, %v1172
      %v1626 = vmul.f32 %v1173, %v1173
      %v1627 = vmul.f32 %v1174, %v1174
      %v1628 = vmul.f32 %v1175, %v1175
      %v1629 = vmul.f32 %v1176, %v1176
      %v1630 = vmul.f32 %v1177, %v1177
      %v1631 = vmul.f32 %v1178, %v1178
      %v1632 = vmul.f32 %v1179, %v1179
      %v1633 = vmul.f32 %v1180, %v1180
      %v1634 = vmul.f32 %v1181, %v1181
      %v1635 = vmul.f32 %v1182, %v1182
      %v1636 = vmul.f32 %v1183, %v1183
      %v1637 = vmul.f32 %v1184, %v1184
      %v1638 = vmul.f32 %v1185, %v1185
      %v1639 = vmul.f32 %v1186, %v1186
      %v1640 = vmul.f32 %v1187, %v1187
      %v1641 = vmul.f32 %v1188, %v1188
      %v1642 = vmul.f32 %v1189, %v1189
      %v1643 = vmul.f32 %v1190, %v1190
      %v1644 = vmul.f32 %v1191, %v1191
      %v1645 = vmul.f32 %v1192, %v1192
      %v1646 = vmul.f32 %v1193, %v1193
      %v1647 = vmul.f32 %v1194, %v1194
      %v1648 = vmul.f32 %v1195, %v1195
      %v1649 = vmul.f32 %v1196, %v1196
      %v1650 = vmul.f32 %v1197, %v1197
      %v1651 = vmul.f32 %v1198, %v1198
      %v1652 = vmul.f32 %v1199, %v1199
      %v1653 = vmul.f32 %v1200, %v1200
      %v1654 = vmul.f32 %v1201, %v1201
      %v1655 = vmul.f32 %v1202, %v1202
      %v1656 = vmul.f32 %v1203, %v1203
      %v1657 = vmul.f32 %v1204, %v1204
      %v1658 = vmul.f32 %v1205, %v1205
      %v1659 = vmul.f32 %v1206, %v1206
      %v1660 = vmul.f32 %v1207, %v1207
      %v1661 = vmul.f32 %v1208, %v1208
      %v1662 = vmul.f32 %v1209, %v1209
      %v1663 = vmul.f32 %v1210, %v1210
      %v1664 = vmul.f32 %v1211, %v1211
      %v1665 = vmul.f32 %v1212, %v1212
      %v1666 = vmul.f32 %v1213, %v1213
      %v1667 = vmul.f32 %v1214, %v1214
      %v1668 = vmul.f32 %v1215, %v1215
      %v1669 = vmul.f32 %v1216, %v1216
      %v1670 = vmul.f32 %v1217, %v1217
      %v1671 = vmul.f32 %v1218, %v1218
      %v1672 = vmul.f32 %v1219, %v1219
      %v1673 = vmul.f32 %v1220, %v1220
      %v1674 = vmul.f32 %v1221, %v1221
      %v1675 = vmul.f32 %v1222, %v1222
      %v1676 = vadd.f32 %v1612, %v1613
      %v1677 = vadd.f32 %v1676, %v1614
      %v1678 = vadd.f32 %v1677, %v1615
      %v1679 = vadd.f32 %v1678, %v1616
      %v1680 = vadd.f32 %v1679, %v1617
      %v1681 = vadd.f32 %v1680, %v1618
      %v1682 = vadd.f32 %v1681, %v1619
      %v1683 = vadd.f32 %v1682, %v1620
      %v1684 = vadd.f32 %v1683, %v1621
      %v1685 = vadd.f32 %v1684, %v1622
      %v1686 = vadd.f32 %v1685, %v1623
      %v1687 = vadd.f32 %v1686, %v1624
      %v1688 = vadd.f32 %v1687, %v1625
      %v1689 = vadd.f32 %v1688, %v1626
      %v1690 = vadd.f32 %v1689, %v1627
      %v1691 = vadd.f32 %v1690, %v1628
      %v1692 = vadd.f32 %v1691, %v1629
      %v1693 = vadd.f32 %v1692, %v1630
      %v1694 = vadd.f32 %v1693, %v1631
      %v1695 = vadd.f32 %v1694, %v1632
      %v1696 = vadd.f32 %v1695, %v1633
      %v1697 = vadd.f32 %v1696, %v1634
      %v1698 = vadd.f32 %v1697, %v1635
      %v1699 = vadd.f32 %v1698, %v1636
      %v1700 = vadd.f32 %v1699, %v1637
      %v1701 = vadd.f32 %v1700, %v1638
      %v1702 = vadd.f32 %v1701, %v1639
      %v1703 = vadd.f32 %v1702, %v1640
      %v1704 = vadd.f32 %v1703, %v1641
      %v1705 = vadd.f32 %v1704, %v1642
      %v1706 = vadd.f32 %v1705, %v1643
      %v1707 = vadd.f32 %v1706, %v1644
      %v1708 = vadd.f32 %v1707, %v1645
      %v1709 = vadd.f32 %v1708, %v1646
      %v1710 = vadd.f32 %v1709, %v1647
      %v1711 = vadd.f32 %v1710, %v1648
      %v1712 = vadd.f32 %v1711, %v1649
      %v1713 = vadd.f32 %v1712, %v1650
      %v1714 = vadd.f32 %v1713, %v1651
      %v1715 = vadd.f32 %v1714, %v1652
      %v1716 = vadd.f32 %v1715, %v1653
      %v1717 = vadd.f32 %v1716, %v1654
      %v1718 = vadd.f32 %v1717, %v1655
      %v1719 = vadd.f32 %v1718, %v1656
      %v1720 = vadd.f32 %v1719, %v1657
      %v1721 = vadd.f32 %v1720, %v1658
      %v1722 = vadd.f32 %v1721, %v1659
      %v1723 = vadd.f32 %v1722, %v1660
      %v1724 = vadd.f32 %v1723, %v1661
      %v1725 = vadd.f32 %v1724, %v1662
      %v1726 = vadd.f32 %v1725, %v1663
      %v1727 = vadd.f32 %v1726, %v1664
      %v1728 = vadd.f32 %v1727, %v1665
      %v1729 = vadd.f32 %v1728, %v1666
      %v1730 = vadd.f32 %v1729, %v1667
      %v1731 = vadd.f32 %v1730, %v1668
      %v1732 = vadd.f32 %v1731, %v1669
      %v1733 = vadd.f32 %v1732, %v1670
      %v1734 = vadd.f32 %v1733, %v1671
      %v1735 = vadd.f32 %v1734, %v1672
      %v1736 = vadd.f32 %v1735, %v1673
      %v1737 = vadd.f32 %v1736, %v1674
      %v1738 = vadd.f32 %v1737, %v1675
      %v1739 = vrot.slane %v1738, 4
      %v1740 = vadd.f32 %v1738, %v1739
      %v1741 = vrot.slane %v1740, 2
      %v1742 = vadd.f32 %v1740, %v1741
      %v1743 = vrot.slane %v1742, 1
      %v1744 = vadd.f32 %v1742, %v1743
      %v1745 = vld [vmem:[#allocation3] sm:$0x3]
      %vm1746 = vcmask 1040384
      %v1747 = vsel %vm1746, %v1611, %v1744
      %v1748 = vadd.f32 %v1745, %v1747
      %1749 = vst [vmem:[#allocation3] sm:$0x3] %v1748
    $region25: #{_lambda_.8} parent=1 // pred_fallthru
      _
    // Predicated region
    $region26: #{_lambda_.8} parent=1 // pred_check
      _
    $region27: #{_lambda_.8} parent=1 // pred_check_branch
      %1751 = sbr.rel (0) target = $region29
    $region28: #{_lambda_.8} parent=1 // pred_region
      _
    $region29: #{_lambda_.8} parent=1 // pred_fallthru
      _
    // Predicated region
    $region30: #{_lambda_.8} parent=1 // pred_check
      _
    $region31: #{_lambda_.8} parent=1 // pred_check_branch
      %1753 = sbr.rel (0) target = $region33
    $region32: #{_lambda_.8} parent=1 // pred_region
      %s1755 = ssub.s32 128, 128
      %1756 = vsyncadd [#allocation4], %s1755
      %s1758 = sshll.u32 [#allocation3], 4
      %s1759 = int_to_ptr.vmem [resolvable:$true] %s1758
      %1761 = dma.vmem_to_hbm [thread:$0]  %s1759, 128, %s4, [#allocation4]
    $region33: #{_lambda_.8} parent=1 // pred_fallthru
      _
    // Predicated region
    $region34: #{_lambda_.8} parent=1 // pred_check
      _
    $region35: #{_lambda_.8} parent=1 // pred_check_branch
      %1763 = sbr.rel (0) target = $region37
    $region36: #{_lambda_.8} parent=1 // pred_region
      _
    $region37: #{_lambda_.8} parent=1 // pred_fallthru
      _
    // Predicated region
    $region38: #{_lambda_.8} parent=1 // pred_check
      _
    $region39: #{_lambda_.8} parent=1 // pred_check_branch
      %1765 = sbr.rel (0) target = $region41
    $region40: #{_lambda_.8} parent=1 // pred_region
      %1766 = dma.done [#allocation4], 128
    $region41: #{_lambda_.8} parent=1 // pred_fallthru
      _
    %1767 = vsyncpa [#allocation4], 1

// kernel: _lambda_.9
$region0: #{_lambda_.9}
  #allocation0 [shape = 'u32[]', space=smem, size = 0x4, offset = 0x4, fixed_abs, tag = 'smem constant byte address 0x4 - core index']
  #allocation1 [shape = 'u32[144,128]{1,0:T(1,128)}', space=vmem, size = 0x12000, scoped, tag = 'internal scratch']
  #allocation2 [shape = 'f32[128,128]{1,0:T(8,128)}', space=vmem, size = 0x10000, scoped, tag = 'scratch operand']
  %s0 = inlined_call_operand.vmem [shape: bf16[128,128], index: 0, kind: input, shape index: {}]
  %s1 = inlined_call_operand.vmem [shape: bf16[128,128], index: 1, kind: input, shape index: {}]
  %s2 = inlined_call_operand.vmem [shape: f32[1,128], index: 2, kind: input, shape index: {}]
  %s3 = inlined_call_operand.vmem [shape: bf16[128,128], index: 3, kind: output, shape index: {0}]
  %s4 = inlined_call_operand.vmem [shape: f32[8,128], index: 4, kind: output, shape index: {1}]
  %5 = xla_tuple %s3, %s4
  %s6 = sld [smem:[#allocation0]]
  $region42: #{_lambda_.9} parent=0
    _
  %s8 = ssub.s32 1, %s6
  %s9 = scalar_select 0, %s8, %s6
  // Predicated region
  $region2: #{_lambda_.9} parent=0 // pred_check
    _
  $region3: #{_lambda_.9} parent=0 // pred_check_branch
    %11 = sbr.rel (0) target = $region5
  $region4: #{_lambda_.9} parent=0 // pred_region
    _
  $region5: #{_lambda_.9} parent=0 // pred_fallthru
    _
  // Predicated region
  $region6: #{_lambda_.9} parent=0 // pred_check
    _
  $region7: #{_lambda_.9} parent=0 // pred_check_branch
    %13 = sbr.rel (0) target = $region9
  $region8: #{_lambda_.9} parent=0 // pred_region
    _
  $region9: #{_lambda_.9} parent=0 // pred_fallthru
    _
  // Predicated region
  $region10: #{_lambda_.9} parent=0 // pred_check
    _
  $region11: #{_lambda_.9} parent=0 // pred_check_branch
    %15 = sbr.rel (0) target = $region13
  $region12: #{_lambda_.9} parent=0 // pred_region
    _
  $region13: #{_lambda_.9} parent=0 // pred_fallthru
    _
  %p17 = scmp.eq.s32.totalorder 0, 0
  // Predicated region
  $region14: #{_lambda_.9} parent=0 // pred_check
    %p18 = pneg %p17
  $region15: #{_lambda_.9} parent=0 // pred_check_branch
    %20 = sbr.rel (%p18) target = $region17
  $region16: #{_lambda_.9} parent=0 // pred_region
    %21 = vst [vmem:[#allocation2] sm:$0xff] 0.0
    %22 = vst [vmem:[#allocation2 + $0x8] sm:$0xff] 0.0
    %23 = vst [vmem:[#allocation2 + $0x10] sm:$0xff] 0.0
    %24 = vst [vmem:[#allocation2 + $0x18] sm:$0xff] 0.0
    %25 = vst [vmem:[#allocation2 + $0x20] sm:$0xff] 0.0
    %26 = vst [vmem:[#allocation2 + $0x28] sm:$0xff] 0.0
    %27 = vst [vmem:[#allocation2 + $0x30] sm:$0xff] 0.0
    %28 = vst [vmem:[#allocation2 + $0x38] sm:$0xff] 0.0
    %29 = vst [vmem:[#allocation2 + $0x40] sm:$0xff] 0.0
    %30 = vst [vmem:[#allocation2 + $0x48] sm:$0xff] 0.0
    %31 = vst [vmem:[#allocation2 + $0x50] sm:$0xff] 0.0
    %32 = vst [vmem:[#allocation2 + $0x58] sm:$0xff] 0.0
    %33 = vst [vmem:[#allocation2 + $0x60] sm:$0xff] 0.0
    %34 = vst [vmem:[#allocation2 + $0x68] sm:$0xff] 0.0
    %35 = vst [vmem:[#allocation2 + $0x70] sm:$0xff] 0.0
    %36 = vst [vmem:[#allocation2 + $0x78] sm:$0xff] 0.0
  $region17: #{_lambda_.9} parent=0 // pred_fallthru
    _
  %p37 = scmp.eq.s32.totalorder 0, 0
  %p38 = pnand %p37, %p17
  %p39 = pneg %p38
  // Predicated region
  $region18: #{_lambda_.9} parent=0 // pred_check
    _
  $region19: #{_lambda_.9} parent=0 // pred_check_branch
    %41 = sbr.rel (%p38) target = $region21
  $region20: #{_lambda_.9} parent=0 // pred_region
    %42 = vst [vmem:[%s4] sm:$0xff] 0.0
  $region21: #{_lambda_.9} parent=0 // pred_fallthru
    _
  %v43 = vld [vmem:[#allocation2] sm:$0xff]
  %v44 = vld [vmem:[#allocation2 + $0x8] sm:$0xff]
  %v45 = vld [vmem:[#allocation2 + $0x10] sm:$0xff]
  %v46 = vld [vmem:[#allocation2 + $0x18] sm:$0xff]
  %v47 = vld [vmem:[#allocation2 + $0x20] sm:$0xff]
  %v48 = vld [vmem:[#allocation2 + $0x28] sm:$0xff]
  %v49 = vld [vmem:[#allocation2 + $0x30] sm:$0xff]
  %v50 = vld [vmem:[#allocation2 + $0x38] sm:$0xff]
  %v51 = vld [vmem:[#allocation2 + $0x40] sm:$0xff]
  %v52 = vld [vmem:[#allocation2 + $0x48] sm:$0xff]
  %v53 = vld [vmem:[#allocation2 + $0x50] sm:$0xff]
  %v54 = vld [vmem:[#allocation2 + $0x58] sm:$0xff]
  %v55 = vld [vmem:[#allocation2 + $0x60] sm:$0xff]
  %v56 = vld [vmem:[#allocation2 + $0x68] sm:$0xff]
  %v57 = vld [vmem:[#allocation2 + $0x70] sm:$0xff]
  %v58 = vld [vmem:[#allocation2 + $0x78] sm:$0xff]
  %v59 = vld [vmem:[%s0] sm:$0xf]
  %v60 = vld [vmem:[%s0 + $0x4] sm:$0xf]
  %v61 = vld [vmem:[%s0 + $0x8] sm:$0xf]
  %v62 = vld [vmem:[%s0 + $0xc] sm:$0xf]
  %v63 = vld [vmem:[%s0 + $0x10] sm:$0xf]
  %v64 = vld [vmem:[%s0 + $0x14] sm:$0xf]
  %v65 = vld [vmem:[%s0 + $0x18] sm:$0xf]
  %v66 = vld [vmem:[%s0 + $0x1c] sm:$0xf]
  %v67 = vld [vmem:[%s0 + $0x20] sm:$0xf]
  %v68 = vld [vmem:[%s0 + $0x24] sm:$0xf]
  %v69 = vld [vmem:[%s0 + $0x28] sm:$0xf]
  %v70 = vld [vmem:[%s0 + $0x2c] sm:$0xf]
  %v71 = vld [vmem:[%s0 + $0x30] sm:$0xf]
  %v72 = vld [vmem:[%s0 + $0x34] sm:$0xf]
  %v73 = vld [vmem:[%s0 + $0x38] sm:$0xf]
  %v74 = vld [vmem:[%s0 + $0x3c] sm:$0xf]
  %v75 = vld [vmem:[%s1] sm:$0xf]
  %v76 = vld [vmem:[%s1 + $0x4] sm:$0xf]
  %v77 = vld [vmem:[%s1 + $0x8] sm:$0xf]
  %v78 = vld [vmem:[%s1 + $0xc] sm:$0xf]
  %v79 = vld [vmem:[%s1 + $0x10] sm:$0xf]
  %v80 = vld [vmem:[%s1 + $0x14] sm:$0xf]
  %v81 = vld [vmem:[%s1 + $0x18] sm:$0xf]
  %v82 = vld [vmem:[%s1 + $0x1c] sm:$0xf]
  %v83 = vld [vmem:[%s1 + $0x20] sm:$0xf]
  %v84 = vld [vmem:[%s1 + $0x24] sm:$0xf]
  %v85 = vld [vmem:[%s1 + $0x28] sm:$0xf]
  %v86 = vld [vmem:[%s1 + $0x2c] sm:$0xf]
  %v87 = vld [vmem:[%s1 + $0x30] sm:$0xf]
  %v88 = vld [vmem:[%s1 + $0x34] sm:$0xf]
  %v89 = vld [vmem:[%s1 + $0x38] sm:$0xf]
  %v90 = vld [vmem:[%s1 + $0x3c] sm:$0xf]
  %v107 = vunpack.c.l.b16 %v59
  %v108 = vunpack.c.l.b16 %v60
  %v109 = vunpack.c.l.b16 %v61
  %v110 = vunpack.c.l.b16 %v62
  %v111 = vunpack.c.l.b16 %v63
  %v112 = vunpack.c.l.b16 %v64
  %v113 = vunpack.c.l.b16 %v65
  %v114 = vunpack.c.l.b16 %v66
  %v115 = vunpack.c.l.b16 %v67
  %v116 = vunpack.c.l.b16 %v68
  %v117 = vunpack.c.l.b16 %v69
  %v118 = vunpack.c.l.b16 %v70
  %v119 = vunpack.c.l.b16 %v71
  %v120 = vunpack.c.l.b16 %v72
  %v121 = vunpack.c.l.b16 %v73
  %v122 = vunpack.c.l.b16 %v74
  %v123 = vpack.c.b16 %v108, %v107
  %v124 = vpack.c.b16 %v110, %v109
  %v125 = vpack.c.b16 %v112, %v111
  %v126 = vpack.c.b16 %v114, %v113
  %v127 = vpack.c.b16 %v116, %v115
  %v128 = vpack.c.b16 %v118, %v117
  %v129 = vpack.c.b16 %v120, %v119
  %v130 = vpack.c.b16 %v122, %v121
  %v155 = vunpack.c.l.b16 %v75
  %v156 = vunpack.c.l.b16 %v76
  %v157 = vunpack.c.l.b16 %v77
  %v158 = vunpack.c.l.b16 %v78
  %v159 = vunpack.c.l.b16 %v79
  %v160 = vunpack.c.l.b16 %v80
  %v161 = vunpack.c.l.b16 %v81
  %v162 = vunpack.c.l.b16 %v82
  %v163 = vunpack.c.l.b16 %v83
  %v164 = vunpack.c.l.b16 %v84
  %v165 = vunpack.c.l.b16 %v85
  %v166 = vunpack.c.l.b16 %v86
  %v167 = vunpack.c.l.b16 %v87
  %v168 = vunpack.c.l.b16 %v88
  %v169 = vunpack.c.l.b16 %v89
  %v170 = vunpack.c.l.b16 %v90
  %v171 = vpack.c.b16 %v156, %v155
  %v172 = vpack.c.b16 %v158, %v157
  %v173 = vpack.c.b16 %v160, %v159
  %v174 = vpack.c.b16 %v162, %v161
  %v175 = vpack.c.b16 %v164, %v163
  %v176 = vpack.c.b16 %v166, %v165
  %v177 = vpack.c.b16 %v168, %v167
  %v178 = vpack.c.b16 %v170, %v169
  %187 = vmatprep.subr.bf16.mxu0 0
  %188 = vmatpush1.bf16.msra.mxu0 %v171
  %189 = vmatprep.subr.bf16.mxu0 0
  %190 = vmatpush1.bf16.msra.mxu0 %v172
  %191 = vmatprep.subr.bf16.mxu0 0
  %192 = vmatpush1.bf16.msra.mxu0 %v173
  %193 = vmatprep.subr.bf16.mxu0 0
  %194 = vmatpush1.bf16.msra.mxu0 %v174
  %195 = vmatprep.subr.bf16.mxu0 0
  %196 = vmatpush1.bf16.msra.mxu0 %v175
  %197 = vmatprep.subr.bf16.mxu0 0
  %198 = vmatpush1.bf16.msra.mxu0 %v176
  %199 = vmatprep.subr.bf16.mxu0 0
  %200 = vmatpush1.bf16.msra.mxu0 %v177
  %201 = vmatprep.subr.bf16.mxu0 0
  %202 = vmatpush1.bf16.msra.mxu0 %v178
  %203 = vmatprep.subr.bf16.mxu0 0
  %204 = vmatpush1.bf16.msra.mxu0 0
  %205 = vmatprep.subr.bf16.mxu0 0
  %206 = vmatpush1.bf16.msra.mxu0 0
  %207 = vmatprep.subr.bf16.mxu0 0
  %208 = vmatpush1.bf16.msra.mxu0 0
  %209 = vmatprep.subr.bf16.mxu0 0
  %210 = vmatpush1.bf16.msra.mxu0 0
  %211 = vmatprep.subr.bf16.mxu0 0
  %212 = vmatpush1.bf16.msra.mxu0 0
  %213 = vmatprep.subr.bf16.mxu0 0
  %214 = vmatpush1.bf16.msra.mxu0 0
  %215 = vmatprep.subr.bf16.mxu0 0
  %216 = vmatpush1.bf16.msra.mxu0 0
  %217 = vmatprep.subr.bf16.mxu0 0
  %218 = vmatpush1.bf16.msra.mxu0 0
  %219 = vmatprep.mubr.bf16.mxu0 0
  %220 = vmatmul.mubr.bf16.gmra.mrb[0].mxu0 %v123
  %v221 = vpop.f32.mrb[0].mxu0
  %v222 = vadd.f32 0.0, %v221
  %v223 = vpop.f32.mrb[0].mxu0
  %v224 = vpop.f32.mrb[0].mxu0
  %v225 = vadd.f32 0.0, %v224
  %v226 = vpop.f32.mrb[0].mxu0
  %227 = vmatprep.mubr.bf16.mxu0 0
  %228 = vmatmul.mubr.bf16.gmra.mrb[0].mxu0 %v124
  %v229 = vpop.f32.mrb[0].mxu0
  %v230 = vadd.f32 0.0, %v229
  %v231 = vpop.f32.mrb[0].mxu0
  %v232 = vpop.f32.mrb[0].mxu0
  %v233 = vadd.f32 0.0, %v232
  %v234 = vpop.f32.mrb[0].mxu0
  %235 = vmatprep.mubr.bf16.mxu0 0
  %236 = vmatmul.mubr.bf16.gmra.mrb[0].mxu0 %v125
  %v237 = vpop.f32.mrb[0].mxu0
  %v238 = vadd.f32 0.0, %v237
  %v239 = vpop.f32.mrb[0].mxu0
  %v240 = vpop.f32.mrb[0].mxu0
  %v241 = vadd.f32 0.0, %v240
  %v242 = vpop.f32.mrb[0].mxu0
  %243 = vmatprep.mubr.bf16.mxu0 0
  %244 = vmatmul.mubr.bf16.gmra.mrb[0].mxu0 %v126
  %v245 = vpop.f32.mrb[0].mxu0
  %v246 = vadd.f32 0.0, %v245
  %v247 = vpop.f32.mrb[0].mxu0
  %v248 = vpop.f32.mrb[0].mxu0
  %v249 = vadd.f32 0.0, %v248
  %v250 = vpop.f32.mrb[0].mxu0
  %251 = vmatprep.mubr.bf16.mxu0 0
  %252 = vmatmul.mubr.bf16.gmra.mrb[0].mxu0 %v127
  %v253 = vpop.f32.mrb[0].mxu0
  %v254 = vadd.f32 0.0, %v253
  %v255 = vpop.f32.mrb[0].mxu0
  %v256 = vpop.f32.mrb[0].mxu0
  %v257 = vadd.f32 0.0, %v256
  %v258 = vpop.f32.mrb[0].mxu0
  %259 = vmatprep.mubr.bf16.mxu0 0
  %260 = vmatmul.mubr.bf16.gmra.mrb[0].mxu0 %v128
  %v261 = vpop.f32.mrb[0].mxu0
  %v262 = vadd.f32 0.0, %v261
  %v263 = vpop.f32.mrb[0].mxu0
  %v264 = vpop.f32.mrb[0].mxu0
  %v265 = vadd.f32 0.0, %v264
  %v266 = vpop.f32.mrb[0].mxu0
  %267 = vmatprep.mubr.bf16.mxu0 0
  %268 = vmatmul.mubr.bf16.gmra.mrb[0].mxu0 %v129
  %v269 = vpop.f32.mrb[0].mxu0
  %v270 = vadd.f32 0.0, %v269
  %v271 = vpop.f32.mrb[0].mxu0
  %v272 = vpop.f32.mrb[0].mxu0
  %v273 = vadd.f32 0.0, %v272
  %v274 = vpop.f32.mrb[0].mxu0
  %275 = vmatprep.mubr.bf16.mxu0 0
  %276 = vmatmul.mubr.bf16.gmra.mrb[0].mxu0 %v130
  %v277 = vpop.f32.mrb[0].mxu0
  %v278 = vadd.f32 0.0, %v277
  %v279 = vpop.f32.mrb[0].mxu0
  %v280 = vpop.f32.mrb[0].mxu0
  %v281 = vadd.f32 0.0, %v280
  %v282 = vpop.f32.mrb[0].mxu0
  %283 = vdwg.mxu0
  %v284 = vadd.f32 %v43, %v222
  %v285 = vadd.f32 %v44, %v225
  %v286 = vadd.f32 %v45, %v230
  %v287 = vadd.f32 %v46, %v233
  %v288 = vadd.f32 %v47, %v238
  %v289 = vadd.f32 %v48, %v241
  %v290 = vadd.f32 %v49, %v246
  %v291 = vadd.f32 %v50, %v249
  %v292 = vadd.f32 %v51, %v254
  %v293 = vadd.f32 %v52, %v257
  %v294 = vadd.f32 %v53, %v262
  %v295 = vadd.f32 %v54, %v265
  %v296 = vadd.f32 %v55, %v270
  %v297 = vadd.f32 %v56, %v273
  %v298 = vadd.f32 %v57, %v278
  %v299 = vadd.f32 %v58, %v281
  %300 = vst [vmem:[#allocation2] sm:$0xff] %v284
  %301 = vst [vmem:[#allocation2 + $0x8] sm:$0xff] %v285
  %302 = vst [vmem:[#allocation2 + $0x10] sm:$0xff] %v286
  %303 = vst [vmem:[#allocation2 + $0x18] sm:$0xff] %v287
  %304 = vst [vmem:[#allocation2 + $0x20] sm:$0xff] %v288
  %305 = vst [vmem:[#allocation2 + $0x28] sm:$0xff] %v289
  %306 = vst [vmem:[#allocation2 + $0x30] sm:$0xff] %v290
  %307 = vst [vmem:[#allocation2 + $0x38] sm:$0xff] %v291
  %308 = vst [vmem:[#allocation2 + $0x40] sm:$0xff] %v292
  %309 = vst [vmem:[#allocation2 + $0x48] sm:$0xff] %v293
  %310 = vst [vmem:[#allocation2 + $0x50] sm:$0xff] %v294
  %311 = vst [vmem:[#allocation2 + $0x58] sm:$0xff] %v295
  %312 = vst [vmem:[#allocation2 + $0x60] sm:$0xff] %v296
  %313 = vst [vmem:[#allocation2 + $0x68] sm:$0xff] %v297
  %314 = vst [vmem:[#allocation2 + $0x70] sm:$0xff] %v298
  %315 = vst [vmem:[#allocation2 + $0x78] sm:$0xff] %v299
  // Predicated region
  $region22: #{_lambda_.9} parent=0 // pred_check
    %p316 = pneg %p17
  $region23: #{_lambda_.9} parent=0 // pred_check_branch
    %318 = sbr.rel (%p316) target = $region25
  $region24: #{_lambda_.9} parent=0 // pred_region
    %v319 = vld [vmem:[#allocation2] sm:$0xff]
    %v320 = vld [vmem:[#allocation2 + $0x8] sm:$0xff]
    %v321 = vld [vmem:[#allocation2 + $0x10] sm:$0xff]
    %v322 = vld [vmem:[#allocation2 + $0x18] sm:$0xff]
    %v323 = vld [vmem:[#allocation2 + $0x20] sm:$0xff]
    %v324 = vld [vmem:[#allocation2 + $0x28] sm:$0xff]
    %v325 = vld [vmem:[#allocation2 + $0x30] sm:$0xff]
    %v326 = vld [vmem:[#allocation2 + $0x38] sm:$0xff]
    %v327 = vld [vmem:[#allocation2 + $0x40] sm:$0xff]
    %v328 = vld [vmem:[#allocation2 + $0x48] sm:$0xff]
    %v329 = vld [vmem:[#allocation2 + $0x50] sm:$0xff]
    %v330 = vld [vmem:[#allocation2 + $0x58] sm:$0xff]
    %v331 = vld [vmem:[#allocation2 + $0x60] sm:$0xff]
    %v332 = vld [vmem:[#allocation2 + $0x68] sm:$0xff]
    %v333 = vld [vmem:[#allocation2 + $0x70] sm:$0xff]
    %v334 = vld [vmem:[#allocation2 + $0x78] sm:$0xff]
    %v335 = vld [vmem:[%s2] sm:$0x1]
    %v337 = vlaneseq
    %v338 = vshrl.u32 %v337, 7
    %v339 = vsub.s32 0, %v338
    %v340 = vrot.slane %v335, %v339
    %v342 = vadd.f32 %v319, %v340
    %v343 = vadd.f32 %v320, %v340
    %v344 = vadd.f32 %v321, %v340
    %v345 = vadd.f32 %v322, %v340
    %v346 = vadd.f32 %v323, %v340
    %v347 = vadd.f32 %v324, %v340
    %v348 = vadd.f32 %v325, %v340
    %v349 = vadd.f32 %v326, %v340
    %v350 = vadd.f32 %v327, %v340
    %v351 = vadd.f32 %v328, %v340
    %v352 = vadd.f32 %v329, %v340
    %v353 = vadd.f32 %v330, %v340
    %v354 = vadd.f32 %v331, %v340
    %v355 = vadd.f32 %v332, %v340
    %v356 = vadd.f32 %v333, %v340
    %v357 = vadd.f32 %v334, %v340
    %v358 = vpack.c.bf16 %v343, %v342
    %v359 = vpack.c.bf16 %v345, %v344
    %v360 = vpack.c.bf16 %v347, %v346
    %v361 = vpack.c.bf16 %v349, %v348
    %v362 = vpack.c.bf16 %v351, %v350
    %v363 = vpack.c.bf16 %v353, %v352
    %v364 = vpack.c.bf16 %v355, %v354
    %v365 = vpack.c.bf16 %v357, %v356
    %v374 = vunpack.c.l.b16 %v358
    %v375 = vunpack.c.h.b16 %v358
    %v376 = vunpack.c.l.b16 %v359
    %v377 = vunpack.c.h.b16 %v359
    %v378 = vunpack.c.l.b16 %v360
    %v379 = vunpack.c.h.b16 %v360
    %v380 = vunpack.c.l.b16 %v361
    %v381 = vunpack.c.h.b16 %v361
    %v382 = vunpack.c.l.b16 %v362
    %v383 = vunpack.c.h.b16 %v362
    %v384 = vunpack.c.l.b16 %v363
    %v385 = vunpack.c.h.b16 %v363
    %v386 = vunpack.c.l.b16 %v364
    %v387 = vunpack.c.h.b16 %v364
    %v388 = vunpack.c.l.b16 %v365
    %v389 = vunpack.c.h.b16 %v365
    %v390 = vpack.c.b16 %v374, %v374
    %v391 = vpack.c.b16 %v375, %v375
    %v392 = vpack.c.b16 %v376, %v376
    %v393 = vpack.c.b16 %v377, %v377
    %v394 = vpack.c.b16 %v378, %v378
    %v395 = vpack.c.b16 %v379, %v379
    %v396 = vpack.c.b16 %v380, %v380
    %v397 = vpack.c.b16 %v381, %v381
    %v398 = vpack.c.b16 %v382, %v382
    %v399 = vpack.c.b16 %v383, %v383
    %v400 = vpack.c.b16 %v384, %v384
    %v401 = vpack.c.b16 %v385, %v385
    %v402 = vpack.c.b16 %v386, %v386
    %v403 = vpack.c.b16 %v387, %v387
    %v404 = vpack.c.b16 %v388, %v388
    %v405 = vpack.c.b16 %v389, %v389
    %422 = vst [vmem:[%s3] sm:$0xf] %v390
    %423 = vst [vmem:[%s3 + $0x4] sm:$0xf] %v391
    %424 = vst [vmem:[%s3 + $0x8] sm:$0xf] %v392
    %425 = vst [vmem:[%s3 + $0xc] sm:$0xf] %v393
    %426 = vst [vmem:[%s3 + $0x10] sm:$0xf] %v394
    %427 = vst [vmem:[%s3 + $0x14] sm:$0xf] %v395
    %428 = vst [vmem:[%s3 + $0x18] sm:$0xf] %v396
    %429 = vst [vmem:[%s3 + $0x1c] sm:$0xf] %v397
    %430 = vst [vmem:[%s3 + $0x20] sm:$0xf] %v398
    %431 = vst [vmem:[%s3 + $0x24] sm:$0xf] %v399
    %432 = vst [vmem:[%s3 + $0x28] sm:$0xf] %v400
    %433 = vst [vmem:[%s3 + $0x2c] sm:$0xf] %v401
    %434 = vst [vmem:[%s3 + $0x30] sm:$0xf] %v402
    %435 = vst [vmem:[%s3 + $0x34] sm:$0xf] %v403
    %436 = vst [vmem:[%s3 + $0x38] sm:$0xf] %v404
    %437 = vst [vmem:[%s3 + $0x3c] sm:$0xf] %v405
    %v438 = vadd.f32 %v342, %v343
    %v439 = vadd.f32 %v438, %v344
    %v440 = vadd.f32 %v439, %v345
    %v441 = vadd.f32 %v440, %v346
    %v442 = vadd.f32 %v441, %v347
    %v443 = vadd.f32 %v442, %v348
    %v444 = vadd.f32 %v443, %v349
    %v445 = vadd.f32 %v444, %v350
    %v446 = vadd.f32 %v445, %v351
    %v447 = vadd.f32 %v446, %v352
    %v448 = vadd.f32 %v447, %v353
    %v449 = vadd.f32 %v448, %v354
    %v450 = vadd.f32 %v449, %v355
    %v451 = vadd.f32 %v450, %v356
    %v452 = vadd.f32 %v451, %v357
    %v453 = vrot.slane %v452, 4
    %v454 = vadd.f32 %v452, %v453
    %v455 = vrot.slane %v454, 2
    %v456 = vadd.f32 %v454, %v455
    %v457 = vrot.slane %v456, 1
    %v458 = vadd.f32 %v456, %v457
    %v459 = vmul.f32 %v342, %v342
    %v460 = vmul.f32 %v343, %v343
    %v461 = vmul.f32 %v344, %v344
    %v462 = vmul.f32 %v345, %v345
    %v463 = vmul.f32 %v346, %v346
    %v464 = vmul.f32 %v347, %v347
    %v465 = vmul.f32 %v348, %v348
    %v466 = vmul.f32 %v349, %v349
    %v467 = vmul.f32 %v350, %v350
    %v468 = vmul.f32 %v351, %v351
    %v469 = vmul.f32 %v352, %v352
    %v470 = vmul.f32 %v353, %v353
    %v471 = vmul.f32 %v354, %v354
    %v472 = vmul.f32 %v355, %v355
    %v473 = vmul.f32 %v356, %v356
    %v474 = vmul.f32 %v357, %v357
    %v475 = vadd.f32 %v459, %v460
    %v476 = vadd.f32 %v475, %v461
    %v477 = vadd.f32 %v476, %v462
    %v478 = vadd.f32 %v477, %v463
    %v479 = vadd.f32 %v478, %v464
    %v480 = vadd.f32 %v479, %v465
    %v481 = vadd.f32 %v480, %v466
    %v482 = vadd.f32 %v481, %v467
    %v483 = vadd.f32 %v482, %v468
    %v484 = vadd.f32 %v483, %v469
    %v485 = vadd.f32 %v484, %v470
    %v486 = vadd.f32 %v485, %v471
    %v487 = vadd.f32 %v486, %v472
    %v488 = vadd.f32 %v487, %v473
    %v489 = vadd.f32 %v488, %v474
    %v490 = vrot.slane %v489, 4
    %v491 = vadd.f32 %v489, %v490
    %v492 = vrot.slane %v491, 2
    %v493 = vadd.f32 %v491, %v492
    %v494 = vrot.slane %v493, 1
    %v495 = vadd.f32 %v493, %v494
    %v496 = vld [vmem:[%s4] sm:$0x3]
    %vm497 = vcmask 1040384
    %v498 = vsel %vm497, %v458, %v495
    %v499 = vadd.f32 %v496, %v498
    %500 = vst [vmem:[%s4] sm:$0x3] %v499
  $region25: #{_lambda_.9} parent=0 // pred_fallthru
    _
  // Predicated region
  $region26: #{_lambda_.9} parent=0 // pred_check
    _
  $region27: #{_lambda_.9} parent=0 // pred_check_branch
    %502 = sbr.rel (0) target = $region29
  $region28: #{_lambda_.9} parent=0 // pred_region
    _
  $region29: #{_lambda_.9} parent=0 // pred_fallthru
    _
  // Predicated region
  $region30: #{_lambda_.9} parent=0 // pred_check
    _
  $region31: #{_lambda_.9} parent=0 // pred_check_branch
    %504 = sbr.rel (0) target = $region33
  $region32: #{_lambda_.9} parent=0 // pred_region
    _
  $region33: #{_lambda_.9} parent=0 // pred_fallthru
    _
  // Predicated region
  $region34: #{_lambda_.9} parent=0 // pred_check
    _
  $region35: #{_lambda_.9} parent=0 // pred_check_branch
    %506 = sbr.rel (0) target = $region37
  $region36: #{_lambda_.9} parent=0 // pred_region
    _
  $region37: #{_lambda_.9} parent=0 // pred_fallthru
    _
  // Predicated region
  $region38: #{_lambda_.9} parent=0 // pred_check
    _
  $region39: #{_lambda_.9} parent=0 // pred_check_branch
    %508 = sbr.rel (0) target = $region41
  $region40: #{_lambda_.9} parent=0 // pred_region
    _
  $region41: #{_lambda_.9} parent=0 // pred_fallthru
    _

// kernel: _lambda_.10
$region0: #{_lambda_.10}
  #allocation0 [shape = 'u32[]', space=smem, size = 0x4, offset = 0x4, fixed_abs, tag = 'smem constant byte address 0x4 - core index']
  #allocation1 [shape = 'u32[144,128]{1,0:T(1,128)}', space=vmem, size = 0x12000, scoped, tag = 'internal scratch']
  %s0 = inlined_call_operand.vmem [shape: bf16[128,128], index: 0, kind: input, shape index: {}]
  %s1 = inlined_call_operand.vmem [shape: f32[1,128], index: 1, kind: input, shape index: {}]
  %s2 = inlined_call_operand.vmem [shape: f32[1,128], index: 2, kind: input, shape index: {}]
  %s3 = inlined_call_operand.vmem [shape: bf16[128,128], index: 3, kind: output, shape index: {}]
  %s4 = sld [smem:[#allocation0]]
  $region22: #{_lambda_.10} parent=0
    _
  %s6 = ssub.s32 1, %s4
  %s7 = scalar_select 0, %s6, %s4
  // Predicated region
  $region2: #{_lambda_.10} parent=0 // pred_check
    _
  $region3: #{_lambda_.10} parent=0 // pred_check_branch
    %9 = sbr.rel (0) target = $region5
  $region4: #{_lambda_.10} parent=0 // pred_region
    _
  $region5: #{_lambda_.10} parent=0 // pred_fallthru
    _
  // Predicated region
  $region6: #{_lambda_.10} parent=0 // pred_check
    _
  $region7: #{_lambda_.10} parent=0 // pred_check_branch
    %11 = sbr.rel (0) target = $region9
  $region8: #{_lambda_.10} parent=0 // pred_region
    _
  $region9: #{_lambda_.10} parent=0 // pred_fallthru
    _
  // Predicated region
  $region10: #{_lambda_.10} parent=0 // pred_check
    _
  $region11: #{_lambda_.10} parent=0 // pred_check_branch
    %13 = sbr.rel (0) target = $region13
  $region12: #{_lambda_.10} parent=0 // pred_region
    _
  $region13: #{_lambda_.10} parent=0 // pred_fallthru
    _
  %v14 = vld [vmem:[%s0] sm:$0xf]
  %v15 = vld [vmem:[%s0 + $0x4] sm:$0xf]
  %v16 = vld [vmem:[%s0 + $0x8] sm:$0xf]
  %v17 = vld [vmem:[%s0 + $0xc] sm:$0xf]
  %v18 = vld [vmem:[%s0 + $0x10] sm:$0xf]
  %v19 = vld [vmem:[%s0 + $0x14] sm:$0xf]
  %v20 = vld [vmem:[%s0 + $0x18] sm:$0xf]
  %v21 = vld [vmem:[%s0 + $0x1c] sm:$0xf]
  %v22 = vld [vmem:[%s0 + $0x20] sm:$0xf]
  %v23 = vld [vmem:[%s0 + $0x24] sm:$0xf]
  %v24 = vld [vmem:[%s0 + $0x28] sm:$0xf]
  %v25 = vld [vmem:[%s0 + $0x2c] sm:$0xf]
  %v26 = vld [vmem:[%s0 + $0x30] sm:$0xf]
  %v27 = vld [vmem:[%s0 + $0x34] sm:$0xf]
  %v28 = vld [vmem:[%s0 + $0x38] sm:$0xf]
  %v29 = vld [vmem:[%s0 + $0x3c] sm:$0xf]
  %v30 = vunpack.c.l.bf16 %v14
  %v31 = vunpack.c.l.bf16 %v15
  %v32 = vunpack.c.l.bf16 %v16
  %v33 = vunpack.c.l.bf16 %v17
  %v34 = vunpack.c.l.bf16 %v18
  %v35 = vunpack.c.l.bf16 %v19
  %v36 = vunpack.c.l.bf16 %v20
  %v37 = vunpack.c.l.bf16 %v21
  %v38 = vunpack.c.l.bf16 %v22
  %v39 = vunpack.c.l.bf16 %v23
  %v40 = vunpack.c.l.bf16 %v24
  %v41 = vunpack.c.l.bf16 %v25
  %v42 = vunpack.c.l.bf16 %v26
  %v43 = vunpack.c.l.bf16 %v27
  %v44 = vunpack.c.l.bf16 %v28
  %v45 = vunpack.c.l.bf16 %v29
  %v46 = vld [vmem:[%s1] sm:$0x1]
  %v48 = vlaneseq
  %v49 = vshrl.u32 %v48, 7
  %v50 = vsub.s32 0, %v49
  %v51 = vrot.slane %v46, %v50
  %v53 = vmul.f32 %v30, %v51
  %v54 = vmul.f32 %v31, %v51
  %v55 = vmul.f32 %v32, %v51
  %v56 = vmul.f32 %v33, %v51
  %v57 = vmul.f32 %v34, %v51
  %v58 = vmul.f32 %v35, %v51
  %v59 = vmul.f32 %v36, %v51
  %v60 = vmul.f32 %v37, %v51
  %v61 = vmul.f32 %v38, %v51
  %v62 = vmul.f32 %v39, %v51
  %v63 = vmul.f32 %v40, %v51
  %v64 = vmul.f32 %v41, %v51
  %v65 = vmul.f32 %v42, %v51
  %v66 = vmul.f32 %v43, %v51
  %v67 = vmul.f32 %v44, %v51
  %v68 = vmul.f32 %v45, %v51
  %v69 = vld [vmem:[%s2] sm:$0x1]
  %v71 = vlaneseq
  %v72 = vshrl.u32 %v71, 7
  %v73 = vsub.s32 0, %v72
  %v74 = vrot.slane %v69, %v73
  %v76 = vadd.f32 %v53, %v74
  %v77 = vadd.f32 %v54, %v74
  %v78 = vadd.f32 %v55, %v74
  %v79 = vadd.f32 %v56, %v74
  %v80 = vadd.f32 %v57, %v74
  %v81 = vadd.f32 %v58, %v74
  %v82 = vadd.f32 %v59, %v74
  %v83 = vadd.f32 %v60, %v74
  %v84 = vadd.f32 %v61, %v74
  %v85 = vadd.f32 %v62, %v74
  %v86 = vadd.f32 %v63, %v74
  %v87 = vadd.f32 %v64, %v74
  %v88 = vadd.f32 %v65, %v74
  %v89 = vadd.f32 %v66, %v74
  %v90 = vadd.f32 %v67, %v74
  %v91 = vadd.f32 %v68, %v74
  %vm92 = vcmp.ge.f32.partialorder %v76, 0.0
  %vm93 = vcmp.ge.f32.partialorder %v77, 0.0
  %vm94 = vcmp.ge.f32.partialorder %v78, 0.0
  %vm95 = vcmp.ge.f32.partialorder %v79, 0.0
  %vm96 = vcmp.ge.f32.partialorder %v80, 0.0
  %vm97 = vcmp.ge.f32.partialorder %v81, 0.0
  %vm98 = vcmp.ge.f32.partialorder %v82, 0.0
  %vm99 = vcmp.ge.f32.partialorder %v83, 0.0
  %vm100 = vcmp.ge.f32.partialorder %v84, 0.0
  %vm101 = vcmp.ge.f32.partialorder %v85, 0.0
  %vm102 = vcmp.ge.f32.partialorder %v86, 0.0
  %vm103 = vcmp.ge.f32.partialorder %v87, 0.0
  %vm104 = vcmp.ge.f32.partialorder %v88, 0.0
  %vm105 = vcmp.ge.f32.partialorder %v89, 0.0
  %vm106 = vcmp.ge.f32.partialorder %v90, 0.0
  %vm107 = vcmp.ge.f32.partialorder %v91, 0.0
  %v108 = vmul.f32 %v76, 0.2
  %v109 = vmul.f32 %v77, 0.2
  %v110 = vmul.f32 %v78, 0.2
  %v111 = vmul.f32 %v79, 0.2
  %v112 = vmul.f32 %v80, 0.2
  %v113 = vmul.f32 %v81, 0.2
  %v114 = vmul.f32 %v82, 0.2
  %v115 = vmul.f32 %v83, 0.2
  %v116 = vmul.f32 %v84, 0.2
  %v117 = vmul.f32 %v85, 0.2
  %v118 = vmul.f32 %v86, 0.2
  %v119 = vmul.f32 %v87, 0.2
  %v120 = vmul.f32 %v88, 0.2
  %v121 = vmul.f32 %v89, 0.2
  %v122 = vmul.f32 %v90, 0.2
  %v123 = vmul.f32 %v91, 0.2
  %v124 = vsel %vm92, %v76, %v108
  %v125 = vsel %vm93, %v77, %v109
  %v126 = vsel %vm94, %v78, %v110
  %v127 = vsel %vm95, %v79, %v111
  %v128 = vsel %vm96, %v80, %v112
  %v129 = vsel %vm97, %v81, %v113
  %v130 = vsel %vm98, %v82, %v114
  %v131 = vsel %vm99, %v83, %v115
  %v132 = vsel %vm100, %v84, %v116
  %v133 = vsel %vm101, %v85, %v117
  %v134 = vsel %vm102, %v86, %v118
  %v135 = vsel %vm103, %v87, %v119
  %v136 = vsel %vm104, %v88, %v120
  %v137 = vsel %vm105, %v89, %v121
  %v138 = vsel %vm106, %v90, %v122
  %v139 = vsel %vm107, %v91, %v123
  %v140 = vpack.c.bf16 %v125, %v124
  %v141 = vpack.c.bf16 %v127, %v126
  %v142 = vpack.c.bf16 %v129, %v128
  %v143 = vpack.c.bf16 %v131, %v130
  %v144 = vpack.c.bf16 %v133, %v132
  %v145 = vpack.c.bf16 %v135, %v134
  %v146 = vpack.c.bf16 %v137, %v136
  %v147 = vpack.c.bf16 %v139, %v138
  %v156 = vunpack.c.l.b16 %v140
  %v157 = vunpack.c.h.b16 %v140
  %v158 = vunpack.c.l.b16 %v141
  %v159 = vunpack.c.h.b16 %v141
  %v160 = vunpack.c.l.b16 %v142
  %v161 = vunpack.c.h.b16 %v142
  %v162 = vunpack.c.l.b16 %v143
  %v163 = vunpack.c.h.b16 %v143
  %v164 = vunpack.c.l.b16 %v144
  %v165 = vunpack.c.h.b16 %v144
  %v166 = vunpack.c.l.b16 %v145
  %v167 = vunpack.c.h.b16 %v145
  %v168 = vunpack.c.l.b16 %v146
  %v169 = vunpack.c.h.b16 %v146
  %v170 = vunpack.c.l.b16 %v147
  %v171 = vunpack.c.h.b16 %v147
  %v172 = vpack.c.b16 %v156, %v156
  %v173 = vpack.c.b16 %v157, %v157
  %v174 = vpack.c.b16 %v158, %v158
  %v175 = vpack.c.b16 %v159, %v159
  %v176 = vpack.c.b16 %v160, %v160
  %v177 = vpack.c.b16 %v161, %v161
  %v178 = vpack.c.b16 %v162, %v162
  %v179 = vpack.c.b16 %v163, %v163
  %v180 = vpack.c.b16 %v164, %v164
  %v181 = vpack.c.b16 %v165, %v165
  %v182 = vpack.c.b16 %v166, %v166
  %v183 = vpack.c.b16 %v167, %v167
  %v184 = vpack.c.b16 %v168, %v168
  %v185 = vpack.c.b16 %v169, %v169
  %v186 = vpack.c.b16 %v170, %v170
  %v187 = vpack.c.b16 %v171, %v171
  %204 = vst [vmem:[%s3] sm:$0xf] %v172
  %205 = vst [vmem:[%s3 + $0x4] sm:$0xf] %v173
  %206 = vst [vmem:[%s3 + $0x8] sm:$0xf] %v174
  %207 = vst [vmem:[%s3 + $0xc] sm:$0xf] %v175
  %208 = vst [vmem:[%s3 + $0x10] sm:$0xf] %v176
  %209 = vst [vmem:[%s3 + $0x14] sm:$0xf] %v177
  %210 = vst [vmem:[%s3 + $0x18] sm:$0xf] %v178
  %211 = vst [vmem:[%s3 + $0x1c] sm:$0xf] %v179
  %212 = vst [vmem:[%s3 + $0x20] sm:$0xf] %v180
  %213 = vst [vmem:[%s3 + $0x24] sm:$0xf] %v181
  %214 = vst [vmem:[%s3 + $0x28] sm:$0xf] %v182
  %215 = vst [vmem:[%s3 + $0x2c] sm:$0xf] %v183
  %216 = vst [vmem:[%s3 + $0x30] sm:$0xf] %v184
  %217 = vst [vmem:[%s3 + $0x34] sm:$0xf] %v185
  %218 = vst [vmem:[%s3 + $0x38] sm:$0xf] %v186
  %219 = vst [vmem:[%s3 + $0x3c] sm:$0xf] %v187
  // Predicated region
  $region14: #{_lambda_.10} parent=0 // pred_check
    _
  $region15: #{_lambda_.10} parent=0 // pred_check_branch
    %221 = sbr.rel (0) target = $region17
  $region16: #{_lambda_.10} parent=0 // pred_region
    _
  $region17: #{_lambda_.10} parent=0 // pred_fallthru
    _
  // Predicated region
  $region18: #{_lambda_.10} parent=0 // pred_check
    _
  $region19: #{_lambda_.10} parent=0 // pred_check_branch
    %223 = sbr.rel (0) target = $region21
  $region20: #{_lambda_.10} parent=0 // pred_region
    _
  $region21: #{_lambda_.10} parent=0 // pred_fallthru
    _

// kernel: _lambda_.11
$region0: #{_lambda_.11}
  #allocation0 [shape = 'u32[]', space=smem, size = 0x4, offset = 0x4, fixed_abs, tag = 'smem constant byte address 0x4 - core index']
  #allocation1 [shape = 'u32[144,128]{1,0:T(1,128)}', space=vmem, size = 0x12000, scoped, tag = 'internal scratch']
  #allocation2 [shape = 'f32[32,128]{1,0:T(8,128)}', space=vmem, size = 0x4000, scoped, tag = 'scratch operand']
  %s0 = inlined_call_operand.vmem [shape: bf16[32,256], index: 0, kind: input, shape index: {}]
  %s1 = inlined_call_operand.vmem [shape: bf16[256,128], index: 1, kind: input, shape index: {}]
  %s2 = inlined_call_operand.vmem [shape: f32[1,128], index: 2, kind: input, shape index: {}]
  %s3 = inlined_call_operand.vmem [shape: bf16[32,128], index: 3, kind: output, shape index: {0}]
  %s4 = inlined_call_operand.vmem [shape: f32[8,128], index: 4, kind: output, shape index: {1}]
  %5 = xla_tuple %s3, %s4
  %s6 = sld [smem:[#allocation0]]
  $region42: #{_lambda_.11} parent=0
    _
  %s8 = ssub.s32 1, %s6
  %s9 = scalar_select 0, %s8, %s6
  // Predicated region
  $region2: #{_lambda_.11} parent=0 // pred_check
    _
  $region3: #{_lambda_.11} parent=0 // pred_check_branch
    %11 = sbr.rel (0) target = $region5
  $region4: #{_lambda_.11} parent=0 // pred_region
    _
  $region5: #{_lambda_.11} parent=0 // pred_fallthru
    _
  // Predicated region
  $region6: #{_lambda_.11} parent=0 // pred_check
    _
  $region7: #{_lambda_.11} parent=0 // pred_check_branch
    %13 = sbr.rel (0) target = $region9
  $region8: #{_lambda_.11} parent=0 // pred_region
    _
  $region9: #{_lambda_.11} parent=0 // pred_fallthru
    _
  // Predicated region
  $region10: #{_lambda_.11} parent=0 // pred_check
    _
  $region11: #{_lambda_.11} parent=0 // pred_check_branch
    %15 = sbr.rel (0) target = $region13
  $region12: #{_lambda_.11} parent=0 // pred_region
    _
  $region13: #{_lambda_.11} parent=0 // pred_fallthru
    _
  %p17 = scmp.eq.s32.totalorder 0, 0
  // Predicated region
  $region14: #{_lambda_.11} parent=0 // pred_check
    %p18 = pneg %p17
  $region15: #{_lambda_.11} parent=0 // pred_check_branch
    %20 = sbr.rel (%p18) target = $region17
  $region16: #{_lambda_.11} parent=0 // pred_region
    %21 = vst [vmem:[#allocation2] sm:$0xff] 0.0
    %22 = vst [vmem:[#allocation2 + $0x8] sm:$0xff] 0.0
    %23 = vst [vmem:[#allocation2 + $0x10] sm:$0xff] 0.0
    %24 = vst [vmem:[#allocation2 + $0x18] sm:$0xff] 0.0
  $region17: #{_lambda_.11} parent=0 // pred_fallthru
    _
  %p25 = scmp.eq.s32.totalorder 0, 0
  %p26 = pnand %p25, %p17
  %p27 = pneg %p26
  // Predicated region
  $region18: #{_lambda_.11} parent=0 // pred_check
    _
  $region19: #{_lambda_.11} parent=0 // pred_check_branch
    %29 = sbr.rel (%p26) target = $region21
  $region20: #{_lambda_.11} parent=0 // pred_region
    %30 = vst [vmem:[%s4] sm:$0xff] 0.0
  $region21: #{_lambda_.11} parent=0 // pred_fallthru
    _
  %v31 = vld [vmem:[#allocation2] sm:$0xff]
  %v32 = vld [vmem:[#allocation2 + $0x8] sm:$0xff]
  %v33 = vld [vmem:[#allocation2 + $0x10] sm:$0xff]
  %v34 = vld [vmem:[#allocation2 + $0x18] sm:$0xff]
  %v35 = vld [vmem:[%s0] sm:$0xff]
  %v36 = vld [vmem:[%s0 + $0x8] sm:$0xff]
  %v37 = vld [vmem:[%s0 + $0x10] sm:$0xff]
  %v38 = vld [vmem:[%s0 + $0x18] sm:$0xff]
  %v39 = vld [vmem:[%s1] sm:$0xf]
  %v40 = vld [vmem:[%s1 + $0x4] sm:$0xf]
  %v41 = vld [vmem:[%s1 + $0x8] sm:$0xf]
  %v42 = vld [vmem:[%s1 + $0xc] sm:$0xf]
  %v43 = vld [vmem:[%s1 + $0x10] sm:$0xf]
  %v44 = vld [vmem:[%s1 + $0x14] sm:$0xf]
  %v45 = vld [vmem:[%s1 + $0x18] sm:$0xf]
  %v46 = vld [vmem:[%s1 + $0x1c] sm:$0xf]
  %v47 = vld [vmem:[%s1 + $0x20] sm:$0xf]
  %v48 = vld [vmem:[%s1 + $0x24] sm:$0xf]
  %v49 = vld [vmem:[%s1 + $0x28] sm:$0xf]
  %v50 = vld [vmem:[%s1 + $0x2c] sm:$0xf]
  %v51 = vld [vmem:[%s1 + $0x30] sm:$0xf]
  %v52 = vld [vmem:[%s1 + $0x34] sm:$0xf]
  %v53 = vld [vmem:[%s1 + $0x38] sm:$0xf]
  %v54 = vld [vmem:[%s1 + $0x3c] sm:$0xf]
  %v55 = vld [vmem:[%s1 + $0x40] sm:$0xf]
  %v56 = vld [vmem:[%s1 + $0x44] sm:$0xf]
  %v57 = vld [vmem:[%s1 + $0x48] sm:$0xf]
  %v58 = vld [vmem:[%s1 + $0x4c] sm:$0xf]
  %v59 = vld [vmem:[%s1 + $0x50] sm:$0xf]
  %v60 = vld [vmem:[%s1 + $0x54] sm:$0xf]
  %v61 = vld [vmem:[%s1 + $0x58] sm:$0xf]
  %v62 = vld [vmem:[%s1 + $0x5c] sm:$0xf]
  %v63 = vld [vmem:[%s1 + $0x60] sm:$0xf]
  %v64 = vld [vmem:[%s1 + $0x64] sm:$0xf]
  %v65 = vld [vmem:[%s1 + $0x68] sm:$0xf]
  %v66 = vld [vmem:[%s1 + $0x6c] sm:$0xf]
  %v67 = vld [vmem:[%s1 + $0x70] sm:$0xf]
  %v68 = vld [vmem:[%s1 + $0x74] sm:$0xf]
  %v69 = vld [vmem:[%s1 + $0x78] sm:$0xf]
  %v70 = vld [vmem:[%s1 + $0x7c] sm:$0xf]
  %v75 = vunpack.c.l.b16 %v35
  %v76 = vunpack.c.h.b16 %v35
  %v77 = vunpack.c.l.b16 %v36
  %v78 = vunpack.c.h.b16 %v36
  %v79 = vunpack.c.l.b16 %v37
  %v80 = vunpack.c.h.b16 %v37
  %v81 = vunpack.c.l.b16 %v38
  %v82 = vunpack.c.h.b16 %v38
  %v83 = vpack.c.b16 %v77, %v75
  %v84 = vpack.c.b16 %v78, %v76
  %v85 = vpack.c.b16 %v81, %v79
  %v86 = vpack.c.b16 %v82, %v80
  %v123 = vunpack.c.l.b16 %v39
  %v124 = vunpack.c.l.b16 %v40
  %v125 = vunpack.c.l.b16 %v41
  %v126 = vunpack.c.l.b16 %v42
  %v127 = vunpack.c.l.b16 %v43
  %v128 = vunpack.c.l.b16 %v44
  %v129 = vunpack.c.l.b16 %v45
  %v130 = vunpack.c.l.b16 %v46
  %v131 = vunpack.c.l.b16 %v47
  %v132 = vunpack.c.l.b16 %v48
  %v133 = vunpack.c.l.b16 %v49
  %v134 = vunpack.c.l.b16 %v50
  %v135 = vunpack.c.l.b16 %v51
  %v136 = vunpack.c.l.b16 %v52
  %v137 = vunpack.c.l.b16 %v53
  %v138 = vunpack.c.l.b16 %v54
  %v139 = vunpack.c.l.b16 %v55
  %v140 = vunpack.c.l.b16 %v56
  %v141 = vunpack.c.l.b16 %v57
  %v142 = vunpack.c.l.b16 %v58
  %v143 = vunpack.c.l.b16 %v59
  %v144 = vunpack.c.l.b16 %v60
  %v145 = vunpack.c.l.b16 %v61
  %v146 = vunpack.c.l.b16 %v62
  %v147 = vunpack.c.l.b16 %v63
  %v148 = vunpack.c.l.b16 %v64
  %v149 = vunpack.c.l.b16 %v65
  %v150 = vunpack.c.l.b16 %v66
  %v151 = vunpack.c.l.b16 %v67
  %v152 = vunpack.c.l.b16 %v68
  %v153 = vunpack.c.l.b16 %v69
  %v154 = vunpack.c.l.b16 %v70
  %v155 = vpack.c.b16 %v124, %v123
  %v156 = vpack.c.b16 %v126, %v125
  %v157 = vpack.c.b16 %v128, %v127
  %v158 = vpack.c.b16 %v130, %v129
  %v159 = vpack.c.b16 %v132, %v131
  %v160 = vpack.c.b16 %v134, %v133
  %v161 = vpack.c.b16 %v136, %v135
  %v162 = vpack.c.b16 %v138, %v137
  %v163 = vpack.c.b16 %v140, %v139
  %v164 = vpack.c.b16 %v142, %v141
  %v165 = vpack.c.b16 %v144, %v143
  %v166 = vpack.c.b16 %v146, %v145
  %v167 = vpack.c.b16 %v148, %v147
  %v168 = vpack.c.b16 %v150, %v149
  %v169 = vpack.c.b16 %v152, %v151
  %v170 = vpack.c.b16 %v154, %v153
  %187 = vmatprep.subr.bf16.mxu0 0
  %188 = vmatpush1.bf16.msra.mxu0 %v155
  %189 = vmatprep.subr.bf16.mxu0 0
  %190 = vmatpush1.bf16.msra.mxu0 %v156
  %191 = vmatprep.subr.bf16.mxu0 0
  %192 = vmatpush1.bf16.msra.mxu0 %v157
  %193 = vmatprep.subr.bf16.mxu0 0
  %194 = vmatpush1.bf16.msra.mxu0 %v158
  %195 = vmatprep.subr.bf16.mxu0 0
  %196 = vmatpush1.bf16.msra.mxu0 %v159
  %197 = vmatprep.subr.bf16.mxu0 0
  %198 = vmatpush1.bf16.msra.mxu0 %v160
  %199 = vmatprep.subr.bf16.mxu0 0
  %200 = vmatpush1.bf16.msra.mxu0 %v161
  %201 = vmatprep.subr.bf16.mxu0 0
  %202 = vmatpush1.bf16.msra.mxu0 %v162
  %203 = vmatprep.subr.bf16.mxu0 0
  %204 = vmatpush1.bf16.msra.mxu0 %v163
  %205 = vmatprep.subr.bf16.mxu0 0
  %206 = vmatpush1.bf16.msra.mxu0 %v164
  %207 = vmatprep.subr.bf16.mxu0 0
  %208 = vmatpush1.bf16.msra.mxu0 %v165
  %209 = vmatprep.subr.bf16.mxu0 0
  %210 = vmatpush1.bf16.msra.mxu0 %v166
  %211 = vmatprep.subr.bf16.mxu0 0
  %212 = vmatpush1.bf16.msra.mxu0 %v167
  %213 = vmatprep.subr.bf16.mxu0 0
  %214 = vmatpush1.bf16.msra.mxu0 %v168
  %215 = vmatprep.subr.bf16.mxu0 0
  %216 = vmatpush1.bf16.msra.mxu0 %v169
  %217 = vmatprep.subr.bf16.mxu0 0
  %218 = vmatpush1.bf16.msra.mxu0 %v170
  %219 = vmatprep.mubr.bf16.mxu0 %v84
  %220 = vmatmul.mubr.bf16.gmra.mrb[0].mxu0 %v83
  %v221 = vpop.f32.mrb[0].mxu0
  %v222 = vadd.f32 0.0, %v221
  %v223 = vpop.f32.mrb[0].mxu0
  %v224 = vpop.f32.mrb[0].mxu0
  %v225 = vadd.f32 0.0, %v224
  %v226 = vpop.f32.mrb[0].mxu0
  %227 = vmatprep.mubr.bf16.mxu0 %v86
  %228 = vmatmul.mubr.bf16.gmra.mrb[0].mxu0 %v85
  %v229 = vpop.f32.mrb[0].mxu0
  %v230 = vadd.f32 0.0, %v229
  %v231 = vpop.f32.mrb[0].mxu0
  %v232 = vpop.f32.mrb[0].mxu0
  %v233 = vadd.f32 0.0, %v232
  %v234 = vpop.f32.mrb[0].mxu0
  %235 = vdwg.mxu0
  %v236 = vadd.f32 %v31, %v222
  %v237 = vadd.f32 %v32, %v225
  %v238 = vadd.f32 %v33, %v230
  %v239 = vadd.f32 %v34, %v233
  %240 = vst [vmem:[#allocation2] sm:$0xff] %v236
  %241 = vst [vmem:[#allocation2 + $0x8] sm:$0xff] %v237
  %242 = vst [vmem:[#allocation2 + $0x10] sm:$0xff] %v238
  %243 = vst [vmem:[#allocation2 + $0x18] sm:$0xff] %v239
  // Predicated region
  $region22: #{_lambda_.11} parent=0 // pred_check
    %p244 = pneg %p17
  $region23: #{_lambda_.11} parent=0 // pred_check_branch
    %246 = sbr.rel (%p244) target = $region25
  $region24: #{_lambda_.11} parent=0 // pred_region
    %v247 = vld [vmem:[#allocation2] sm:$0xff]
    %v248 = vld [vmem:[#allocation2 + $0x8] sm:$0xff]
    %v249 = vld [vmem:[#allocation2 + $0x10] sm:$0xff]
    %v250 = vld [vmem:[#allocation2 + $0x18] sm:$0xff]
    %v251 = vld [vmem:[%s2] sm:$0x1]
    %v253 = vlaneseq
    %v254 = vshrl.u32 %v253, 7
    %v255 = vsub.s32 0, %v254
    %v256 = vrot.slane %v251, %v255
    %v258 = vadd.f32 %v247, %v256
    %v259 = vadd.f32 %v248, %v256
    %v260 = vadd.f32 %v249, %v256
    %v261 = vadd.f32 %v250, %v256
    %v262 = vpack.c.bf16 %v259, %v258
    %v263 = vpack.c.bf16 %v261, %v260
    %v266 = vunpack.c.l.b16 %v262
    %v267 = vunpack.c.h.b16 %v262
    %v268 = vunpack.c.l.b16 %v263
    %v269 = vunpack.c.h.b16 %v263
    %v270 = vpack.c.b16 %v266, %v266
    %v271 = vpack.c.b16 %v267, %v267
    %v272 = vpack.c.b16 %v268, %v268
    %v273 = vpack.c.b16 %v269, %v269
    %278 = vst [vmem:[%s3] sm:$0xf] %v270
    %279 = vst [vmem:[%s3 + $0x4] sm:$0xf] %v271
    %280 = vst [vmem:[%s3 + $0x8] sm:$0xf] %v272
    %281 = vst [vmem:[%s3 + $0xc] sm:$0xf] %v273
    %v282 = vadd.f32 %v258, %v259
    %v283 = vadd.f32 %v282, %v260
    %v284 = vadd.f32 %v283, %v261
    %v285 = vrot.slane %v284, 4
    %v286 = vadd.f32 %v284, %v285
    %v287 = vrot.slane %v286, 2
    %v288 = vadd.f32 %v286, %v287
    %v289 = vrot.slane %v288, 1
    %v290 = vadd.f32 %v288, %v289
    %v291 = vmul.f32 %v258, %v258
    %v292 = vmul.f32 %v259, %v259
    %v293 = vmul.f32 %v260, %v260
    %v294 = vmul.f32 %v261, %v261
    %v295 = vadd.f32 %v291, %v292
    %v296 = vadd.f32 %v295, %v293
    %v297 = vadd.f32 %v296, %v294
    %v298 = vrot.slane %v297, 4
    %v299 = vadd.f32 %v297, %v298
    %v300 = vrot.slane %v299, 2
    %v301 = vadd.f32 %v299, %v300
    %v302 = vrot.slane %v301, 1
    %v303 = vadd.f32 %v301, %v302
    %v304 = vld [vmem:[%s4] sm:$0x3]
    %vm305 = vcmask 1040384
    %v306 = vsel %vm305, %v290, %v303
    %v307 = vadd.f32 %v304, %v306
    %308 = vst [vmem:[%s4] sm:$0x3] %v307
  $region25: #{_lambda_.11} parent=0 // pred_fallthru
    _
  // Predicated region
  $region26: #{_lambda_.11} parent=0 // pred_check
    _
  $region27: #{_lambda_.11} parent=0 // pred_check_branch
    %310 = sbr.rel (0) target = $region29
  $region28: #{_lambda_.11} parent=0 // pred_region
    _
  $region29: #{_lambda_.11} parent=0 // pred_fallthru
    _
  // Predicated region
  $region30: #{_lambda_.11} parent=0 // pred_check
    _
  $region31: #{_lambda_.11} parent=0 // pred_check_branch
    %312 = sbr.rel (0) target = $region33
  $region32: #{_lambda_.11} parent=0 // pred_region
    _
  $region33: #{_lambda_.11} parent=0 // pred_fallthru
    _
  // Predicated region
  $region34: #{_lambda_.11} parent=0 // pred_check
    _
  $region35: #{_lambda_.11} parent=0 // pred_check_branch
    %314 = sbr.rel (0) target = $region37
  $region36: #{_lambda_.11} parent=0 // pred_region
    _
  $region37: #{_lambda_.11} parent=0 // pred_fallthru
    _
  // Predicated region
  $region38: #{_lambda_.11} parent=0 // pred_check
    _
  $region39: #{_lambda_.11} parent=0 // pred_check_branch
    %316 = sbr.rel (0) target = $region41
  $region40: #{_lambda_.11} parent=0 // pred_region
    _
  $region41: #{_lambda_.11} parent=0 // pred_fallthru
    _

// kernel: _lambda_.12
$region0: #{_lambda_.12}
  #allocation0 [shape = 'u32[]', space=smem, size = 0x4, offset = 0x4, fixed_abs, tag = 'smem constant byte address 0x4 - core index']
  #allocation1 [shape = 'u32[144,128]{1,0:T(1,128)}', space=vmem, size = 0x12000, scoped, tag = 'internal scratch']
  %s0 = inlined_call_operand.vmem [shape: bf16[32,128], index: 0, kind: input, shape index: {}]
  %s1 = inlined_call_operand.vmem [shape: f32[1,128], index: 1, kind: input, shape index: {}]
  %s2 = inlined_call_operand.vmem [shape: f32[1,128], index: 2, kind: input, shape index: {}]
  %s3 = inlined_call_operand.vmem [shape: bf16[32,128], index: 3, kind: output, shape index: {}]
  %s4 = sld [smem:[#allocation0]]
  $region22: #{_lambda_.12} parent=0
    _
  %s6 = ssub.s32 1, %s4
  %s7 = scalar_select 0, %s6, %s4
  // Predicated region
  $region2: #{_lambda_.12} parent=0 // pred_check
    _
  $region3: #{_lambda_.12} parent=0 // pred_check_branch
    %9 = sbr.rel (0) target = $region5
  $region4: #{_lambda_.12} parent=0 // pred_region
    _
  $region5: #{_lambda_.12} parent=0 // pred_fallthru
    _
  // Predicated region
  $region6: #{_lambda_.12} parent=0 // pred_check
    _
  $region7: #{_lambda_.12} parent=0 // pred_check_branch
    %11 = sbr.rel (0) target = $region9
  $region8: #{_lambda_.12} parent=0 // pred_region
    _
  $region9: #{_lambda_.12} parent=0 // pred_fallthru
    _
  // Predicated region
  $region10: #{_lambda_.12} parent=0 // pred_check
    _
  $region11: #{_lambda_.12} parent=0 // pred_check_branch
    %13 = sbr.rel (0) target = $region13
  $region12: #{_lambda_.12} parent=0 // pred_region
    _
  $region13: #{_lambda_.12} parent=0 // pred_fallthru
    _
  %v14 = vld [vmem:[%s0] sm:$0xf]
  %v15 = vld [vmem:[%s0 + $0x4] sm:$0xf]
  %v16 = vld [vmem:[%s0 + $0x8] sm:$0xf]
  %v17 = vld [vmem:[%s0 + $0xc] sm:$0xf]
  %v18 = vunpack.c.l.bf16 %v14
  %v19 = vunpack.c.l.bf16 %v15
  %v20 = vunpack.c.l.bf16 %v16
  %v21 = vunpack.c.l.bf16 %v17
  %v22 = vld [vmem:[%s1] sm:$0x1]
  %v24 = vlaneseq
  %v25 = vshrl.u32 %v24, 7
  %v26 = vsub.s32 0, %v25
  %v27 = vrot.slane %v22, %v26
  %v29 = vmul.f32 %v18, %v27
  %v30 = vmul.f32 %v19, %v27
  %v31 = vmul.f32 %v20, %v27
  %v32 = vmul.f32 %v21, %v27
  %v33 = vld [vmem:[%s2] sm:$0x1]
  %v35 = vlaneseq
  %v36 = vshrl.u32 %v35, 7
  %v37 = vsub.s32 0, %v36
  %v38 = vrot.slane %v33, %v37
  %v40 = vadd.f32 %v29, %v38
  %v41 = vadd.f32 %v30, %v38
  %v42 = vadd.f32 %v31, %v38
  %v43 = vadd.f32 %v32, %v38
  %vm44 = vcmp.ge.f32.partialorder %v40, 0.0
  %vm45 = vcmp.ge.f32.partialorder %v41, 0.0
  %vm46 = vcmp.ge.f32.partialorder %v42, 0.0
  %vm47 = vcmp.ge.f32.partialorder %v43, 0.0
  %v48 = vmul.f32 %v40, 0.2
  %v49 = vmul.f32 %v41, 0.2
  %v50 = vmul.f32 %v42, 0.2
  %v51 = vmul.f32 %v43, 0.2
  %v52 = vsel %vm44, %v40, %v48
  %v53 = vsel %vm45, %v41, %v49
  %v54 = vsel %vm46, %v42, %v50
  %v55 = vsel %vm47, %v43, %v51
  %v56 = vpack.c.bf16 %v53, %v52
  %v57 = vpack.c.bf16 %v55, %v54
  %v60 = vunpack.c.l.b16 %v56
  %v61 = vunpack.c.h.b16 %v56
  %v62 = vunpack.c.l.b16 %v57
  %v63 = vunpack.c.h.b16 %v57
  %v64 = vpack.c.b16 %v60, %v60
  %v65 = vpack.c.b16 %v61, %v61
  %v66 = vpack.c.b16 %v62, %v62
  %v67 = vpack.c.b16 %v63, %v63
  %72 = vst [vmem:[%s3] sm:$0xf] %v64
  %73 = vst [vmem:[%s3 + $0x4] sm:$0xf] %v65
  %74 = vst [vmem:[%s3 + $0x8] sm:$0xf] %v66
  %75 = vst [vmem:[%s3 + $0xc] sm:$0xf] %v67
  // Predicated region
  $region14: #{_lambda_.12} parent=0 // pred_check
    _
  $region15: #{_lambda_.12} parent=0 // pred_check_branch
    %77 = sbr.rel (0) target = $region17
  $region16: #{_lambda_.12} parent=0 // pred_region
    _
  $region17: #{_lambda_.12} parent=0 // pred_fallthru
    _
  // Predicated region
  $region18: #{_lambda_.12} parent=0 // pred_check
    _
  $region19: #{_lambda_.12} parent=0 // pred_check_branch
    %79 = sbr.rel (0) target = $region21
  $region20: #{_lambda_.12} parent=0 // pred_region
    _
  $region21: #{_lambda_.12} parent=0 // pred_fallthru
    _

// kernel: _lambda_.13
$region0: #{_lambda_.13}
  #allocation0 [shape = 'u32[]', space=smem, size = 0x4, offset = 0x4, fixed_abs, tag = 'smem constant byte address 0x4 - core index']
  #allocation1 [shape = 'u32[144,128]{1,0:T(1,128)}', space=vmem, size = 0x12000, scoped, tag = 'internal scratch']
  #allocation2 [shape = 'f32[32,128]{1,0:T(8,128)}', space=vmem, size = 0x4000, scoped, tag = 'scratch operand']
  %s0 = inlined_call_operand.vmem [shape: bf16[32,512], index: 0, kind: input, shape index: {}]
  %s1 = inlined_call_operand.vmem [shape: bf16[512,128], index: 1, kind: input, shape index: {}]
  %s2 = inlined_call_operand.vmem [shape: f32[1,128], index: 2, kind: input, shape index: {}]
  %s3 = inlined_call_operand.vmem [shape: bf16[32,128], index: 3, kind: output, shape index: {0}]
  %s4 = inlined_call_operand.vmem [shape: f32[8,128], index: 4, kind: output, shape index: {1}]
  %5 = xla_tuple %s3, %s4
  %s6 = sld [smem:[#allocation0]]
  $region42: #{_lambda_.13} parent=0
    _
  %s8 = ssub.s32 1, %s6
  %s9 = scalar_select 0, %s8, %s6
  // Predicated region
  $region2: #{_lambda_.13} parent=0 // pred_check
    _
  $region3: #{_lambda_.13} parent=0 // pred_check_branch
    %11 = sbr.rel (0) target = $region5
  $region4: #{_lambda_.13} parent=0 // pred_region
    _
  $region5: #{_lambda_.13} parent=0 // pred_fallthru
    _
  // Predicated region
  $region6: #{_lambda_.13} parent=0 // pred_check
    _
  $region7: #{_lambda_.13} parent=0 // pred_check_branch
    %13 = sbr.rel (0) target = $region9
  $region8: #{_lambda_.13} parent=0 // pred_region
    _
  $region9: #{_lambda_.13} parent=0 // pred_fallthru
    _
  // Predicated region
  $region10: #{_lambda_.13} parent=0 // pred_check
    _
  $region11: #{_lambda_.13} parent=0 // pred_check_branch
    %15 = sbr.rel (0) target = $region13
  $region12: #{_lambda_.13} parent=0 // pred_region
    _
  $region13: #{_lambda_.13} parent=0 // pred_fallthru
    _
  %p17 = scmp.eq.s32.totalorder 0, 0
  // Predicated region
  $region14: #{_lambda_.13} parent=0 // pred_check
    %p18 = pneg %p17
  $region15: #{_lambda_.13} parent=0 // pred_check_branch
    %20 = sbr.rel (%p18) target = $region17
  $region16: #{_lambda_.13} parent=0 // pred_region
    %21 = vst [vmem:[#allocation2] sm:$0xff] 0.0
    %22 = vst [vmem:[#allocation2 + $0x8] sm:$0xff] 0.0
    %23 = vst [vmem:[#allocation2 + $0x10] sm:$0xff] 0.0
    %24 = vst [vmem:[#allocation2 + $0x18] sm:$0xff] 0.0
  $region17: #{_lambda_.13} parent=0 // pred_fallthru
    _
  %p25 = scmp.eq.s32.totalorder 0, 0
  %p26 = pnand %p25, %p17
  %p27 = pneg %p26
  // Predicated region
  $region18: #{_lambda_.13} parent=0 // pred_check
    _
  $region19: #{_lambda_.13} parent=0 // pred_check_branch
    %29 = sbr.rel (%p26) target = $region21
  $region20: #{_lambda_.13} parent=0 // pred_region
    %30 = vst [vmem:[%s4] sm:$0xff] 0.0
  $region21: #{_lambda_.13} parent=0 // pred_fallthru
    _
  %v31 = vld [vmem:[#allocation2] sm:$0xff]
  %v32 = vld [vmem:[#allocation2 + $0x8] sm:$0xff]
  %v33 = vld [vmem:[#allocation2 + $0x10] sm:$0xff]
  %v34 = vld [vmem:[#allocation2 + $0x18] sm:$0xff]
  %v35 = vld [vmem:[%s0] sm:$0xff]
  %v36 = vld [vmem:[%s0 + $0x8] sm:$0xff]
  %v37 = vld [vmem:[%s0 + $0x10] sm:$0xff]
  %v38 = vld [vmem:[%s0 + $0x18] sm:$0xff]
  %v39 = vld [vmem:[%s0 + $0x20] sm:$0xff]
  %v40 = vld [vmem:[%s0 + $0x28] sm:$0xff]
  %v41 = vld [vmem:[%s0 + $0x30] sm:$0xff]
  %v42 = vld [vmem:[%s0 + $0x38] sm:$0xff]
  %v43 = vld [vmem:[%s1] sm:$0xf]
  %v44 = vld [vmem:[%s1 + $0x4] sm:$0xf]
  %v45 = vld [vmem:[%s1 + $0x8] sm:$0xf]
  %v46 = vld [vmem:[%s1 + $0xc] sm:$0xf]
  %v47 = vld [vmem:[%s1 + $0x10] sm:$0xf]
  %v48 = vld [vmem:[%s1 + $0x14] sm:$0xf]
  %v49 = vld [vmem:[%s1 + $0x18] sm:$0xf]
  %v50 = vld [vmem:[%s1 + $0x1c] sm:$0xf]
  %v51 = vld [vmem:[%s1 + $0x20] sm:$0xf]
  %v52 = vld [vmem:[%s1 + $0x24] sm:$0xf]
  %v53 = vld [vmem:[%s1 + $0x28] sm:$0xf]
  %v54 = vld [vmem:[%s1 + $0x2c] sm:$0xf]
  %v55 = vld [vmem:[%s1 + $0x30] sm:$0xf]
  %v56 = vld [vmem:[%s1 + $0x34] sm:$0xf]
  %v57 = vld [vmem:[%s1 + $0x38] sm:$0xf]
  %v58 = vld [vmem:[%s1 + $0x3c] sm:$0xf]
  %v59 = vld [vmem:[%s1 + $0x40] sm:$0xf]
  %v60 = vld [vmem:[%s1 + $0x44] sm:$0xf]
  %v61 = vld [vmem:[%s1 + $0x48] sm:$0xf]
  %v62 = vld [vmem:[%s1 + $0x4c] sm:$0xf]
  %v63 = vld [vmem:[%s1 + $0x50] sm:$0xf]
  %v64 = vld [vmem:[%s1 + $0x54] sm:$0xf]
  %v65 = vld [vmem:[%s1 + $0x58] sm:$0xf]
  %v66 = vld [vmem:[%s1 + $0x5c] sm:$0xf]
  %v67 = vld [vmem:[%s1 + $0x60] sm:$0xf]
  %v68 = vld [vmem:[%s1 + $0x64] sm:$0xf]
  %v69 = vld [vmem:[%s1 + $0x68] sm:$0xf]
  %v70 = vld [vmem:[%s1 + $0x6c] sm:$0xf]
  %v71 = vld [vmem:[%s1 + $0x70] sm:$0xf]
  %v72 = vld [vmem:[%s1 + $0x74] sm:$0xf]
  %v73 = vld [vmem:[%s1 + $0x78] sm:$0xf]
  %v74 = vld [vmem:[%s1 + $0x7c] sm:$0xf]
  %v75 = vld [vmem:[%s1 + $0x80] sm:$0xf]
  %v76 = vld [vmem:[%s1 + $0x84] sm:$0xf]
  %v77 = vld [vmem:[%s1 + $0x88] sm:$0xf]
  %v78 = vld [vmem:[%s1 + $0x8c] sm:$0xf]
  %v79 = vld [vmem:[%s1 + $0x90] sm:$0xf]
  %v80 = vld [vmem:[%s1 + $0x94] sm:$0xf]
  %v81 = vld [vmem:[%s1 + $0x98] sm:$0xf]
  %v82 = vld [vmem:[%s1 + $0x9c] sm:$0xf]
  %v83 = vld [vmem:[%s1 + $0xa0] sm:$0xf]
  %v84 = vld [vmem:[%s1 + $0xa4] sm:$0xf]
  %v85 = vld [vmem:[%s1 + $0xa8] sm:$0xf]
  %v86 = vld [vmem:[%s1 + $0xac] sm:$0xf]
  %v87 = vld [vmem:[%s1 + $0xb0] sm:$0xf]
  %v88 = vld [vmem:[%s1 + $0xb4] sm:$0xf]
  %v89 = vld [vmem:[%s1 + $0xb8] sm:$0xf]
  %v90 = vld [vmem:[%s1 + $0xbc] sm:$0xf]
  %v91 = vld [vmem:[%s1 + $0xc0] sm:$0xf]
  %v92 = vld [vmem:[%s1 + $0xc4] sm:$0xf]
  %v93 = vld [vmem:[%s1 + $0xc8] sm:$0xf]
  %v94 = vld [vmem:[%s1 + $0xcc] sm:$0xf]
  %v95 = vld [vmem:[%s1 + $0xd0] sm:$0xf]
  %v96 = vld [vmem:[%s1 + $0xd4] sm:$0xf]
  %v97 = vld [vmem:[%s1 + $0xd8] sm:$0xf]
  %v98 = vld [vmem:[%s1 + $0xdc] sm:$0xf]
  %v99 = vld [vmem:[%s1 + $0xe0] sm:$0xf]
  %v100 = vld [vmem:[%s1 + $0xe4] sm:$0xf]
  %v101 = vld [vmem:[%s1 + $0xe8] sm:$0xf]
  %v102 = vld [vmem:[%s1 + $0xec] sm:$0xf]
  %v103 = vld [vmem:[%s1 + $0xf0] sm:$0xf]
  %v104 = vld [vmem:[%s1 + $0xf4] sm:$0xf]
  %v105 = vld [vmem:[%s1 + $0xf8] sm:$0xf]
  %v106 = vld [vmem:[%s1 + $0xfc] sm:$0xf]
  %v115 = vunpack.c.l.b16 %v35
  %v116 = vunpack.c.h.b16 %v35
  %v117 = vunpack.c.l.b16 %v36
  %v118 = vunpack.c.h.b16 %v36
  %v119 = vunpack.c.l.b16 %v37
  %v120 = vunpack.c.h.b16 %v37
  %v121 = vunpack.c.l.b16 %v38
  %v122 = vunpack.c.h.b16 %v38
  %v123 = vunpack.c.l.b16 %v39
  %v124 = vunpack.c.h.b16 %v39
  %v125 = vunpack.c.l.b16 %v40
  %v126 = vunpack.c.h.b16 %v40
  %v127 = vunpack.c.l.b16 %v41
  %v128 = vunpack.c.h.b16 %v41
  %v129 = vunpack.c.l.b16 %v42
  %v130 = vunpack.c.h.b16 %v42
  %v131 = vpack.c.b16 %v119, %v115
  %v132 = vpack.c.b16 %v120, %v116
  %v133 = vpack.c.b16 %v121, %v117
  %v134 = vpack.c.b16 %v122, %v118
  %v135 = vpack.c.b16 %v127, %v123
  %v136 = vpack.c.b16 %v128, %v124
  %v137 = vpack.c.b16 %v129, %v125
  %v138 = vpack.c.b16 %v130, %v126
  %v211 = vunpack.c.l.b16 %v43
  %v212 = vunpack.c.l.b16 %v44
  %v213 = vunpack.c.l.b16 %v45
  %v214 = vunpack.c.l.b16 %v46
  %v215 = vunpack.c.l.b16 %v47
  %v216 = vunpack.c.l.b16 %v48
  %v217 = vunpack.c.l.b16 %v49
  %v218 = vunpack.c.l.b16 %v50
  %v219 = vunpack.c.l.b16 %v51
  %v220 = vunpack.c.l.b16 %v52
  %v221 = vunpack.c.l.b16 %v53
  %v222 = vunpack.c.l.b16 %v54
  %v223 = vunpack.c.l.b16 %v55
  %v224 = vunpack.c.l.b16 %v56
  %v225 = vunpack.c.l.b16 %v57
  %v226 = vunpack.c.l.b16 %v58
  %v227 = vunpack.c.l.b16 %v59
  %v228 = vunpack.c.l.b16 %v60
  %v229 = vunpack.c.l.b16 %v61
  %v230 = vunpack.c.l.b16 %v62
  %v231 = vunpack.c.l.b16 %v63
  %v232 = vunpack.c.l.b16 %v64
  %v233 = vunpack.c.l.b16 %v65
  %v234 = vunpack.c.l.b16 %v66
  %v235 = vunpack.c.l.b16 %v67
  %v236 = vunpack.c.l.b16 %v68
  %v237 = vunpack.c.l.b16 %v69
  %v238 = vunpack.c.l.b16 %v70
  %v239 = vunpack.c.l.b16 %v71
  %v240 = vunpack.c.l.b16 %v72
  %v241 = vunpack.c.l.b16 %v73
  %v242 = vunpack.c.l.b16 %v74
  %v243 = vunpack.c.l.b16 %v75
  %v244 = vunpack.c.l.b16 %v76
  %v245 = vunpack.c.l.b16 %v77
  %v246 = vunpack.c.l.b16 %v78
  %v247 = vunpack.c.l.b16 %v79
  %v248 = vunpack.c.l.b16 %v80
  %v249 = vunpack.c.l.b16 %v81
  %v250 = vunpack.c.l.b16 %v82
  %v251 = vunpack.c.l.b16 %v83
  %v252 = vunpack.c.l.b16 %v84
  %v253 = vunpack.c.l.b16 %v85
  %v254 = vunpack.c.l.b16 %v86
  %v255 = vunpack.c.l.b16 %v87
  %v256 = vunpack.c.l.b16 %v88
  %v257 = vunpack.c.l.b16 %v89
  %v258 = vunpack.c.l.b16 %v90
  %v259 = vunpack.c.l.b16 %v91
  %v260 = vunpack.c.l.b16 %v92
  %v261 = vunpack.c.l.b16 %v93
  %v262 = vunpack.c.l.b16 %v94
  %v263 = vunpack.c.l.b16 %v95
  %v264 = vunpack.c.l.b16 %v96
  %v265 = vunpack.c.l.b16 %v97
  %v266 = vunpack.c.l.b16 %v98
  %v267 = vunpack.c.l.b16 %v99
  %v268 = vunpack.c.l.b16 %v100
  %v269 = vunpack.c.l.b16 %v101
  %v270 = vunpack.c.l.b16 %v102
  %v271 = vunpack.c.l.b16 %v103
  %v272 = vunpack.c.l.b16 %v104
  %v273 = vunpack.c.l.b16 %v105
  %v274 = vunpack.c.l.b16 %v106
  %v275 = vpack.c.b16 %v212, %v211
  %v276 = vpack.c.b16 %v214, %v213
  %v277 = vpack.c.b16 %v216, %v215
  %v278 = vpack.c.b16 %v218, %v217
  %v279 = vpack.c.b16 %v220, %v219
  %v280 = vpack.c.b16 %v222, %v221
  %v281 = vpack.c.b16 %v224, %v223
  %v282 = vpack.c.b16 %v226, %v225
  %v283 = vpack.c.b16 %v228, %v227
  %v284 = vpack.c.b16 %v230, %v229
  %v285 = vpack.c.b16 %v232, %v231
  %v286 = vpack.c.b16 %v234, %v233
  %v287 = vpack.c.b16 %v236, %v235
  %v288 = vpack.c.b16 %v238, %v237
  %v289 = vpack.c.b16 %v240, %v239
  %v290 = vpack.c.b16 %v242, %v241
  %v291 = vpack.c.b16 %v244, %v243
  %v292 = vpack.c.b16 %v246, %v245
  %v293 = vpack.c.b16 %v248, %v247
  %v294 = vpack.c.b16 %v250, %v249
  %v295 = vpack.c.b16 %v252, %v251
  %v296 = vpack.c.b16 %v254, %v253
  %v297 = vpack.c.b16 %v256, %v255
  %v298 = vpack.c.b16 %v258, %v257
  %v299 = vpack.c.b16 %v260, %v259
  %v300 = vpack.c.b16 %v262, %v261
  %v301 = vpack.c.b16 %v264, %v263
  %v302 = vpack.c.b16 %v266, %v265
  %v303 = vpack.c.b16 %v268, %v267
  %v304 = vpack.c.b16 %v270, %v269
  %v305 = vpack.c.b16 %v272, %v271
  %v306 = vpack.c.b16 %v274, %v273
  %339 = vmatprep.subr.bf16.mxu0 0
  %340 = vmatpush1.bf16.msra.mxu0 %v275
  %341 = vmatprep.subr.bf16.mxu0 0
  %342 = vmatpush1.bf16.msra.mxu0 %v276
  %343 = vmatprep.subr.bf16.mxu0 0
  %344 = vmatpush1.bf16.msra.mxu0 %v277
  %345 = vmatprep.subr.bf16.mxu0 0
  %346 = vmatpush1.bf16.msra.mxu0 %v278
  %347 = vmatprep.subr.bf16.mxu0 0
  %348 = vmatpush1.bf16.msra.mxu0 %v279
  %349 = vmatprep.subr.bf16.mxu0 0
  %350 = vmatpush1.bf16.msra.mxu0 %v280
  %351 = vmatprep.subr.bf16.mxu0 0
  %352 = vmatpush1.bf16.msra.mxu0 %v281
  %353 = vmatprep.subr.bf16.mxu0 0
  %354 = vmatpush1.bf16.msra.mxu0 %v282
  %355 = vmatprep.subr.bf16.mxu0 0
  %356 = vmatpush1.bf16.msra.mxu0 %v283
  %357 = vmatprep.subr.bf16.mxu0 0
  %358 = vmatpush1.bf16.msra.mxu0 %v284
  %359 = vmatprep.subr.bf16.mxu0 0
  %360 = vmatpush1.bf16.msra.mxu0 %v285
  %361 = vmatprep.subr.bf16.mxu0 0
  %362 = vmatpush1.bf16.msra.mxu0 %v286
  %363 = vmatprep.subr.bf16.mxu0 0
  %364 = vmatpush1.bf16.msra.mxu0 %v287
  %365 = vmatprep.subr.bf16.mxu0 0
  %366 = vmatpush1.bf16.msra.mxu0 %v288
  %367 = vmatprep.subr.bf16.mxu0 0
  %368 = vmatpush1.bf16.msra.mxu0 %v289
  %369 = vmatprep.subr.bf16.mxu0 0
  %370 = vmatpush1.bf16.msra.mxu0 %v290
  %371 = vmatprep.mubr.bf16.mxu0 %v132
  %372 = vmatmul.mubr.bf16.gmra.mrb[0].mxu0 %v131
  %v373 = vpop.f32.mrb[0].mxu0
  %v374 = vadd.f32 0.0, %v373
  %v375 = vpop.f32.mrb[0].mxu0
  %v376 = vpop.f32.mrb[0].mxu0
  %v377 = vadd.f32 0.0, %v376
  %v378 = vpop.f32.mrb[0].mxu0
  %379 = vmatprep.mubr.bf16.mxu0 %v136
  %380 = vmatmul.mubr.bf16.gmra.mrb[0].mxu0 %v135
  %v381 = vpop.f32.mrb[0].mxu0
  %v382 = vadd.f32 0.0, %v381
  %v383 = vpop.f32.mrb[0].mxu0
  %v384 = vpop.f32.mrb[0].mxu0
  %v385 = vadd.f32 0.0, %v384
  %v386 = vpop.f32.mrb[0].mxu0
  %387 = vdwg.mxu0
  %388 = vmatprep.subr.bf16.mxu0 0
  %389 = vmatpush1.bf16.msra.mxu0 %v291
  %390 = vmatprep.subr.bf16.mxu0 0
  %391 = vmatpush1.bf16.msra.mxu0 %v292
  %392 = vmatprep.subr.bf16.mxu0 0
  %393 = vmatpush1.bf16.msra.mxu0 %v293
  %394 = vmatprep.subr.bf16.mxu0 0
  %395 = vmatpush1.bf16.msra.mxu0 %v294
  %396 = vmatprep.subr.bf16.mxu0 0
  %397 = vmatpush1.bf16.msra.mxu0 %v295
  %398 = vmatprep.subr.bf16.mxu0 0
  %399 = vmatpush1.bf16.msra.mxu0 %v296
  %400 = vmatprep.subr.bf16.mxu0 0
  %401 = vmatpush1.bf16.msra.mxu0 %v297
  %402 = vmatprep.subr.bf16.mxu0 0
  %403 = vmatpush1.bf16.msra.mxu0 %v298
  %404 = vmatprep.subr.bf16.mxu0 0
  %405 = vmatpush1.bf16.msra.mxu0 %v299
  %406 = vmatprep.subr.bf16.mxu0 0
  %407 = vmatpush1.bf16.msra.mxu0 %v300
  %408 = vmatprep.subr.bf16.mxu0 0
  %409 = vmatpush1.bf16.msra.mxu0 %v301
  %410 = vmatprep.subr.bf16.mxu0 0
  %411 = vmatpush1.bf16.msra.mxu0 %v302
  %412 = vmatprep.subr.bf16.mxu0 0
  %413 = vmatpush1.bf16.msra.mxu0 %v303
  %414 = vmatprep.subr.bf16.mxu0 0
  %415 = vmatpush1.bf16.msra.mxu0 %v304
  %416 = vmatprep.subr.bf16.mxu0 0
  %417 = vmatpush1.bf16.msra.mxu0 %v305
  %418 = vmatprep.subr.bf16.mxu0 0
  %419 = vmatpush1.bf16.msra.mxu0 %v306
  %420 = vmatprep.mubr.bf16.mxu0 %v134
  %421 = vmatmul.mubr.bf16.gmra.mrb[0].mxu0 %v133
  %v422 = vpop.f32.mrb[0].mxu0
  %v423 = vadd.f32 %v374, %v422
  %v424 = vpop.f32.mrb[0].mxu0
  %v425 = vpop.f32.mrb[0].mxu0
  %v426 = vadd.f32 %v377, %v425
  %v427 = vpop.f32.mrb[0].mxu0
  %428 = vmatprep.mubr.bf16.mxu0 %v138
  %429 = vmatmul.mubr.bf16.gmra.mrb[0].mxu0 %v137
  %v430 = vpop.f32.mrb[0].mxu0
  %v431 = vadd.f32 %v382, %v430
  %v432 = vpop.f32.mrb[0].mxu0
  %v433 = vpop.f32.mrb[0].mxu0
  %v434 = vadd.f32 %v385, %v433
  %v435 = vpop.f32.mrb[0].mxu0
  %436 = vdwg.mxu0
  %v437 = vadd.f32 %v31, %v423
  %v438 = vadd.f32 %v32, %v426
  %v439 = vadd.f32 %v33, %v431
  %v440 = vadd.f32 %v34, %v434
  %441 = vst [vmem:[#allocation2] sm:$0xff] %v437
  %442 = vst [vmem:[#allocation2 + $0x8] sm:$0xff] %v438
  %443 = vst [vmem:[#allocation2 + $0x10] sm:$0xff] %v439
  %444 = vst [vmem:[#allocation2 + $0x18] sm:$0xff] %v440
  // Predicated region
  $region22: #{_lambda_.13} parent=0 // pred_check
    %p445 = pneg %p17
  $region23: #{_lambda_.13} parent=0 // pred_check_branch
    %447 = sbr.rel (%p445) target = $region25
  $region24: #{_lambda_.13} parent=0 // pred_region
    %v448 = vld [vmem:[#allocation2] sm:$0xff]
    %v449 = vld [vmem:[#allocation2 + $0x8] sm:$0xff]
    %v450 = vld [vmem:[#allocation2 + $0x10] sm:$0xff]
    %v451 = vld [vmem:[#allocation2 + $0x18] sm:$0xff]
    %v452 = vld [vmem:[%s2] sm:$0x1]
    %v454 = vlaneseq
    %v455 = vshrl.u32 %v454, 7
    %v456 = vsub.s32 0, %v455
    %v457 = vrot.slane %v452, %v456
    %v459 = vadd.f32 %v448, %v457
    %v460 = vadd.f32 %v449, %v457
    %v461 = vadd.f32 %v450, %v457
    %v462 = vadd.f32 %v451, %v457
    %v463 = vpack.c.bf16 %v460, %v459
    %v464 = vpack.c.bf16 %v462, %v461
    %v467 = vunpack.c.l.b16 %v463
    %v468 = vunpack.c.h.b16 %v463
    %v469 = vunpack.c.l.b16 %v464
    %v470 = vunpack.c.h.b16 %v464
    %v471 = vpack.c.b16 %v467, %v467
    %v472 = vpack.c.b16 %v468, %v468
    %v473 = vpack.c.b16 %v469, %v469
    %v474 = vpack.c.b16 %v470, %v470
    %479 = vst [vmem:[%s3] sm:$0xf] %v471
    %480 = vst [vmem:[%s3 + $0x4] sm:$0xf] %v472
    %481 = vst [vmem:[%s3 + $0x8] sm:$0xf] %v473
    %482 = vst [vmem:[%s3 + $0xc] sm:$0xf] %v474
    %v483 = vadd.f32 %v459, %v460
    %v484 = vadd.f32 %v483, %v461
    %v485 = vadd.f32 %v484, %v462
    %v486 = vrot.slane %v485, 4
    %v487 = vadd.f32 %v485, %v486
    %v488 = vrot.slane %v487, 2
    %v489 = vadd.f32 %v487, %v488
    %v490 = vrot.slane %v489, 1
    %v491 = vadd.f32 %v489, %v490
    %v492 = vmul.f32 %v459, %v459
    %v493 = vmul.f32 %v460, %v460
    %v494 = vmul.f32 %v461, %v461
    %v495 = vmul.f32 %v462, %v462
    %v496 = vadd.f32 %v492, %v493
    %v497 = vadd.f32 %v496, %v494
    %v498 = vadd.f32 %v497, %v495
    %v499 = vrot.slane %v498, 4
    %v500 = vadd.f32 %v498, %v499
    %v501 = vrot.slane %v500, 2
    %v502 = vadd.f32 %v500, %v501
    %v503 = vrot.slane %v502, 1
    %v504 = vadd.f32 %v502, %v503
    %v505 = vld [vmem:[%s4] sm:$0x3]
    %vm506 = vcmask 1040384
    %v507 = vsel %vm506, %v491, %v504
    %v508 = vadd.f32 %v505, %v507
    %509 = vst [vmem:[%s4] sm:$0x3] %v508
  $region25: #{_lambda_.13} parent=0 // pred_fallthru
    _
  // Predicated region
  $region26: #{_lambda_.13} parent=0 // pred_check
    _
  $region27: #{_lambda_.13} parent=0 // pred_check_branch
    %511 = sbr.rel (0) target = $region29
  $region28: #{_lambda_.13} parent=0 // pred_region
    _
  $region29: #{_lambda_.13} parent=0 // pred_fallthru
    _
  // Predicated region
  $region30: #{_lambda_.13} parent=0 // pred_check
    _
  $region31: #{_lambda_.13} parent=0 // pred_check_branch
    %513 = sbr.rel (0) target = $region33
  $region32: #{_lambda_.13} parent=0 // pred_region
    _
  $region33: #{_lambda_.13} parent=0 // pred_fallthru
    _
  // Predicated region
  $region34: #{_lambda_.13} parent=0 // pred_check
    _
  $region35: #{_lambda_.13} parent=0 // pred_check_branch
    %515 = sbr.rel (0) target = $region37
  $region36: #{_lambda_.13} parent=0 // pred_region
    _
  $region37: #{_lambda_.13} parent=0 // pred_fallthru
    _
  // Predicated region
  $region38: #{_lambda_.13} parent=0 // pred_check
    _
  $region39: #{_lambda_.13} parent=0 // pred_check_branch
    %517 = sbr.rel (0) target = $region41
  $region40: #{_lambda_.13} parent=0 // pred_region
    _
  $region41: #{_lambda_.13} parent=0 // pred_fallthru
    _

// kernel: _lambda_.15
$region0: #{_lambda_.15}
  #allocation0 [shape = 'u32[]', space=smem, size = 0x4, offset = 0x4, fixed_abs, tag = 'smem constant byte address 0x4 - core index']
  #allocation1 [shape = 'u32[144,128]{1,0:T(1,128)}', space=vmem, size = 0x12000, scoped, tag = 'internal scratch']
  #allocation2 [shape = 'f32[16,128]{1,0:T(8,128)}', space=vmem, size = 0x2000, scoped, tag = 'scratch operand']
  %s0 = inlined_call_operand.vmem [shape: bf16[16,1024], index: 0, kind: input, shape index: {}]
  %s1 = inlined_call_operand.vmem [shape: bf16[1024,128], index: 1, kind: input, shape index: {}]
  %s2 = inlined_call_operand.vmem [shape: f32[1,128], index: 2, kind: input, shape index: {}]
  %s3 = inlined_call_operand.vmem [shape: bf16[16,128], index: 3, kind: output, shape index: {0}]
  %s4 = inlined_call_operand.hbm [shape: f32[8,128], index: 4, kind: output, shape index: {1}]
  %5 = xla_tuple %s3, %s4
  %s6 = sld [smem:[#allocation0]]
  $region88: #{_lambda_.15} parent=0
    _
  %s8 = ssub.s32 1, %s6
  %s9 = scalar_select 0, %s8, %s6
  $region1: #{_lambda_.15} parent=0
    #allocation3 [shape = 'u8[32768]{0}', space=vmem, size = 0x8000, scoped, tag = 'input window, operand 0']
    #allocation4 [shape = 'u8[4096]{0}', space=vmem, size = 0x1000, scoped, tag = 'output window, operand 1, single buffered']
    #allocation5 [shape = 's32[2]{0}', space=sflag, size = 0x8, scoped, tag = 'scoped memory for _lambda_.15']
    %10 = vsyncpa [#allocation5], 0
    loop: start=0, step=1, limit=4
    $region2: #{_lambda_.15} parent=1 // loop_pre_header
      _
    $region3: #{_lambda_.15} parent=1 // loop_header
      %s12 = sphi 0, %s16
      %p13 = scmp.ge.s32.totalorder %s12, 4
      %s19 = sphi 0, %s38
      %s20 = sphi 0, %s34
      %s21 = sphi 0, %s30
      %s22 = sphi 0, %s19
      %s23 = sphi 0, %s20
      %s24 = sphi 0, %s21
      %s25 = sphi 0, %s22
      %s26 = sphi 0, %s23
      %s27 = sphi 0, %s24
      %s43 = sphi 0, %s45
      %s46 = sphi 0, %s43
      %s47 = sphi 0, %s46
      %s63 = sphi 0, %s47
      %s71 = sphi 0, %s73
      %s74 = sphi 0, %s71
      %s75 = sphi 0, %s74
      %s91 = sphi 0, %s75
      %s97 = sphi 0, %s99
      %s100 = sphi 0, %s97
      %s101 = sphi 0, %s100
      %s117 = sphi 0, %s101
      %s125 = sphi 0, %s127
      %s128 = sphi 0, %s125
      %s129 = sphi 0, %s128
      %s145 = sphi 0, %s129
      %s151 = sphi 0, %s153
      %s154 = sphi 0, %s151
      %s155 = sphi 0, %s154
      %s171 = sphi 0, %s155
    $region4: #{_lambda_.15} parent=1 // loop_header_branch
      %15 = sbr.rel (%p13) target = $region8
    $region5: #{_lambda_.15} parent=1 // loop_body
      %s17 = ssub.s32 %s12, 1
      %s18 = ssub.s32 %s12, 2
      %s28 = sadd.s32 1, %s21
      %p29 = scmp.ge.s32.totalorder %s28, 2
      %s30 = scalar_select %p29, 0, %s28
      %s31 = sadd.s32 1, %s20
      %s32 = scalar_select %p29, %s31, %s20
      %p33 = scmp.ge.s32.totalorder %s32, 1
      %s34 = scalar_select %p33, 0, %s32
      %s35 = sadd.s32 1, %s19
      %s36 = scalar_select %p33, %s35, %s19
      %p37 = scmp.ge.s32.totalorder %s36, 1
      %s38 = scalar_select %p37, 0, %s36
      %s39 = ssub.s32 %s20, %s34
      %s40 = ssub.s32 %s21, %s30
      %s41 = sor.u32 %s39, %s40
      %p42 = scmp.eq.s32.totalorder %s41, 0
      %s44 = sadd.s32 %s43, 1
      %s45 = scalar_select %p42, %s43, %s44
      %p48 = pneg %p42
      %p49 = scmp.eq.s32.totalorder %s12, 1
      %p50 = por %p48, %p49
      %p51 = scmp.ne.s32.totalorder %s43, %s46
      %p52 = scmp.eq.s32.totalorder %s12, 0
      %p53 = por %p51, %p52
      %p54 = scmp.ne.s32.totalorder %s43, %s46
      %p55 = scmp.eq.s32.totalorder %s17, 1
      %p56 = por %p54, %p55
      %p57 = scmp.ne.s32.totalorder %s46, %s47
      %p58 = scmp.eq.s32.totalorder %s17, 0
      %p59 = por %p57, %p58
      %p60 = scmp.ne.s32.totalorder %s46, %s47
      %p61 = scmp.eq.s32.totalorder %s18, 1
      %p62 = por %p60, %p61
      %p64 = scmp.ne.s32.totalorder %s47, %s63
      %p65 = scmp.eq.s32.totalorder %s18, 0
      %p66 = por %p64, %p65
      %s67 = ssub.s32 %s21, %s30
      %s68 = ssub.s32 %s19, %s38
      %s69 = sor.u32 %s67, %s68
      %p70 = scmp.eq.s32.totalorder %s69, 0
      %s72 = sadd.s32 %s71, 1
      %s73 = scalar_select %p70, %s71, %s72
      %p76 = pneg %p70
      %p77 = scmp.eq.s32.totalorder %s12, 1
      %p78 = por %p76, %p77
      %p79 = scmp.ne.s32.totalorder %s71, %s74
      %p80 = scmp.eq.s32.totalorder %s12, 0
      %p81 = por %p79, %p80
      %p82 = scmp.ne.s32.totalorder %s71, %s74
      %p83 = scmp.eq.s32.totalorder %s17, 1
      %p84 = por %p82, %p83
      %p85 = scmp.ne.s32.totalorder %s74, %s75
      %p86 = scmp.eq.s32.totalorder %s17, 0
      %p87 = por %p85, %p86
      %p88 = scmp.ne.s32.totalorder %s74, %s75
      %p89 = scmp.eq.s32.totalorder %s18, 1
      %p90 = por %p88, %p89
      %p92 = scmp.ne.s32.totalorder %s75, %s91
      %p93 = scmp.eq.s32.totalorder %s18, 0
      %p94 = por %p92, %p93
      %s95 = ssub.s32 %s19, %s38
      %p96 = scmp.eq.s32.totalorder %s95, 0
      %s98 = sadd.s32 %s97, 1
      %s99 = scalar_select %p96, %s97, %s98
      %p102 = pneg %p96
      %p103 = scmp.eq.s32.totalorder %s12, 1
      %p104 = por %p102, %p103
      %p105 = scmp.ne.s32.totalorder %s97, %s100
      %p106 = scmp.eq.s32.totalorder %s12, 0
      %p107 = por %p105, %p106
      %p108 = scmp.ne.s32.totalorder %s97, %s100
      %p109 = scmp.eq.s32.totalorder %s17, 1
      %p110 = por %p108, %p109
      %p111 = scmp.ne.s32.totalorder %s100, %s101
      %p112 = scmp.eq.s32.totalorder %s17, 0
      %p113 = por %p111, %p112
      %p114 = scmp.ne.s32.totalorder %s100, %s101
      %p115 = scmp.eq.s32.totalorder %s18, 1
      %p116 = por %p114, %p115
      %p118 = scmp.ne.s32.totalorder %s101, %s117
      %p119 = scmp.eq.s32.totalorder %s18, 0
      %p120 = por %p118, %p119
      %s121 = ssub.s32 %s20, %s34
      %s122 = ssub.s32 %s19, %s38
      %s123 = sor.u32 %s121, %s122
      %p124 = scmp.eq.s32.totalorder %s123, 0
      %s126 = sadd.s32 %s125, 1
      %s127 = scalar_select %p124, %s125, %s126
      %p130 = pneg %p124
      %p131 = scmp.eq.s32.totalorder %s12, 1
      %p132 = por %p130, %p131
      %p133 = scmp.ne.s32.totalorder %s125, %s128
      %p134 = scmp.eq.s32.totalorder %s12, 0
      %p135 = por %p133, %p134
      %p136 = scmp.ne.s32.totalorder %s125, %s128
      %p137 = scmp.eq.s32.totalorder %s17, 1
      %p138 = por %p136, %p137
      %p139 = scmp.ne.s32.totalorder %s128, %s129
      %p140 = scmp.eq.s32.totalorder %s17, 0
      %p141 = por %p139, %p140
      %p142 = scmp.ne.s32.totalorder %s128, %s129
      %p143 = scmp.eq.s32.totalorder %s18, 1
      %p144 = por %p142, %p143
      %p146 = scmp.ne.s32.totalorder %s129, %s145
      %p147 = scmp.eq.s32.totalorder %s18, 0
      %p148 = por %p146, %p147
      %s149 = ssub.s32 %s19, %s38
      %p150 = scmp.eq.s32.totalorder %s149, 0
      %s152 = sadd.s32 %s151, 1
      %s153 = scalar_select %p150, %s151, %s152
      %p156 = pneg %p150
      %p157 = scmp.eq.s32.totalorder %s12, 1
      %p158 = por %p156, %p157
      %p159 = scmp.ne.s32.totalorder %s151, %s154
      %p160 = scmp.eq.s32.totalorder %s12, 0
      %p161 = por %p159, %p160
      %p162 = scmp.ne.s32.totalorder %s151, %s154
      %p163 = scmp.eq.s32.totalorder %s17, 1
      %p164 = por %p162, %p163
      %p165 = scmp.ne.s32.totalorder %s154, %s155
      %p166 = scmp.eq.s32.totalorder %s17, 0
      %p167 = por %p165, %p166
      %p168 = scmp.ne.s32.totalorder %s154, %s155
      %p169 = scmp.eq.s32.totalorder %s18, 1
      %p170 = por %p168, %p169
      %p172 = scmp.ne.s32.totalorder %s155, %s171
      %p173 = scmp.eq.s32.totalorder %s18, 0
      %p174 = por %p172, %p173
      %p175 = scmp.le.s32.totalorder 1, %s12
      %p176 = scmp.lt.s32.totalorder %s12, 3
      %p177 = pnand %p175, %p176
      %p178 = pneg %p177
      // Predicated region
      $region9: #{_lambda_.15} parent=5 // pred_check
        _
      $region10: #{_lambda_.15} parent=5 // pred_check_branch
        %180 = sbr.rel (%p177) target = $region12
      $region11: #{_lambda_.15} parent=5 // pred_region
        %s181 = ssub.s32 %s12, 1
        // Predicated region
        $region13: #{_lambda_.15} parent=11 // pred_check
          %p182 = pneg %p113
        $region14: #{_lambda_.15} parent=11 // pred_check_branch
          %184 = sbr.rel (%p182) target = $region16
        $region15: #{_lambda_.15} parent=11 // pred_region
          %p185 = scmp.lt.s32.totalorder %s22, 0
          %s186 = scalar_select %p185, %s22, 0
          %s187 = scalar_lea.vmem %s2, %s186
        $region16: #{_lambda_.15} parent=11 // pred_fallthru
          _
      $region12: #{_lambda_.15} parent=5 // pred_fallthru
        _
      %p188 = scmp.lt.s32.totalorder %s12, 2
      // Predicated region
      $region17: #{_lambda_.15} parent=5 // pred_check
        %p189 = pneg %p188
      $region18: #{_lambda_.15} parent=5 // pred_check_branch
        %191 = sbr.rel (%p189) target = $region20
      $region19: #{_lambda_.15} parent=5 // pred_region
        // Predicated region
        $region21: #{_lambda_.15} parent=19 // pred_check
          %p192 = pneg %p53
        $region22: #{_lambda_.15} parent=19 // pred_check_branch
          %194 = sbr.rel (%p192) target = $region24
        $region23: #{_lambda_.15} parent=19 // pred_region
          %s195 = sand.u32 %s43, 1
          %s196 = sand.u32 %s43, 1
          %s197 = smul.addr %s196, 32
          %s198 = scalar_lea.vmem [#allocation3], %s197
          %s199 = smul.u32 2, %s20
          %s200 = smul.u32 4, %s21
          %s201 = smul.addr %s199, 8
          %s202 = sadd.s32 %s200, %s201
          %s203 = smul.addr %s202, 4
          %s204 = scalar_lea.vmem %s0, %s203
          // Predicated region
          $region25: #{_lambda_.15} parent=23 // pred_check
            _
          $region26: #{_lambda_.15} parent=23 // pred_check_branch
            %206 = sbr.rel (0) target = $region28
          $region27: #{_lambda_.15} parent=23 // pred_region
            // Predicated region
            $region29: #{_lambda_.15} parent=27 // pred_check
              _
            $region30: #{_lambda_.15} parent=27 // pred_check_branch
              %208 = sbr.rel (0) target = $region32
            $region31: #{_lambda_.15} parent=27 // pred_region
              loop: start=0, step=1, limit=1
              $region33: #{_lambda_.15} parent=31 // loop_pre_header
                _
              $region34: #{_lambda_.15} parent=31 // loop_header
                %s210 = sphi 0, %s214
                %p211 = scmp.ge.s32.totalorder %s210, 1
                %s215 = sphi %s204, %s204
                %s216 = sphi %s198, %s198
              $region35: #{_lambda_.15} parent=31 // loop_header_branch
                %213 = sbr.rel (%p211) target = $region39
              $region36: #{_lambda_.15} parent=31 // loop_body
                %v217 = vld [vmem:[%s215] sm:$0xff]
                %218 = vst [vmem:[%s216] sm:$0xff] %v217
                %v219 = vld [vmem:[%s215 + $0x8] sm:$0xff]
                %220 = vst [vmem:[%s216 + $0x8] sm:$0xff] %v219
                %v221 = vld [vmem:[%s215 + $0x20] sm:$0xff]
                %222 = vst [vmem:[%s216 + $0x10] sm:$0xff] %v221
                %v223 = vld [vmem:[%s215 + $0x28] sm:$0xff]
                %224 = vst [vmem:[%s216 + $0x18] sm:$0xff] %v223
              $region37: #{_lambda_.15} parent=31 // loop_footer
                %s214 = sadd.s32 1, %s210
              $region38: #{_lambda_.15} parent=31 // loop_footer_branch
                %209 = sbr.rel target = $region34
              $region39: #{_lambda_.15} parent=31 // loop_exit
                _
            $region32: #{_lambda_.15} parent=27 // pred_fallthru
              _
            // Predicated region
            $region40: #{_lambda_.15} parent=27 // pred_check
              _
            $region41: #{_lambda_.15} parent=27 // pred_check_branch
              %226 = sbr.rel target = $region43
            $region42: #{_lambda_.15} parent=27 // pred_region
              _
            $region43: #{_lambda_.15} parent=27 // pred_fallthru
              _
          $region28: #{_lambda_.15} parent=23 // pred_fallthru
            _
          %227 = vnop
        $region24: #{_lambda_.15} parent=19 // pred_fallthru
          _
        // Predicated region
        $region44: #{_lambda_.15} parent=19 // pred_check
          %p228 = pneg %p81
        $region45: #{_lambda_.15} parent=19 // pred_check_branch
          %230 = sbr.rel (%p228) target = $region47
        $region46: #{_lambda_.15} parent=19 // pred_region
          %s231 = smul.u32 64, %s21
          %p232 = scmp.lt.s32.totalorder %s231, 127
          %s233 = scalar_select %p232, %s231, 127
          %p234 = scmp.lt.s32.totalorder %s19, 0
          %s235 = scalar_select %p234, %s19, 0
          %s236 = sadd.s32 %s235, %s233
          %s237 = smul.addr %s236, 4
          %s238 = scalar_lea.vmem %s1, %s237
          %s239 = smul.u32 64, %s21
        $region47: #{_lambda_.15} parent=19 // pred_fallthru
          _
      $region20: #{_lambda_.15} parent=5 // pred_fallthru
        _
      %p240 = scmp.le.s32.totalorder 1, %s12
      %p241 = scmp.lt.s32.totalorder %s12, 3
      %p242 = pnand %p240, %p241
      %p243 = pneg %p242
      // Predicated region
      $region48: #{_lambda_.15} parent=5 // pred_check
        _
      $region49: #{_lambda_.15} parent=5 // pred_check_branch
        %245 = sbr.rel (%p242) target = $region51
      $region50: #{_lambda_.15} parent=5 // pred_region
        %s246 = ssub.s32 %s12, 1
        %s247 = sand.u32 %s46, 1
        %s248 = sand.u32 %s46, 1
        %s249 = smul.addr %s248, 32
        %s250 = scalar_lea.vmem [#allocation3], %s249
        // Predicated region
        $region52: #{_lambda_.15} parent=50 // pred_check
          %p251 = pneg %p59
        $region53: #{_lambda_.15} parent=50 // pred_check_branch
          %253 = sbr.rel (%p251) target = $region55
        $region54: #{_lambda_.15} parent=50 // pred_region
          _
        $region55: #{_lambda_.15} parent=50 // pred_fallthru
          _
        %s254 = sand.u32 %s46, 1
        %s255 = sand.u32 %s46, 1
        %s256 = smul.addr %s255, 32
        %s257 = scalar_lea.vmem [#allocation3], %s256
        %p258 = pneg %p59
        %p259 = pneg %p56
        %s260 = smul.u32 64, %s24
        %p261 = scmp.lt.s32.totalorder %s260, 127
        %s262 = scalar_select %p261, %s260, 127
        %p263 = scmp.lt.s32.totalorder %s22, 0
        %s264 = scalar_select %p263, %s22, 0
        %s265 = sadd.s32 %s264, %s262
        %s266 = smul.addr %s265, 4
        %s267 = scalar_lea.vmem %s1, %s266
        %p268 = pneg %p87
        %p269 = pneg %p84
        %p270 = scmp.lt.s32.totalorder %s22, 0
        %s271 = scalar_select %p270, %s22, 0
        %s272 = scalar_lea.vmem %s2, %s271
        %p273 = pneg %p113
        %p274 = pneg %p110
        %p275 = pneg %p141
        %p276 = pneg %p138
        %s277 = smul.u32 2, %s23
        %p278 = scmp.lt.s32.totalorder %s277, 1
        %s279 = scalar_select %p278, %s277, 1
        %p280 = scmp.lt.s32.totalorder %s22, 0
        %s281 = scalar_select %p280, %s22, 0
        %s282 = sadd.s32 %s281, %s279
        %s283 = smul.addr %s282, 4
        %s284 = scalar_lea.vmem %s3, %s283
        %p285 = pneg %p167
        %p286 = pneg %p164
        %s287 = smul.u32 2, %s23
        %s288 = smul.u32 4, %s24
        %s289 = smul.u32 64, %s24
        %p290 = scmp.lt.s32.totalorder %s289, 127
        %s291 = scalar_select %p290, %s289, 127
        %p292 = scmp.lt.s32.totalorder %s22, 0
        %s293 = scalar_select %p292, %s22, 0
        %s294 = sadd.s32 %s293, %s291
        %s295 = smul.addr %s294, 4
        %s296 = scalar_lea.vmem %s1, %s295
        %s297 = smul.u32 64, %s24
        %p298 = scmp.lt.s32.totalorder %s22, 0
        %s299 = scalar_select %p298, %s22, 0
        %s300 = scalar_lea.vmem %s2, %s299
        %s301 = smul.u32 2, %s23
        %p302 = scmp.lt.s32.totalorder %s301, 1
        %s303 = scalar_select %p302, %s301, 1
        %p304 = scmp.lt.s32.totalorder %s22, 0
        %s305 = scalar_select %p304, %s22, 0
        %s306 = sadd.s32 %s305, %s303
        %s307 = smul.addr %s306, 4
        %s308 = scalar_lea.vmem %s3, %s307
        %s309 = smul.u32 2, %s23
        %p311 = scmp.eq.s32.totalorder %s24, 0
        // Predicated region
        $region56: #{_lambda_.15} parent=50 // pred_check
          %p312 = pneg %p311
        $region57: #{_lambda_.15} parent=50 // pred_check_branch
          %314 = sbr.rel (%p312) target = $region59
        $region58: #{_lambda_.15} parent=50 // pred_region
          %315 = vst [vmem:[#allocation2] sm:$0xff] 0.0
          %316 = vst [vmem:[#allocation2 + $0x8] sm:$0xff] 0.0
        $region59: #{_lambda_.15} parent=50 // pred_fallthru
          _
        %p317 = scmp.eq.s32.totalorder %s23, 0
        %p318 = pnand %p317, %p311
        %p319 = pneg %p318
        // Predicated region
        $region60: #{_lambda_.15} parent=50 // pred_check
          _
        $region61: #{_lambda_.15} parent=50 // pred_check_branch
          %321 = sbr.rel (%p318) target = $region63
        $region62: #{_lambda_.15} parent=50 // pred_region
          %322 = vst [vmem:[#allocation4] sm:$0xff] 0.0
        $region63: #{_lambda_.15} parent=50 // pred_fallthru
          _
        %v323 = vld [vmem:[#allocation2] sm:$0xff]
        %v324 = vld [vmem:[#allocation2 + $0x8] sm:$0xff]
        %v325 = vld [vmem:[%s250] sm:$0xff]
        %v326 = vld [vmem:[%s250 + $0x8] sm:$0xff]
        %v327 = vld [vmem:[%s250 + $0x10] sm:$0xff]
        %v328 = vld [vmem:[%s250 + $0x18] sm:$0xff]
        %v329 = vld [vmem:[%s296] sm:$0xf]
        %v330 = vld [vmem:[%s296 + $0x4] sm:$0xf]
        %v331 = vld [vmem:[%s296 + $0x8] sm:$0xf]
        %v332 = vld [vmem:[%s296 + $0xc] sm:$0xf]
        %v333 = vld [vmem:[%s296 + $0x10] sm:$0xf]
        %v334 = vld [vmem:[%s296 + $0x14] sm:$0xf]
        %v335 = vld [vmem:[%s296 + $0x18] sm:$0xf]
        %v336 = vld [vmem:[%s296 + $0x1c] sm:$0xf]
        %v337 = vld [vmem:[%s296 + $0x20] sm:$0xf]
        %v338 = vld [vmem:[%s296 + $0x24] sm:$0xf]
        %v339 = vld [vmem:[%s296 + $0x28] sm:$0xf]
        %v340 = vld [vmem:[%s296 + $0x2c] sm:$0xf]
        %v341 = vld [vmem:[%s296 + $0x30] sm:$0xf]
        %v342 = vld [vmem:[%s296 + $0x34] sm:$0xf]
        %v343 = vld [vmem:[%s296 + $0x38] sm:$0xf]
        %v344 = vld [vmem:[%s296 + $0x3c] sm:$0xf]
        %v345 = vld [vmem:[%s296 + $0x40] sm:$0xf]
        %v346 = vld [vmem:[%s296 + $0x44] sm:$0xf]
        %v347 = vld [vmem:[%s296 + $0x48] sm:$0xf]
        %v348 = vld [vmem:[%s296 + $0x4c] sm:$0xf]
        %v349 = vld [vmem:[%s296 + $0x50] sm:$0xf]
        %v350 = vld [vmem:[%s296 + $0x54] sm:$0xf]
        %v351 = vld [vmem:[%s296 + $0x58] sm:$0xf]
        %v352 = vld [vmem:[%s296 + $0x5c] sm:$0xf]
        %v353 = vld [vmem:[%s296 + $0x60] sm:$0xf]
        %v354 = vld [vmem:[%s296 + $0x64] sm:$0xf]
        %v355 = vld [vmem:[%s296 + $0x68] sm:$0xf]
        %v356 = vld [vmem:[%s296 + $0x6c] sm:$0xf]
        %v357 = vld [vmem:[%s296 + $0x70] sm:$0xf]
        %v358 = vld [vmem:[%s296 + $0x74] sm:$0xf]
        %v359 = vld [vmem:[%s296 + $0x78] sm:$0xf]
        %v360 = vld [vmem:[%s296 + $0x7c] sm:$0xf]
        %v361 = vld [vmem:[%s296 + $0x80] sm:$0xf]
        %v362 = vld [vmem:[%s296 + $0x84] sm:$0xf]
        %v363 = vld [vmem:[%s296 + $0x88] sm:$0xf]
        %v364 = vld [vmem:[%s296 + $0x8c] sm:$0xf]
        %v365 = vld [vmem:[%s296 + $0x90] sm:$0xf]
        %v366 = vld [vmem:[%s296 + $0x94] sm:$0xf]
        %v367 = vld [vmem:[%s296 + $0x98] sm:$0xf]
        %v368 = vld [vmem:[%s296 + $0x9c] sm:$0xf]
        %v369 = vld [vmem:[%s296 + $0xa0] sm:$0xf]
        %v370 = vld [vmem:[%s296 + $0xa4] sm:$0xf]
        %v371 = vld [vmem:[%s296 + $0xa8] sm:$0xf]
        %v372 = vld [vmem:[%s296 + $0xac] sm:$0xf]
        %v373 = vld [vmem:[%s296 + $0xb0] sm:$0xf]
        %v374 = vld [vmem:[%s296 + $0xb4] sm:$0xf]
        %v375 = vld [vmem:[%s296 + $0xb8] sm:$0xf]
        %v376 = vld [vmem:[%s296 + $0xbc] sm:$0xf]
        %v377 = vld [vmem:[%s296 + $0xc0] sm:$0xf]
        %v378 = vld [vmem:[%s296 + $0xc4] sm:$0xf]
        %v379 = vld [vmem:[%s296 + $0xc8] sm:$0xf]
        %v380 = vld [vmem:[%s296 + $0xcc] sm:$0xf]
        %v381 = vld [vmem:[%s296 + $0xd0] sm:$0xf]
        %v382 = vld [vmem:[%s296 + $0xd4] sm:$0xf]
        %v383 = vld [vmem:[%s296 + $0xd8] sm:$0xf]
        %v384 = vld [vmem:[%s296 + $0xdc] sm:$0xf]
        %v385 = vld [vmem:[%s296 + $0xe0] sm:$0xf]
        %v386 = vld [vmem:[%s296 + $0xe4] sm:$0xf]
        %v387 = vld [vmem:[%s296 + $0xe8] sm:$0xf]
        %v388 = vld [vmem:[%s296 + $0xec] sm:$0xf]
        %v389 = vld [vmem:[%s296 + $0xf0] sm:$0xf]
        %v390 = vld [vmem:[%s296 + $0xf4] sm:$0xf]
        %v391 = vld [vmem:[%s296 + $0xf8] sm:$0xf]
        %v392 = vld [vmem:[%s296 + $0xfc] sm:$0xf]
        %v397 = vunpack.c.l.b16 %v325
        %v398 = vunpack.c.h.b16 %v325
        %v399 = vunpack.c.l.b16 %v326
        %v400 = vunpack.c.h.b16 %v326
        %v401 = vunpack.c.l.b16 %v327
        %v402 = vunpack.c.h.b16 %v327
        %v403 = vunpack.c.l.b16 %v328
        %v404 = vunpack.c.h.b16 %v328
        %v405 = vpack.c.b16 %v401, %v397
        %v406 = vpack.c.b16 %v402, %v398
        %v407 = vpack.c.b16 %v403, %v399
        %v408 = vpack.c.b16 %v404, %v400
        %v477 = vunpack.c.l.b16 %v329
        %v478 = vunpack.c.l.b16 %v330
        %v479 = vunpack.c.l.b16 %v331
        %v480 = vunpack.c.l.b16 %v332
        %v481 = vunpack.c.l.b16 %v333
        %v482 = vunpack.c.l.b16 %v334
        %v483 = vunpack.c.l.b16 %v335
        %v484 = vunpack.c.l.b16 %v336
        %v485 = vunpack.c.l.b16 %v337
        %v486 = vunpack.c.l.b16 %v338
        %v487 = vunpack.c.l.b16 %v339
        %v488 = vunpack.c.l.b16 %v340
        %v489 = vunpack.c.l.b16 %v341
        %v490 = vunpack.c.l.b16 %v342
        %v491 = vunpack.c.l.b16 %v343
        %v492 = vunpack.c.l.b16 %v344
        %v493 = vunpack.c.l.b16 %v345
        %v494 = vunpack.c.l.b16 %v346
        %v495 = vunpack.c.l.b16 %v347
        %v496 = vunpack.c.l.b16 %v348
        %v497 = vunpack.c.l.b16 %v349
        %v498 = vunpack.c.l.b16 %v350
        %v499 = vunpack.c.l.b16 %v351
        %v500 = vunpack.c.l.b16 %v352
        %v501 = vunpack.c.l.b16 %v353
        %v502 = vunpack.c.l.b16 %v354
        %v503 = vunpack.c.l.b16 %v355
        %v504 = vunpack.c.l.b16 %v356
        %v505 = vunpack.c.l.b16 %v357
        %v506 = vunpack.c.l.b16 %v358
        %v507 = vunpack.c.l.b16 %v359
        %v508 = vunpack.c.l.b16 %v360
        %v509 = vunpack.c.l.b16 %v361
        %v510 = vunpack.c.l.b16 %v362
        %v511 = vunpack.c.l.b16 %v363
        %v512 = vunpack.c.l.b16 %v364
        %v513 = vunpack.c.l.b16 %v365
        %v514 = vunpack.c.l.b16 %v366
        %v515 = vunpack.c.l.b16 %v367
        %v516 = vunpack.c.l.b16 %v368
        %v517 = vunpack.c.l.b16 %v369
        %v518 = vunpack.c.l.b16 %v370
        %v519 = vunpack.c.l.b16 %v371
        %v520 = vunpack.c.l.b16 %v372
        %v521 = vunpack.c.l.b16 %v373
        %v522 = vunpack.c.l.b16 %v374
        %v523 = vunpack.c.l.b16 %v375
        %v524 = vunpack.c.l.b16 %v376
        %v525 = vunpack.c.l.b16 %v377
        %v526 = vunpack.c.l.b16 %v378
        %v527 = vunpack.c.l.b16 %v379
        %v528 = vunpack.c.l.b16 %v380
        %v529 = vunpack.c.l.b16 %v381
        %v530 = vunpack.c.l.b16 %v382
        %v531 = vunpack.c.l.b16 %v383
        %v532 = vunpack.c.l.b16 %v384
        %v533 = vunpack.c.l.b16 %v385
        %v534 = vunpack.c.l.b16 %v386
        %v535 = vunpack.c.l.b16 %v387
        %v536 = vunpack.c.l.b16 %v388
        %v537 = vunpack.c.l.b16 %v389
        %v538 = vunpack.c.l.b16 %v390
        %v539 = vunpack.c.l.b16 %v391
        %v540 = vunpack.c.l.b16 %v392
        %v541 = vpack.c.b16 %v478, %v477
        %v542 = vpack.c.b16 %v480, %v479
        %v543 = vpack.c.b16 %v482, %v481
        %v544 = vpack.c.b16 %v484, %v483
        %v545 = vpack.c.b16 %v486, %v485
        %v546 = vpack.c.b16 %v488, %v487
        %v547 = vpack.c.b16 %v490, %v489
        %v548 = vpack.c.b16 %v492, %v491
        %v549 = vpack.c.b16 %v494, %v493
        %v550 = vpack.c.b16 %v496, %v495
        %v551 = vpack.c.b16 %v498, %v497
        %v552 = vpack.c.b16 %v500, %v499
        %v553 = vpack.c.b16 %v502, %v501
        %v554 = vpack.c.b16 %v504, %v503
        %v555 = vpack.c.b16 %v506, %v505
        %v556 = vpack.c.b16 %v508, %v507
        %v557 = vpack.c.b16 %v510, %v509
        %v558 = vpack.c.b16 %v512, %v511
        %v559 = vpack.c.b16 %v514, %v513
        %v560 = vpack.c.b16 %v516, %v515
        %v561 = vpack.c.b16 %v518, %v517
        %v562 = vpack.c.b16 %v520, %v519
        %v563 = vpack.c.b16 %v522, %v521
        %v564 = vpack.c.b16 %v524, %v523
        %v565 = vpack.c.b16 %v526, %v525
        %v566 = vpack.c.b16 %v528, %v527
        %v567 = vpack.c.b16 %v530, %v529
        %v568 = vpack.c.b16 %v532, %v531
        %v569 = vpack.c.b16 %v534, %v533
        %v570 = vpack.c.b16 %v536, %v535
        %v571 = vpack.c.b16 %v538, %v537
        %v572 = vpack.c.b16 %v540, %v539
        %605 = vmatprep.subr.bf16.mxu0 0
        %606 = vmatpush1.bf16.msra.mxu0 %v541
        %607 = vmatprep.subr.bf16.mxu0 0
        %608 = vmatpush1.bf16.msra.mxu0 %v542
        %609 = vmatprep.subr.bf16.mxu0 0
        %610 = vmatpush1.bf16.msra.mxu0 %v543
        %611 = vmatprep.subr.bf16.mxu0 0
        %612 = vmatpush1.bf16.msra.mxu0 %v544
        %613 = vmatprep.subr.bf16.mxu0 0
        %614 = vmatpush1.bf16.msra.mxu0 %v545
        %615 = vmatprep.subr.bf16.mxu0 0
        %616 = vmatpush1.bf16.msra.mxu0 %v546
        %617 = vmatprep.subr.bf16.mxu0 0
        %618 = vmatpush1.bf16.msra.mxu0 %v547
        %619 = vmatprep.subr.bf16.mxu0 0
        %620 = vmatpush1.bf16.msra.mxu0 %v548
        %621 = vmatprep.subr.bf16.mxu0 0
        %622 = vmatpush1.bf16.msra.mxu0 %v549
        %623 = vmatprep.subr.bf16.mxu0 0
        %624 = vmatpush1.bf16.msra.mxu0 %v550
        %625 = vmatprep.subr.bf16.mxu0 0
        %626 = vmatpush1.bf16.msra.mxu0 %v551
        %627 = vmatprep.subr.bf16.mxu0 0
        %628 = vmatpush1.bf16.msra.mxu0 %v552
        %629 = vmatprep.subr.bf16.mxu0 0
        %630 = vmatpush1.bf16.msra.mxu0 %v553
        %631 = vmatprep.subr.bf16.mxu0 0
        %632 = vmatpush1.bf16.msra.mxu0 %v554
        %633 = vmatprep.subr.bf16.mxu0 0
        %634 = vmatpush1.bf16.msra.mxu0 %v555
        %635 = vmatprep.subr.bf16.mxu0 0
        %636 = vmatpush1.bf16.msra.mxu0 %v556
        %637 = vmatprep.mubr.bf16.mxu0 %v406
        %638 = vmatmul.mubr.bf16.gmra.mrb[0].mxu0 %v405
        %v639 = vpop.f32.mrb[0].mxu0
        %v640 = vadd.f32 0.0, %v639
        %v641 = vpop.f32.mrb[0].mxu0
        %v642 = vpop.f32.mrb[0].mxu0
        %v643 = vadd.f32 0.0, %v642
        %v644 = vpop.f32.mrb[0].mxu0
        %645 = vdwg.mxu0
        %646 = vmatprep.subr.bf16.mxu0 0
        %647 = vmatpush1.bf16.msra.mxu0 %v557
        %648 = vmatprep.subr.bf16.mxu0 0
        %649 = vmatpush1.bf16.msra.mxu0 %v558
        %650 = vmatprep.subr.bf16.mxu0 0
        %651 = vmatpush1.bf16.msra.mxu0 %v559
        %652 = vmatprep.subr.bf16.mxu0 0
        %653 = vmatpush1.bf16.msra.mxu0 %v560
        %654 = vmatprep.subr.bf16.mxu0 0
        %655 = vmatpush1.bf16.msra.mxu0 %v561
        %656 = vmatprep.subr.bf16.mxu0 0
        %657 = vmatpush1.bf16.msra.mxu0 %v562
        %658 = vmatprep.subr.bf16.mxu0 0
        %659 = vmatpush1.bf16.msra.mxu0 %v563
        %660 = vmatprep.subr.bf16.mxu0 0
        %661 = vmatpush1.bf16.msra.mxu0 %v564
        %662 = vmatprep.subr.bf16.mxu0 0
        %663 = vmatpush1.bf16.msra.mxu0 %v565
        %664 = vmatprep.subr.bf16.mxu0 0
        %665 = vmatpush1.bf16.msra.mxu0 %v566
        %666 = vmatprep.subr.bf16.mxu0 0
        %667 = vmatpush1.bf16.msra.mxu0 %v567
        %668 = vmatprep.subr.bf16.mxu0 0
        %669 = vmatpush1.bf16.msra.mxu0 %v568
        %670 = vmatprep.subr.bf16.mxu0 0
        %671 = vmatpush1.bf16.msra.mxu0 %v569
        %672 = vmatprep.subr.bf16.mxu0 0
        %673 = vmatpush1.bf16.msra.mxu0 %v570
        %674 = vmatprep.subr.bf16.mxu0 0
        %675 = vmatpush1.bf16.msra.mxu0 %v571
        %676 = vmatprep.subr.bf16.mxu0 0
        %677 = vmatpush1.bf16.msra.mxu0 %v572
        %678 = vmatprep.mubr.bf16.mxu0 %v408
        %679 = vmatmul.mubr.bf16.gmra.mrb[0].mxu0 %v407
        %v680 = vpop.f32.mrb[0].mxu0
        %v681 = vadd.f32 %v640, %v680
        %v682 = vpop.f32.mrb[0].mxu0
        %v683 = vpop.f32.mrb[0].mxu0
        %v684 = vadd.f32 %v643, %v683
        %v685 = vpop.f32.mrb[0].mxu0
        %686 = vdwg.mxu0
        %v687 = vadd.f32 %v323, %v681
        %v688 = vadd.f32 %v324, %v684
        %689 = vst [vmem:[#allocation2] sm:$0xff] %v687
        %690 = vst [vmem:[#allocation2 + $0x8] sm:$0xff] %v688
        %p691 = scmp.eq.s32.totalorder %s24, 1
        // Predicated region
        $region64: #{_lambda_.15} parent=50 // pred_check
          %p692 = pneg %p691
        $region65: #{_lambda_.15} parent=50 // pred_check_branch
          %694 = sbr.rel (%p692) target = $region67
        $region66: #{_lambda_.15} parent=50 // pred_region
          %v695 = vld [vmem:[#allocation2] sm:$0xff]
          %v696 = vld [vmem:[#allocation2 + $0x8] sm:$0xff]
          %v697 = vld [vmem:[%s300] sm:$0x1]
          %v699 = vlaneseq
          %v700 = vshrl.u32 %v699, 7
          %v701 = vsub.s32 0, %v700
          %v702 = vrot.slane %v697, %v701
          %v704 = vadd.f32 %v695, %v702
          %v705 = vadd.f32 %v696, %v702
          %v706 = vpack.c.bf16 %v705, %v704
          %v708 = vunpack.c.l.b16 %v706
          %v709 = vunpack.c.h.b16 %v706
          %v710 = vpack.c.b16 %v708, %v708
          %v711 = vpack.c.b16 %v709, %v709
          %714 = vst [vmem:[%s308] sm:$0xf] %v710
          %715 = vst [vmem:[%s308 + $0x4] sm:$0xf] %v711
          %v716 = vadd.f32 %v704, %v705
          %v717 = vrot.slane %v716, 4
          %v718 = vadd.f32 %v716, %v717
          %v719 = vrot.slane %v718, 2
          %v720 = vadd.f32 %v718, %v719
          %v721 = vrot.slane %v720, 1
          %v722 = vadd.f32 %v720, %v721
          %v723 = vmul.f32 %v704, %v704
          %v724 = vmul.f32 %v705, %v705
          %v725 = vadd.f32 %v723, %v724
          %v726 = vrot.slane %v725, 4
          %v727 = vadd.f32 %v725, %v726
          %v728 = vrot.slane %v727, 2
          %v729 = vadd.f32 %v727, %v728
          %v730 = vrot.slane %v729, 1
          %v731 = vadd.f32 %v729, %v730
          %v732 = vld [vmem:[#allocation4] sm:$0x3]
          %vm733 = vcmask 1040384
          %v734 = vsel %vm733, %v722, %v731
          %v735 = vadd.f32 %v732, %v734
          %736 = vst [vmem:[#allocation4] sm:$0x3] %v735
        $region67: #{_lambda_.15} parent=50 // pred_fallthru
          _
        %s737 = smul.u32 2, %s23
        %p738 = scmp.lt.s32.totalorder %s737, 1
        %s739 = scalar_select %p738, %s737, 1
        %p740 = scmp.lt.s32.totalorder %s22, 0
        %s741 = scalar_select %p740, %s22, 0
        %s742 = sadd.s32 %s741, %s739
        %s743 = smul.addr %s742, 4
        %s744 = scalar_lea.vmem %s3, %s743
        // Predicated region
        $region68: #{_lambda_.15} parent=50 // pred_check
          %p745 = pneg %p138
        $region69: #{_lambda_.15} parent=50 // pred_check_branch
          %747 = sbr.rel (%p745) target = $region71
        $region70: #{_lambda_.15} parent=50 // pred_region
          %s748 = smul.u32 2, %s23
        $region71: #{_lambda_.15} parent=50 // pred_fallthru
          _
        // Predicated region
        $region72: #{_lambda_.15} parent=50 // pred_check
          %p749 = pneg %p164
        $region73: #{_lambda_.15} parent=50 // pred_check_branch
          %751 = sbr.rel (%p749) target = $region75
        $region74: #{_lambda_.15} parent=50 // pred_region
          %s753 = ssub.s32 128, 128
          %754 = vsyncadd [#allocation5], %s753
          %s755 = smul.addr %s22, 128
          %s756 = scalar_lea.hbm %s4, %s755
          %s758 = sshll.u32 [#allocation4], 4
          %s759 = int_to_ptr.vmem [resolvable:$true] %s758
          %761 = dma.vmem_to_hbm [thread:$0]  %s759, 128, %s756, [#allocation5]
        $region75: #{_lambda_.15} parent=50 // pred_fallthru
          _
        // Predicated region
        $region76: #{_lambda_.15} parent=50 // pred_check
          %p762 = pneg %p138
        $region77: #{_lambda_.15} parent=50 // pred_check_branch
          %764 = sbr.rel (%p762) target = $region79
        $region78: #{_lambda_.15} parent=50 // pred_region
          %s765 = smul.u32 2, %s23
          %p766 = scmp.lt.s32.totalorder %s765, 1
          %s767 = scalar_select %p766, %s765, 1
          %p768 = scmp.lt.s32.totalorder %s22, 0
          %s769 = scalar_select %p768, %s22, 0
          %s770 = sadd.s32 %s769, %s767
          %s771 = smul.addr %s770, 4
          %s772 = scalar_lea.vmem %s3, %s771
        $region79: #{_lambda_.15} parent=50 // pred_fallthru
          _
        // Predicated region
        $region80: #{_lambda_.15} parent=50 // pred_check
          %p773 = pneg %p164
        $region81: #{_lambda_.15} parent=50 // pred_check_branch
          %775 = sbr.rel (%p773) target = $region83
        $region82: #{_lambda_.15} parent=50 // pred_region
          %776 = dma.done [#allocation5], 128
        $region83: #{_lambda_.15} parent=50 // pred_fallthru
          _
      $region51: #{_lambda_.15} parent=5 // pred_fallthru
        _
      %p777 = scmp.le.s32.totalorder 2, %s12
      // Predicated region
      $region84: #{_lambda_.15} parent=5 // pred_check
        %p778 = pneg %p777
      $region85: #{_lambda_.15} parent=5 // pred_check_branch
        %780 = sbr.rel (%p778) target = $region87
      $region86: #{_lambda_.15} parent=5 // pred_region
        %s781 = ssub.s32 %s12, 2
      $region87: #{_lambda_.15} parent=5 // pred_fallthru
        _
    $region6: #{_lambda_.15} parent=1 // loop_footer
      %s16 = sadd.s32 1, %s12
    $region7: #{_lambda_.15} parent=1 // loop_footer_branch
      %11 = sbr.rel target = $region3
    $region8: #{_lambda_.15} parent=1 // loop_exit
      _
    %782 = vsyncpa [#allocation5], 1
    %s783 = scalar_lea.sflag [#allocation5], 1
    %784 = vsyncpa %s783, 1

</llo_original>
